<compile_context>
chip_gen: v6e
topology: v6e:2x2x1
jax: 0.10.0
libtpu: 0.0.40
codegen_flags: <defaults>
</compile_context>

<pallas_src>
import math

import jax
import jax.numpy as jnp
from jax import lax
from jax.experimental import pallas as pl
from jax.experimental.pallas import tpu as pltpu

MAX_LENGTH = 15
PADDING_IDX = 2                     # Padding_index in the reference module
NEG_INF = jnp.float32(-1e30)        # finite stand-in for masked_fill(-inf)


# -----------------------------------------------------------------------------
# Pallas kernel: TS decoder steps per grid block.
# Per step (gate order i,f,g,o as in torch.nn.LSTMCell):
#   gates   = gates_x[t] + feed @ W_feed^T + h @ W_hh^T        (bias pre-folded)
#   h,c     = LSTMCell update
#   a       = h @ W_proj^T + b_proj
#   score   = softmax_src( sum_h(enc * a) + mask_bias )
#   ctx     = sum_src( score * enc )
#   out     = tanh(ctx @ W_oc^T + h @ W_oh^T + b_out)   -> next input_feed
# h / c / input_feed persist across grid blocks in VMEM scratch.
# -----------------------------------------------------------------------------
def _attn_decoder_kernel(gx_ref, enc_ref, mbias_ref, h0_ref, c0_ref,
                         w_feed_ref, w_hh_ref, w_proj_ref, b_proj_ref,
                         w_oc_ref, w_oh_ref, b_out_ref,
                         outs_ref, attn_ref,
                         h_scr, c_scr, feed_scr):
    TS = gx_ref.shape[0]
    B, H = h_scr.shape

    @pl.when(pl.program_id(0) == 0)
    def _():
        h_scr[...] = h0_ref[...]
        c_scr[...] = c0_ref[...]
        feed_scr[...] = jnp.zeros_like(feed_scr)

    # Loop-invariant loads / broadcasts hoisted out of the recurrence.
    enc = enc_ref[...]                                    # (B, SRC, H) f32
    mbias = mbias_ref[...]                                # (B, SRC) additive mask
    w_feed = w_feed_ref[...]                              # (H, 4H)
    w_hh = w_hh_ref[...]                                  # (H, 4H)
    w_proj = w_proj_ref[...]                              # (H, H)
    w_oc = w_oc_ref[...]                                  # (H, H)
    w_oh = w_oh_ref[...]                                  # (H, H)
    b_proj = jnp.broadcast_to(b_proj_ref[...], (B, H))
    b_out = jnp.broadcast_to(b_out_ref[...], (B, H))

    def step(t, carry):
        h, c, feed = carry                                # (B, H) f32 carries
        gates = (gx_ref[t]
                 + jnp.dot(feed.astype(w_feed.dtype), w_feed,
                           preferred_element_type=jnp.float32)
                 + jnp.dot(h.astype(w_hh.dtype), w_hh,
                           preferred_element_type=jnp.float32))      # (B, 4H)
        i_g = jax.nn.sigmoid(gates[:, 0:H])
        f_g = jax.nn.sigmoid(gates[:, H:2 * H])
        g_g = jnp.tanh(gates[:, 2 * H:3 * H])
        o_g = jax.nn.sigmoid(gates[:, 3 * H:4 * H])
        c_new = f_g * c + i_g * g_g
        h_new = o_g * jnp.tanh(c_new)

        # attention over the source (softmax along SRC, lane axis)
        a = jnp.dot(h_new.astype(w_proj.dtype), w_proj,
                    preferred_element_type=jnp.float32) + b_proj     # (B, H)
        s = jnp.sum(enc * a[:, None, :], axis=2) + mbias             # (B, SRC)
        m = jnp.max(s, axis=1, keepdims=True)
        e = jnp.exp(s - m)
        p = e / jnp.sum(e, axis=1, keepdims=True)                    # (B, SRC)
        ctx = jnp.sum(p[:, :, None] * enc, axis=1)                   # (B, H)

        attn_out = jnp.tanh(
            jnp.dot(ctx.astype(w_oc.dtype), w_oc,
                    preferred_element_type=jnp.float32)
            + jnp.dot(h_new.astype(w_oh.dtype), w_oh,
                      preferred_element_type=jnp.float32)
            + b_out)                                                 # (B, H)

        outs_ref[t] = attn_out
        attn_ref[t] = p
        return (h_new, c_new, attn_out)                              # feed <- attn_out

    h, c, feed = lax.fori_loop(0, TS, step,
                               (h_scr[...], c_scr[...], feed_scr[...]),
                               unroll=True)
    h_scr[...] = h
    c_scr[...] = c
    feed_scr[...] = feed


def _pick_seq_tile(length, target=8):
    ts = min(length, target)
    while length % ts:
        ts -= 1
    return ts


# -----------------------------------------------------------------------------
# AttnDecoderRNN.forward equivalent.
# Returns (log_softmax, attn_out, attn_scores) with the PyTorch shapes:
#   log_softmax : (B, L, H)   (legacy nn.LogSoftmax() -> dim=0 on 3-D input)
#   attn_out    : (B, H)      final step's attention output
#   attn_scores : (B, L, SRC) == attn_scores.transpose(0, 2)
# -----------------------------------------------------------------------------
def attn_decoder_forward(params, tokens, encoder_outputs, train=True,
                         seq_tile=None, matmul_dtype=jnp.float32):
    enc_outs, enc_hiddens, enc_cells, enc_mask = encoder_outputs
    srclen, B, H = enc_outs.shape
    S, B2 = tokens.shape
    assert B2 == B
    L = S if train else MAX_LENGTH
    assert S >= L, "non-train path needs seqlen >= MAX_LENGTH (as in the reference)"

    # ---- glue (XLA): embedding gather + hoisted input projection -------------
    emb = jnp.take(params["embedding"], tokens[:L], axis=0).astype(jnp.float32)
    # TODO(synk): nn.Dropout on embeddings / attn_out / x is treated as identity
    # (deterministic eval-mode forward; no RNG inside the kernel).

    w_ih = params["w_ih"]                                   # (4H, 2H): [:, :H]=emb, [:, H:]=feed
    bias = (params["b_ih"] + params["b_hh"]).astype(jnp.float32)
    # One MXU-saturating matmul for the whole sequence, bias folded in.
    gates_x = (jnp.dot(emb.reshape(L * B, H).astype(matmul_dtype),
                       w_ih[:, :H].T.astype(matmul_dtype),
                       preferred_element_type=jnp.float32)
               + bias).reshape(L, B, 4 * H)

    w_feed_t = w_ih[:, H:].T.astype(matmul_dtype)           # (H, 4H)
    w_hh_t = params["w_hh"].T.astype(matmul_dtype)          # (H, 4H)
    w_proj_t = params["w_proj"].T.astype(matmul_dtype)      # (H, H)
    b_proj = params["b_proj"].reshape(1, H).astype(jnp.float32)
    w_out = params["w_out"]                                 # (H, 2H): [:, :H]=ctx, [:, H:]=hidden
    w_oc_t = w_out[:, :H].T.astype(matmul_dtype)            # (H, H)
    w_oh_t = w_out[:, H:].T.astype(matmul_dtype)            # (H, H)
    b_out = params["b_out"].reshape(1, H).astype(jnp.float32)

    enc_bsh = jnp.transpose(enc_outs, (1, 0, 2)).astype(jnp.float32)   # (B, SRC, H)
    mask_bias = jnp.where(jnp.transpose(enc_mask, (1, 0)), NEG_INF,
                          jnp.float32(0.0))                            # (B, SRC)
    h0 = enc_hiddens[0].astype(jnp.float32)                            # (B, H)
    c0 = enc_cells[0].astype(jnp.float32)                              # (B, H)

    TS = seq_tile if seq_tile is not None else _pick_seq_tile(L)
    assert L % TS == 0
    grid = (L // TS,)

    def full(shape):
        return pl.BlockSpec(shape, lambda s: (0,) * len(shape))

    outs, attn = pl.pallas_call(
        _attn_decoder_kernel,
        out_shape=(jax.ShapeDtypeStruct((L, B, H), jnp.float32),
                   jax.ShapeDtypeStruct((L, B, srclen), jnp.float32)),
        grid_spec=pltpu.PrefetchScalarGridSpec(
            num_scalar_prefetch=0,
            grid=grid,
            in_specs=[
                pl.BlockSpec((TS, B, 4 * H), lambda s: (s, 0, 0)),  # gates_x stream
                full((B, srclen, H)),                               # encoder outs (resident)
                full((B, srclen)),                                  # additive -inf mask
                full((B, H)), full((B, H)),                         # h0, c0
                full((H, 4 * H)), full((H, 4 * H)),                 # w_feed_t, w_hh_t
                full((H, H)), full((1, H)),                         # w_proj_t, b_proj
                full((H, H)), full((H, H)), full((1, H)),           # w_oc_t, w_oh_t, b_out
            ],
            out_specs=(pl.BlockSpec((TS, B, H), lambda s: (s, 0, 0)),
                       pl.BlockSpec((TS, B, srclen), lambda s: (s, 0, 0))),
            scratch_shapes=[pltpu.VMEM((B, H), jnp.float32),   # h  (across grid blocks)
                            pltpu.VMEM((B, H), jnp.float32),   # c
                            pltpu.VMEM((B, H), jnp.float32)],  # input_feed
        ),
        compiler_params=pltpu.CompilerParams(
            dimension_semantics=("arbitrary",),    # sequential recurrence over seq tiles
            vmem_limit_bytes=32 * 1024 * 1024),
    )(gates_x, enc_bsh, mask_bias, h0, c0,
      w_feed_t, w_hh_t, w_proj_t, b_proj, w_oc_t, w_oh_t, b_out)

    x = jnp.transpose(outs, (1, 0, 2))                 # (B, L, H)
    # nn.LogSoftmax() with no dim on a 3-D input -> legacy default dim=0.
    log_sm = jax.nn.log_softmax(x, axis=0)
    attn_scores = jnp.transpose(attn, (1, 0, 2))       # (B, L, SRC)
    attn_out_last = outs[L - 1]                        # (B, H) == last step's attn_out
    return log_sm, attn_out_last, attn_scores


# -----------------------------------------------------------------------------
# Deterministic parameter init (shapes from nn.Embedding / nn.LSTMCell / Linear).
# -----------------------------------------------------------------------------
def init_params(key, hidden_size, output_size):
    H = hidden_size
    ks = jax.random.split(key, 9)
    emb = jax.random.normal(ks[0], (output_size, H), jnp.float32)
    emb = emb.at[PADDING_IDX].set(0.0)                     # padding_idx row is zero

    def u(k, shape, fan_in):
        bound = 1.0 / math.sqrt(fan_in)
        return jax.random.uniform(k, shape, jnp.float32, -bound, bound)

    return {
        "embedding": emb,
        # nn.LSTMCell(2H, H)
        "w_ih": u(ks[1], (4 * H, 2 * H), H),
        "w_hh": u(ks[2], (4 * H, H), H),
        "b_ih": u(ks[3], (4 * H,), H),
        "b_hh": u(ks[4], (4 * H,), H),
        # input_proj: Linear(H, H)
        "w_proj": u(ks[5], (H, H), H),
        "b_proj": u(ks[6], (H,), H),
        # output_proj: Linear(2H, H)
        "w_out": u(ks[7], (H, 2 * H), 2 * H),
        "b_out": u(ks[8], (H,), 2 * H),
        # NOTE: self.out (Linear(H, output_size)) is never used in forward().
    }


if __name__ == "__main__":
    key = jax.random.PRNGKey(0)
    hidden_size = 32
    output_size = 16            # target vocab
    S, B = 8, 4                 # target seq len, batch (train() uses batchsize=4)
    srclen = 10                 # encoder source length (< MAX_LENGTH)

    kp, ke, kh, kc, kt = jax.random.split(key, 5)
    params = init_params(kp, hidden_size, output_size)

    # Synthetic encoder outputs, same tuple layout the encoder produces.
    enc_outs = jax.random.normal(ke, (srclen, B, hidden_size), jnp.float32)
    enc_hiddens = 0.1 * jax.random.normal(kh, (1, B, hidden_size), jnp.float32)
    enc_cells = 0.1 * jax.random.normal(kc, (1, B, hidden_size), jnp.float32)
    src_lengths = jnp.array([10, 8, 6, 3], dtype=jnp.int32)
    enc_mask = jnp.arange(srclen)[:, None] >= src_lengths[None, :]     # (SRC, B) bool
    enc_outs = jnp.where(enc_mask[:, :, None], jnp.float32(PADDING_IDX), enc_outs)

    # Target tokens in [3, vocab), trailing positions padded with PADDING_IDX.
    tokens = jax.random.randint(kt, (S, B), 3, output_size, dtype=jnp.int32)
    tgt_lengths = jnp.array([8, 7, 5, 4], dtype=jnp.int32)
    tokens = jnp.where(jnp.arange(S)[:, None] < tgt_lengths[None, :],
                       tokens, PADDING_IDX)

    encoder_outputs = (enc_outs, enc_hiddens, enc_cells, enc_mask)
    log_sm, attn_out, attn_scores = attn_decoder_forward(
        params, tokens, encoder_outputs, train=True, seq_tile=4)
    jax.block_until_ready((log_sm, attn_out, attn_scores))

    assert log_sm.shape == (B, S, hidden_size)
    assert attn_out.shape == (B, hidden_size)
    assert attn_scores.shape == (B, S, srclen)
    assert bool(jnp.all(jnp.isfinite(log_sm)))
    assert bool(jnp.all(jnp.isfinite(attn_out)))
    # attention rows are valid distributions over the (unmasked) source
    assert bool(jnp.allclose(jnp.sum(attn_scores, axis=-1), 1.0, atol=1e-4))
    print("KERNEL_OK")
</pallas_src>

<mosaic_0001>
module attributes {stable_mosaic.version = 11 : i64} {
  func.func @_attn_decoder_kernel(%arg0: i32, %arg1: memref<4x4x128xf32, #tpu.memory_space<vmem>>, %arg2: memref<4x10x32xf32, #tpu.memory_space<vmem>>, %arg3: memref<4x10xf32, #tpu.memory_space<vmem>>, %arg4: memref<4x32xf32, #tpu.memory_space<vmem>>, %arg5: memref<4x32xf32, #tpu.memory_space<vmem>>, %arg6: memref<32x128xf32, #tpu.memory_space<vmem>>, %arg7: memref<32x128xf32, #tpu.memory_space<vmem>>, %arg8: memref<32x32xf32, #tpu.memory_space<vmem>>, %arg9: memref<1x32xf32, #tpu.memory_space<vmem>>, %arg10: memref<32x32xf32, #tpu.memory_space<vmem>>, %arg11: memref<32x32xf32, #tpu.memory_space<vmem>>, %arg12: memref<1x32xf32, #tpu.memory_space<vmem>>, %arg13: memref<4x4x32xf32, #tpu.memory_space<vmem>>, %arg14: memref<4x4x10xf32, #tpu.memory_space<vmem>>, %arg15: memref<4x32xf32, #tpu.memory_space<vmem>>, %arg16: memref<4x32xf32, #tpu.memory_space<vmem>>, %arg17: memref<4x32xf32, #tpu.memory_space<vmem>>) attributes {dimension_semantics = [#tpu.dimension_semantics<arbitrary>], iteration_bounds = array<i64: 2>, scalar_prefetch = 0 : i64, scratch_operands = 3 : i64, tpu.core_type = #tpu.core_type<tc>, window_params = [{transform_indices = @transform_0, window_bounds = array<i64: 4, 4, 128>}, {pipeline_mode = #tpu.pipeline_mode<synchronous>, transform_indices = @transform_1, window_bounds = array<i64: 4, 10, 32>}, {pipeline_mode = #tpu.pipeline_mode<synchronous>, transform_indices = @transform_2, window_bounds = array<i64: 4, 10>}, {pipeline_mode = #tpu.pipeline_mode<synchronous>, transform_indices = @transform_3, window_bounds = array<i64: 4, 32>}, {pipeline_mode = #tpu.pipeline_mode<synchronous>, transform_indices = @transform_4, window_bounds = array<i64: 4, 32>}, {pipeline_mode = #tpu.pipeline_mode<synchronous>, transform_indices = @transform_5, window_bounds = array<i64: 32, 128>}, {pipeline_mode = #tpu.pipeline_mode<synchronous>, transform_indices = @transform_6, window_bounds = array<i64: 32, 128>}, {pipeline_mode = #tpu.pipeline_mode<synchronous>, transform_indices = @transform_7, window_bounds = array<i64: 32, 32>}, {pipeline_mode = #tpu.pipeline_mode<synchronous>, transform_indices = @transform_8, window_bounds = array<i64: 1, 32>}, {pipeline_mode = #tpu.pipeline_mode<synchronous>, transform_indices = @transform_9, window_bounds = array<i64: 32, 32>}, {pipeline_mode = #tpu.pipeline_mode<synchronous>, transform_indices = @transform_10, window_bounds = array<i64: 32, 32>}, {pipeline_mode = #tpu.pipeline_mode<synchronous>, transform_indices = @transform_11, window_bounds = array<i64: 1, 32>}, {transform_indices = @transform_12, window_bounds = array<i64: 4, 4, 32>}, {transform_indices = @transform_13, window_bounds = array<i64: 4, 4, 10>}]} {
    %c0_i32 = arith.constant 0 : i32
    %0 = arith.cmpi eq, %arg0, %c0_i32 : i32
    %1 = arith.extui %0 : i1 to i32
    %c0_i32_0 = arith.constant 0 : i32
    %2 = arith.cmpi ne, %1, %c0_i32_0 : i32
    scf.if %2 {
      %c0_103 = arith.constant 0 : index
      %c0_104 = arith.constant 0 : index
      %282 = vector.load %arg4[%c0_103, %c0_104] : memref<4x32xf32, #tpu.memory_space<vmem>>, vector<4x32xf32>
      %c0_105 = arith.constant 0 : index
      %c0_106 = arith.constant 0 : index
      %283 = vector.load %arg15[%c0_105, %c0_106] : memref<4x32xf32, #tpu.memory_space<vmem>>, vector<4x32xf32>
      tpu.vector_store %arg15[%c0_105, %c0_106], %282 {strides = array<i32>} : memref<4x32xf32, #tpu.memory_space<vmem>>, vector<4x32xf32>,
      %c0_107 = arith.constant 0 : index
      %c0_108 = arith.constant 0 : index
      %284 = vector.load %arg5[%c0_107, %c0_108] : memref<4x32xf32, #tpu.memory_space<vmem>>, vector<4x32xf32>
      %c0_109 = arith.constant 0 : index
      %c0_110 = arith.constant 0 : index
      %285 = vector.load %arg16[%c0_109, %c0_110] : memref<4x32xf32, #tpu.memory_space<vmem>>, vector<4x32xf32>
      tpu.vector_store %arg16[%c0_109, %c0_110], %284 {strides = array<i32>} : memref<4x32xf32, #tpu.memory_space<vmem>>, vector<4x32xf32>,
      %cst_111 = arith.constant 0.000000e+00 : f32
      %286 = vector.broadcast %cst_111 : f32 to vector<4x32xf32>
      %c0_112 = arith.constant 0 : index
      %c0_113 = arith.constant 0 : index
      %287 = vector.load %arg17[%c0_112, %c0_113] : memref<4x32xf32, #tpu.memory_space<vmem>>, vector<4x32xf32>
      tpu.vector_store %arg17[%c0_112, %c0_113], %286 {strides = array<i32>} : memref<4x32xf32, #tpu.memory_space<vmem>>, vector<4x32xf32>,
    } else {
    }
    %c0 = arith.constant 0 : index
    %c0_1 = arith.constant 0 : index
    %c0_2 = arith.constant 0 : index
    %3 = vector.load %arg2[%c0, %c0_1, %c0_2] : memref<4x10x32xf32, #tpu.memory_space<vmem>>, vector<4x10x32xf32>
    %c0_3 = arith.constant 0 : index
    %c0_4 = arith.constant 0 : index
    %4 = vector.load %arg3[%c0_3, %c0_4] : memref<4x10xf32, #tpu.memory_space<vmem>>, vector<4x10xf32>
    %c0_5 = arith.constant 0 : index
    %c0_6 = arith.constant 0 : index
    %5 = vector.load %arg6[%c0_5, %c0_6] : memref<32x128xf32, #tpu.memory_space<vmem>>, vector<32x128xf32>
    %c0_7 = arith.constant 0 : index
    %c0_8 = arith.constant 0 : index
    %6 = vector.load %arg7[%c0_7, %c0_8] : memref<32x128xf32, #tpu.memory_space<vmem>>, vector<32x128xf32>
    %c0_9 = arith.constant 0 : index
    %c0_10 = arith.constant 0 : index
    %7 = vector.load %arg8[%c0_9, %c0_10] : memref<32x32xf32, #tpu.memory_space<vmem>>, vector<32x32xf32>
    %c0_11 = arith.constant 0 : index
    %c0_12 = arith.constant 0 : index
    %8 = vector.load %arg10[%c0_11, %c0_12] : memref<32x32xf32, #tpu.memory_space<vmem>>, vector<32x32xf32>
    %c0_13 = arith.constant 0 : index
    %c0_14 = arith.constant 0 : index
    %9 = vector.load %arg11[%c0_13, %c0_14] : memref<32x32xf32, #tpu.memory_space<vmem>>, vector<32x32xf32>
    %c0_15 = arith.constant 0 : index
    %c0_16 = arith.constant 0 : index
    %10 = vector.load %arg9[%c0_15, %c0_16] : memref<1x32xf32, #tpu.memory_space<vmem>>, vector<1x32xf32>
    %11 = vector.shape_cast %10 : vector<1x32xf32> to vector<1x32xf32>
    %12 = vector.broadcast %11 : vector<1x32xf32> to vector<4x32xf32>
    %c0_17 = arith.constant 0 : index
    %c0_18 = arith.constant 0 : index
    %13 = vector.load %arg12[%c0_17, %c0_18] : memref<1x32xf32, #tpu.memory_space<vmem>>, vector<1x32xf32>
    %14 = vector.shape_cast %13 : vector<1x32xf32> to vector<1x32xf32>
    %15 = vector.broadcast %14 : vector<1x32xf32> to vector<4x32xf32>
    %c0_19 = arith.constant 0 : index
    %c0_20 = arith.constant 0 : index
    %16 = vector.load %arg15[%c0_19, %c0_20] : memref<4x32xf32, #tpu.memory_space<vmem>>, vector<4x32xf32>
    %c0_21 = arith.constant 0 : index
    %c0_22 = arith.constant 0 : index
    %17 = vector.load %arg16[%c0_21, %c0_22] : memref<4x32xf32, #tpu.memory_space<vmem>>, vector<4x32xf32>
    %c0_23 = arith.constant 0 : index
    %c0_24 = arith.constant 0 : index
    %18 = vector.load %arg17[%c0_23, %c0_24] : memref<4x32xf32, #tpu.memory_space<vmem>>, vector<4x32xf32>
    %c0_i32_25 = arith.constant 0 : i32
    %19 = arith.index_cast %c0_i32_25 : i32 to index
    %c0_26 = arith.constant 0 : index
    %c0_27 = arith.constant 0 : index
    %20 = vector.load %arg1[%19, %c0_26, %c0_27] : memref<4x4x128xf32, #tpu.memory_space<vmem>>, vector<1x4x128xf32>
    %21 = vector.shape_cast %20 : vector<1x4x128xf32> to vector<4x128xf32>
    %cst = arith.constant dense<0.000000e+00> : vector<4x128xf32>
    %22 = tpu.matmul %18, %5, %cst {dimension_numbers = #tpu.dot_dimension_numbers<[1], [0], [0], [1], [0, 0, 1, 1], [], []>} : vector<4x32xf32>, vector<32x128xf32>, vector<4x128xf32> -> vector<4x128xf32>
    %23 = arith.addf %21, %22 : vector<4x128xf32>
    %cst_28 = arith.constant dense<0.000000e+00> : vector<4x128xf32>
    %24 = tpu.matmul %16, %6, %cst_28 {dimension_numbers = #tpu.dot_dimension_numbers<[1], [0], [0], [1], [0, 0, 1, 1], [], []>} : vector<4x32xf32>, vector<32x128xf32>, vector<4x128xf32> -> vector<4x128xf32>
    %25 = arith.addf %23, %24 : vector<4x128xf32>
    %26 = vector.extract_strided_slice %25 {offsets = [0, 0], sizes = [4, 32], strides = [1, 1]} : vector<4x128xf32> to vector<4x32xf32>
    %27 = arith.negf %26 : vector<4x32xf32>
    %28 = math.exp %27 : vector<4x32xf32>
    %cst_29 = arith.constant 1.000000e+00 : f32
    %29 = vector.broadcast %cst_29 : f32 to vector<4x32xf32>
    %30 = arith.addf %29, %28 : vector<4x32xf32>
    %31 = arith.divf %29, %30 : vector<4x32xf32>
    %32 = vector.extract_strided_slice %25 {offsets = [0, 32], sizes = [4, 32], strides = [1, 1]} : vector<4x128xf32> to vector<4x32xf32>
    %33 = arith.negf %32 : vector<4x32xf32>
    %34 = math.exp %33 : vector<4x32xf32>
    %cst_30 = arith.constant 1.000000e+00 : f32
    %35 = vector.broadcast %cst_30 : f32 to vector<4x32xf32>
    %36 = arith.addf %35, %34 : vector<4x32xf32>
    %37 = arith.divf %35, %36 : vector<4x32xf32>
    %38 = vector.extract_strided_slice %25 {offsets = [0, 64], sizes = [4, 32], strides = [1, 1]} : vector<4x128xf32> to vector<4x32xf32>
    %39 = math.tanh %38 : vector<4x32xf32>
    %40 = vector.extract_strided_slice %25 {offsets = [0, 96], sizes = [4, 32], strides = [1, 1]} : vector<4x128xf32> to vector<4x32xf32>
    %41 = arith.negf %40 : vector<4x32xf32>
    %42 = math.exp %41 : vector<4x32xf32>
    %cst_31 = arith.constant 1.000000e+00 : f32
    %43 = vector.broadcast %cst_31 : f32 to vector<4x32xf32>
    %44 = arith.addf %43, %42 : vector<4x32xf32>
    %45 = arith.divf %43, %44 : vector<4x32xf32>
    %46 = arith.mulf %37, %17 : vector<4x32xf32>
    %47 = arith.mulf %31, %39 : vector<4x32xf32>
    %48 = arith.addf %46, %47 : vector<4x32xf32>
    %49 = math.tanh %48 : vector<4x32xf32>
    %50 = arith.mulf %45, %49 : vector<4x32xf32>
    %cst_32 = arith.constant dense<0.000000e+00> : vector<4x32xf32>
    %51 = tpu.matmul %50, %7, %cst_32 {dimension_numbers = #tpu.dot_dimension_numbers<[1], [0], [0], [1], [0, 0, 1, 1], [], []>} : vector<4x32xf32>, vector<32x32xf32>, vector<4x32xf32> -> vector<4x32xf32>
    %52 = arith.addf %51, %12 : vector<4x32xf32>
    %53 = vector.shape_cast %52 : vector<4x32xf32> to vector<4x1x32xf32>
    %54 = vector.broadcast %53 : vector<4x1x32xf32> to vector<4x10x32xf32>
    %55 = arith.mulf %3, %54 : vector<4x10x32xf32>
    %cst_33 = arith.constant dense<0.000000e+00> : vector<4x10xf32>
    %56 = vector.multi_reduction <add>, %55, %cst_33 [2] : vector<4x10x32xf32> to vector<4x10xf32>
    %57 = arith.addf %56, %4 : vector<4x10xf32>
    %cst_34 = arith.constant dense<0xFF800000> : vector<4xf32>
    %58 = vector.multi_reduction <maximumf>, %57, %cst_34 [1] : vector<4x10xf32> to vector<4xf32>
    %59 = vector.shape_cast %58 : vector<4xf32> to vector<4x1xf32>
    %60 = vector.broadcast %59 : vector<4x1xf32> to vector<4x10xf32>
    %61 = arith.subf %57, %60 : vector<4x10xf32>
    %62 = math.exp %61 : vector<4x10xf32>
    %cst_35 = arith.constant dense<0.000000e+00> : vector<4xf32>
    %63 = vector.multi_reduction <add>, %62, %cst_35 [1] : vector<4x10xf32> to vector<4xf32>
    %64 = vector.shape_cast %63 : vector<4xf32> to vector<4x1xf32>
    %65 = vector.broadcast %64 : vector<4x1xf32> to vector<4x10xf32>
    %66 = arith.divf %62, %65 : vector<4x10xf32>
    %67 = vector.shape_cast %66 : vector<4x10xf32> to vector<4x10x1xf32>
    %68 = vector.broadcast %67 : vector<4x10x1xf32> to vector<4x10x32xf32>
    %69 = arith.mulf %68, %3 : vector<4x10x32xf32>
    %cst_36 = arith.constant dense<0.000000e+00> : vector<4x32xf32>
    %70 = vector.multi_reduction <add>, %69, %cst_36 [1] : vector<4x10x32xf32> to vector<4x32xf32>
    %cst_37 = arith.constant dense<0.000000e+00> : vector<4x32xf32>
    %71 = tpu.matmul %70, %8, %cst_37 {dimension_numbers = #tpu.dot_dimension_numbers<[1], [0], [0], [1], [0, 0, 1, 1], [], []>} : vector<4x32xf32>, vector<32x32xf32>, vector<4x32xf32> -> vector<4x32xf32>
    %cst_38 = arith.constant dense<0.000000e+00> : vector<4x32xf32>
    %72 = tpu.matmul %50, %9, %cst_38 {dimension_numbers = #tpu.dot_dimension_numbers<[1], [0], [0], [1], [0, 0, 1, 1], [], []>} : vector<4x32xf32>, vector<32x32xf32>, vector<4x32xf32> -> vector<4x32xf32>
    %73 = arith.addf %71, %72 : vector<4x32xf32>
    %74 = arith.addf %73, %15 : vector<4x32xf32>
    %75 = math.tanh %74 : vector<4x32xf32>
    %76 = arith.index_cast %c0_i32_25 : i32 to index
    %c0_39 = arith.constant 0 : index
    %c0_40 = arith.constant 0 : index
    %77 = vector.load %arg13[%76, %c0_39, %c0_40] : memref<4x4x32xf32, #tpu.memory_space<vmem>>, vector<1x4x32xf32>
    %78 = vector.shape_cast %77 : vector<1x4x32xf32> to vector<4x32xf32>
    %79 = vector.shape_cast %75 : vector<4x32xf32> to vector<1x4x32xf32>
    tpu.vector_store %arg13[%76, %c0_39, %c0_40], %79 {strides = array<i32>} : memref<4x4x32xf32, #tpu.memory_space<vmem>>, vector<1x4x32xf32>,
    %80 = arith.index_cast %c0_i32_25 : i32 to index
    %c0_41 = arith.constant 0 : index
    %c0_42 = arith.constant 0 : index
    %81 = vector.load %arg14[%80, %c0_41, %c0_42] : memref<4x4x10xf32, #tpu.memory_space<vmem>>, vector<1x4x10xf32>
    %82 = vector.shape_cast %81 : vector<1x4x10xf32> to vector<4x10xf32>
    %83 = vector.shape_cast %66 : vector<4x10xf32> to vector<1x4x10xf32>
    tpu.vector_store %arg14[%80, %c0_41, %c0_42], %83 {strides = array<i32>} : memref<4x4x10xf32, #tpu.memory_space<vmem>>, vector<1x4x10xf32>,
    %c1_i32 = arith.constant 1 : i32
    %84 = arith.index_cast %c1_i32 : i32 to index
    %c0_43 = arith.constant 0 : index
    %c0_44 = arith.constant 0 : index
    %85 = vector.load %arg1[%84, %c0_43, %c0_44] : memref<4x4x128xf32, #tpu.memory_space<vmem>>, vector<1x4x128xf32>
    %86 = vector.shape_cast %85 : vector<1x4x128xf32> to vector<4x128xf32>
    %cst_45 = arith.constant dense<0.000000e+00> : vector<4x128xf32>
    %87 = tpu.matmul %75, %5, %cst_45 {dimension_numbers = #tpu.dot_dimension_numbers<[1], [0], [0], [1], [0, 0, 1, 1], [], []>} : vector<4x32xf32>, vector<32x128xf32>, vector<4x128xf32> -> vector<4x128xf32>
    %88 = arith.addf %86, %87 : vector<4x128xf32>
    %cst_46 = arith.constant dense<0.000000e+00> : vector<4x128xf32>
    %89 = tpu.matmul %50, %6, %cst_46 {dimension_numbers = #tpu.dot_dimension_numbers<[1], [0], [0], [1], [0, 0, 1, 1], [], []>} : vector<4x32xf32>, vector<32x128xf32>, vector<4x128xf32> -> vector<4x128xf32>
    %90 = arith.addf %88, %89 : vector<4x128xf32>
    %91 = vector.extract_strided_slice %90 {offsets = [0, 0], sizes = [4, 32], strides = [1, 1]} : vector<4x128xf32> to vector<4x32xf32>
    %92 = arith.negf %91 : vector<4x32xf32>
    %93 = math.exp %92 : vector<4x32xf32>
    %cst_47 = arith.constant 1.000000e+00 : f32
    %94 = vector.broadcast %cst_47 : f32 to vector<4x32xf32>
    %95 = arith.addf %94, %93 : vector<4x32xf32>
    %96 = arith.divf %94, %95 : vector<4x32xf32>
    %97 = vector.extract_strided_slice %90 {offsets = [0, 32], sizes = [4, 32], strides = [1, 1]} : vector<4x128xf32> to vector<4x32xf32>
    %98 = arith.negf %97 : vector<4x32xf32>
    %99 = math.exp %98 : vector<4x32xf32>
    %cst_48 = arith.constant 1.000000e+00 : f32
    %100 = vector.broadcast %cst_48 : f32 to vector<4x32xf32>
    %101 = arith.addf %100, %99 : vector<4x32xf32>
    %102 = arith.divf %100, %101 : vector<4x32xf32>
    %103 = vector.extract_strided_slice %90 {offsets = [0, 64], sizes = [4, 32], strides = [1, 1]} : vector<4x128xf32> to vector<4x32xf32>
    %104 = math.tanh %103 : vector<4x32xf32>
    %105 = vector.extract_strided_slice %90 {offsets = [0, 96], sizes = [4, 32], strides = [1, 1]} : vector<4x128xf32> to vector<4x32xf32>
    %106 = arith.negf %105 : vector<4x32xf32>
    %107 = math.exp %106 : vector<4x32xf32>
    %cst_49 = arith.constant 1.000000e+00 : f32
    %108 = vector.broadcast %cst_49 : f32 to vector<4x32xf32>
    %109 = arith.addf %108, %107 : vector<4x32xf32>
    %110 = arith.divf %108, %109 : vector<4x32xf32>
    %111 = arith.mulf %102, %48 : vector<4x32xf32>
    %112 = arith.mulf %96, %104 : vector<4x32xf32>
    %113 = arith.addf %111, %112 : vector<4x32xf32>
    %114 = math.tanh %113 : vector<4x32xf32>
    %115 = arith.mulf %110, %114 : vector<4x32xf32>
    %cst_50 = arith.constant dense<0.000000e+00> : vector<4x32xf32>
    %116 = tpu.matmul %115, %7, %cst_50 {dimension_numbers = #tpu.dot_dimension_numbers<[1], [0], [0], [1], [0, 0, 1, 1], [], []>} : vector<4x32xf32>, vector<32x32xf32>, vector<4x32xf32> -> vector<4x32xf32>
    %117 = arith.addf %116, %12 : vector<4x32xf32>
    %118 = vector.shape_cast %117 : vector<4x32xf32> to vector<4x1x32xf32>
    %119 = vector.broadcast %118 : vector<4x1x32xf32> to vector<4x10x32xf32>
    %120 = arith.mulf %3, %119 : vector<4x10x32xf32>
    %cst_51 = arith.constant dense<0.000000e+00> : vector<4x10xf32>
    %121 = vector.multi_reduction <add>, %120, %cst_51 [2] : vector<4x10x32xf32> to vector<4x10xf32>
    %122 = arith.addf %121, %4 : vector<4x10xf32>
    %cst_52 = arith.constant dense<0xFF800000> : vector<4xf32>
    %123 = vector.multi_reduction <maximumf>, %122, %cst_52 [1] : vector<4x10xf32> to vector<4xf32>
    %124 = vector.shape_cast %123 : vector<4xf32> to vector<4x1xf32>
    %125 = vector.broadcast %124 : vector<4x1xf32> to vector<4x10xf32>
    %126 = arith.subf %122, %125 : vector<4x10xf32>
    %127 = math.exp %126 : vector<4x10xf32>
    %cst_53 = arith.constant dense<0.000000e+00> : vector<4xf32>
    %128 = vector.multi_reduction <add>, %127, %cst_53 [1] : vector<4x10xf32> to vector<4xf32>
    %129 = vector.shape_cast %128 : vector<4xf32> to vector<4x1xf32>
    %130 = vector.broadcast %129 : vector<4x1xf32> to vector<4x10xf32>
    %131 = arith.divf %127, %130 : vector<4x10xf32>
    %132 = vector.shape_cast %131 : vector<4x10xf32> to vector<4x10x1xf32>
    %133 = vector.broadcast %132 : vector<4x10x1xf32> to vector<4x10x32xf32>
    %134 = arith.mulf %133, %3 : vector<4x10x32xf32>
    %cst_54 = arith.constant dense<0.000000e+00> : vector<4x32xf32>
    %135 = vector.multi_reduction <add>, %134, %cst_54 [1] : vector<4x10x32xf32> to vector<4x32xf32>
    %cst_55 = arith.constant dense<0.000000e+00> : vector<4x32xf32>
    %136 = tpu.matmul %135, %8, %cst_55 {dimension_numbers = #tpu.dot_dimension_numbers<[1], [0], [0], [1], [0, 0, 1, 1], [], []>} : vector<4x32xf32>, vector<32x32xf32>, vector<4x32xf32> -> vector<4x32xf32>
    %cst_56 = arith.constant dense<0.000000e+00> : vector<4x32xf32>
    %137 = tpu.matmul %115, %9, %cst_56 {dimension_numbers = #tpu.dot_dimension_numbers<[1], [0], [0], [1], [0, 0, 1, 1], [], []>} : vector<4x32xf32>, vector<32x32xf32>, vector<4x32xf32> -> vector<4x32xf32>
    %138 = arith.addf %136, %137 : vector<4x32xf32>
    %139 = arith.addf %138, %15 : vector<4x32xf32>
    %140 = math.tanh %139 : vector<4x32xf32>
    %141 = arith.index_cast %c1_i32 : i32 to index
    %c0_57 = arith.constant 0 : index
    %c0_58 = arith.constant 0 : index
    %142 = vector.load %arg13[%141, %c0_57, %c0_58] : memref<4x4x32xf32, #tpu.memory_space<vmem>>, vector<1x4x32xf32>
    %143 = vector.shape_cast %142 : vector<1x4x32xf32> to vector<4x32xf32>
    %144 = vector.shape_cast %140 : vector<4x32xf32> to vector<1x4x32xf32>
    tpu.vector_store %arg13[%141, %c0_57, %c0_58], %144 {strides = array<i32>} : memref<4x4x32xf32, #tpu.memory_space<vmem>>, vector<1x4x32xf32>,
    %145 = arith.index_cast %c1_i32 : i32 to index
    %c0_59 = arith.constant 0 : index
    %c0_60 = arith.constant 0 : index
    %146 = vector.load %arg14[%145, %c0_59, %c0_60] : memref<4x4x10xf32, #tpu.memory_space<vmem>>, vector<1x4x10xf32>
    %147 = vector.shape_cast %146 : vector<1x4x10xf32> to vector<4x10xf32>
    %148 = vector.shape_cast %131 : vector<4x10xf32> to vector<1x4x10xf32>
    tpu.vector_store %arg14[%145, %c0_59, %c0_60], %148 {strides = array<i32>} : memref<4x4x10xf32, #tpu.memory_space<vmem>>, vector<1x4x10xf32>,
    %c2_i32 = arith.constant 2 : i32
    %149 = arith.index_cast %c2_i32 : i32 to index
    %c0_61 = arith.constant 0 : index
    %c0_62 = arith.constant 0 : index
    %150 = vector.load %arg1[%149, %c0_61, %c0_62] : memref<4x4x128xf32, #tpu.memory_space<vmem>>, vector<1x4x128xf32>
    %151 = vector.shape_cast %150 : vector<1x4x128xf32> to vector<4x128xf32>
    %cst_63 = arith.constant dense<0.000000e+00> : vector<4x128xf32>
    %152 = tpu.matmul %140, %5, %cst_63 {dimension_numbers = #tpu.dot_dimension_numbers<[1], [0], [0], [1], [0, 0, 1, 1], [], []>} : vector<4x32xf32>, vector<32x128xf32>, vector<4x128xf32> -> vector<4x128xf32>
    %153 = arith.addf %151, %152 : vector<4x128xf32>
    %cst_64 = arith.constant dense<0.000000e+00> : vector<4x128xf32>
    %154 = tpu.matmul %115, %6, %cst_64 {dimension_numbers = #tpu.dot_dimension_numbers<[1], [0], [0], [1], [0, 0, 1, 1], [], []>} : vector<4x32xf32>, vector<32x128xf32>, vector<4x128xf32> -> vector<4x128xf32>
    %155 = arith.addf %153, %154 : vector<4x128xf32>
    %156 = vector.extract_strided_slice %155 {offsets = [0, 0], sizes = [4, 32], strides = [1, 1]} : vector<4x128xf32> to vector<4x32xf32>
    %157 = arith.negf %156 : vector<4x32xf32>
    %158 = math.exp %157 : vector<4x32xf32>
    %cst_65 = arith.constant 1.000000e+00 : f32
    %159 = vector.broadcast %cst_65 : f32 to vector<4x32xf32>
    %160 = arith.addf %159, %158 : vector<4x32xf32>
    %161 = arith.divf %159, %160 : vector<4x32xf32>
    %162 = vector.extract_strided_slice %155 {offsets = [0, 32], sizes = [4, 32], strides = [1, 1]} : vector<4x128xf32> to vector<4x32xf32>
    %163 = arith.negf %162 : vector<4x32xf32>
    %164 = math.exp %163 : vector<4x32xf32>
    %cst_66 = arith.constant 1.000000e+00 : f32
    %165 = vector.broadcast %cst_66 : f32 to vector<4x32xf32>
    %166 = arith.addf %165, %164 : vector<4x32xf32>
    %167 = arith.divf %165, %166 : vector<4x32xf32>
    %168 = vector.extract_strided_slice %155 {offsets = [0, 64], sizes = [4, 32], strides = [1, 1]} : vector<4x128xf32> to vector<4x32xf32>
    %169 = math.tanh %168 : vector<4x32xf32>
    %170 = vector.extract_strided_slice %155 {offsets = [0, 96], sizes = [4, 32], strides = [1, 1]} : vector<4x128xf32> to vector<4x32xf32>
    %171 = arith.negf %170 : vector<4x32xf32>
    %172 = math.exp %171 : vector<4x32xf32>
    %cst_67 = arith.constant 1.000000e+00 : f32
    %173 = vector.broadcast %cst_67 : f32 to vector<4x32xf32>
    %174 = arith.addf %173, %172 : vector<4x32xf32>
    %175 = arith.divf %173, %174 : vector<4x32xf32>
    %176 = arith.mulf %167, %113 : vector<4x32xf32>
    %177 = arith.mulf %161, %169 : vector<4x32xf32>
    %178 = arith.addf %176, %177 : vector<4x32xf32>
    %179 = math.tanh %178 : vector<4x32xf32>
    %180 = arith.mulf %175, %179 : vector<4x32xf32>
    %cst_68 = arith.constant dense<0.000000e+00> : vector<4x32xf32>
    %181 = tpu.matmul %180, %7, %cst_68 {dimension_numbers = #tpu.dot_dimension_numbers<[1], [0], [0], [1], [0, 0, 1, 1], [], []>} : vector<4x32xf32>, vector<32x32xf32>, vector<4x32xf32> -> vector<4x32xf32>
    %182 = arith.addf %181, %12 : vector<4x32xf32>
    %183 = vector.shape_cast %182 : vector<4x32xf32> to vector<4x1x32xf32>
    %184 = vector.broadcast %183 : vector<4x1x32xf32> to vector<4x10x32xf32>
    %185 = arith.mulf %3, %184 : vector<4x10x32xf32>
    %cst_69 = arith.constant dense<0.000000e+00> : vector<4x10xf32>
    %186 = vector.multi_reduction <add>, %185, %cst_69 [2] : vector<4x10x32xf32> to vector<4x10xf32>
    %187 = arith.addf %186, %4 : vector<4x10xf32>
    %cst_70 = arith.constant dense<0xFF800000> : vector<4xf32>
    %188 = vector.multi_reduction <maximumf>, %187, %cst_70 [1] : vector<4x10xf32> to vector<4xf32>
    %189 = vector.shape_cast %188 : vector<4xf32> to vector<4x1xf32>
    %190 = vector.broadcast %189 : vector<4x1xf32> to vector<4x10xf32>
    %191 = arith.subf %187, %190 : vector<4x10xf32>
    %192 = math.exp %191 : vector<4x10xf32>
    %cst_71 = arith.constant dense<0.000000e+00> : vector<4xf32>
    %193 = vector.multi_reduction <add>, %192, %cst_71 [1] : vector<4x10xf32> to vector<4xf32>
    %194 = vector.shape_cast %193 : vector<4xf32> to vector<4x1xf32>
    %195 = vector.broadcast %194 : vector<4x1xf32> to vector<4x10xf32>
    %196 = arith.divf %192, %195 : vector<4x10xf32>
    %197 = vector.shape_cast %196 : vector<4x10xf32> to vector<4x10x1xf32>
    %198 = vector.broadcast %197 : vector<4x10x1xf32> to vector<4x10x32xf32>
    %199 = arith.mulf %198, %3 : vector<4x10x32xf32>
    %cst_72 = arith.constant dense<0.000000e+00> : vector<4x32xf32>
    %200 = vector.multi_reduction <add>, %199, %cst_72 [1] : vector<4x10x32xf32> to vector<4x32xf32>
    %cst_73 = arith.constant dense<0.000000e+00> : vector<4x32xf32>
    %201 = tpu.matmul %200, %8, %cst_73 {dimension_numbers = #tpu.dot_dimension_numbers<[1], [0], [0], [1], [0, 0, 1, 1], [], []>} : vector<4x32xf32>, vector<32x32xf32>, vector<4x32xf32> -> vector<4x32xf32>
    %cst_74 = arith.constant dense<0.000000e+00> : vector<4x32xf32>
    %202 = tpu.matmul %180, %9, %cst_74 {dimension_numbers = #tpu.dot_dimension_numbers<[1], [0], [0], [1], [0, 0, 1, 1], [], []>} : vector<4x32xf32>, vector<32x32xf32>, vector<4x32xf32> -> vector<4x32xf32>
    %203 = arith.addf %201, %202 : vector<4x32xf32>
    %204 = arith.addf %203, %15 : vector<4x32xf32>
    %205 = math.tanh %204 : vector<4x32xf32>
    %206 = arith.index_cast %c2_i32 : i32 to index
    %c0_75 = arith.constant 0 : index
    %c0_76 = arith.constant 0 : index
    %207 = vector.load %arg13[%206, %c0_75, %c0_76] : memref<4x4x32xf32, #tpu.memory_space<vmem>>, vector<1x4x32xf32>
    %208 = vector.shape_cast %207 : vector<1x4x32xf32> to vector<4x32xf32>
    %209 = vector.shape_cast %205 : vector<4x32xf32> to vector<1x4x32xf32>
    tpu.vector_store %arg13[%206, %c0_75, %c0_76], %209 {strides = array<i32>} : memref<4x4x32xf32, #tpu.memory_space<vmem>>, vector<1x4x32xf32>,
    %210 = arith.index_cast %c2_i32 : i32 to index
    %c0_77 = arith.constant 0 : index
    %c0_78 = arith.constant 0 : index
    %211 = vector.load %arg14[%210, %c0_77, %c0_78] : memref<4x4x10xf32, #tpu.memory_space<vmem>>, vector<1x4x10xf32>
    %212 = vector.shape_cast %211 : vector<1x4x10xf32> to vector<4x10xf32>
    %213 = vector.shape_cast %196 : vector<4x10xf32> to vector<1x4x10xf32>
    tpu.vector_store %arg14[%210, %c0_77, %c0_78], %213 {strides = array<i32>} : memref<4x4x10xf32, #tpu.memory_space<vmem>>, vector<1x4x10xf32>,
    %c3_i32 = arith.constant 3 : i32
    %214 = arith.index_cast %c3_i32 : i32 to index
    %c0_79 = arith.constant 0 : index
    %c0_80 = arith.constant 0 : index
    %215 = vector.load %arg1[%214, %c0_79, %c0_80] : memref<4x4x128xf32, #tpu.memory_space<vmem>>, vector<1x4x128xf32>
    %216 = vector.shape_cast %215 : vector<1x4x128xf32> to vector<4x128xf32>
    %cst_81 = arith.constant dense<0.000000e+00> : vector<4x128xf32>
    %217 = tpu.matmul %205, %5, %cst_81 {dimension_numbers = #tpu.dot_dimension_numbers<[1], [0], [0], [1], [0, 0, 1, 1], [], []>} : vector<4x32xf32>, vector<32x128xf32>, vector<4x128xf32> -> vector<4x128xf32>
    %218 = arith.addf %216, %217 : vector<4x128xf32>
    %cst_82 = arith.constant dense<0.000000e+00> : vector<4x128xf32>
    %219 = tpu.matmul %180, %6, %cst_82 {dimension_numbers = #tpu.dot_dimension_numbers<[1], [0], [0], [1], [0, 0, 1, 1], [], []>} : vector<4x32xf32>, vector<32x128xf32>, vector<4x128xf32> -> vector<4x128xf32>
    %220 = arith.addf %218, %219 : vector<4x128xf32>
    %221 = vector.extract_strided_slice %220 {offsets = [0, 0], sizes = [4, 32], strides = [1, 1]} : vector<4x128xf32> to vector<4x32xf32>
    %222 = arith.negf %221 : vector<4x32xf32>
    %223 = math.exp %222 : vector<4x32xf32>
    %cst_83 = arith.constant 1.000000e+00 : f32
    %224 = vector.broadcast %cst_83 : f32 to vector<4x32xf32>
    %225 = arith.addf %224, %223 : vector<4x32xf32>
    %226 = arith.divf %224, %225 : vector<4x32xf32>
    %227 = vector.extract_strided_slice %220 {offsets = [0, 32], sizes = [4, 32], strides = [1, 1]} : vector<4x128xf32> to vector<4x32xf32>
    %228 = arith.negf %227 : vector<4x32xf32>
    %229 = math.exp %228 : vector<4x32xf32>
    %cst_84 = arith.constant 1.000000e+00 : f32
    %230 = vector.broadcast %cst_84 : f32 to vector<4x32xf32>
    %231 = arith.addf %230, %229 : vector<4x32xf32>
    %232 = arith.divf %230, %231 : vector<4x32xf32>
    %233 = vector.extract_strided_slice %220 {offsets = [0, 64], sizes = [4, 32], strides = [1, 1]} : vector<4x128xf32> to vector<4x32xf32>
    %234 = math.tanh %233 : vector<4x32xf32>
    %235 = vector.extract_strided_slice %220 {offsets = [0, 96], sizes = [4, 32], strides = [1, 1]} : vector<4x128xf32> to vector<4x32xf32>
    %236 = arith.negf %235 : vector<4x32xf32>
    %237 = math.exp %236 : vector<4x32xf32>
    %cst_85 = arith.constant 1.000000e+00 : f32
    %238 = vector.broadcast %cst_85 : f32 to vector<4x32xf32>
    %239 = arith.addf %238, %237 : vector<4x32xf32>
    %240 = arith.divf %238, %239 : vector<4x32xf32>
    %241 = arith.mulf %232, %178 : vector<4x32xf32>
    %242 = arith.mulf %226, %234 : vector<4x32xf32>
    %243 = arith.addf %241, %242 : vector<4x32xf32>
    %244 = math.tanh %243 : vector<4x32xf32>
    %245 = arith.mulf %240, %244 : vector<4x32xf32>
    %cst_86 = arith.constant dense<0.000000e+00> : vector<4x32xf32>
    %246 = tpu.matmul %245, %7, %cst_86 {dimension_numbers = #tpu.dot_dimension_numbers<[1], [0], [0], [1], [0, 0, 1, 1], [], []>} : vector<4x32xf32>, vector<32x32xf32>, vector<4x32xf32> -> vector<4x32xf32>
    %247 = arith.addf %246, %12 : vector<4x32xf32>
    %248 = vector.shape_cast %247 : vector<4x32xf32> to vector<4x1x32xf32>
    %249 = vector.broadcast %248 : vector<4x1x32xf32> to vector<4x10x32xf32>
    %250 = arith.mulf %3, %249 : vector<4x10x32xf32>
    %cst_87 = arith.constant dense<0.000000e+00> : vector<4x10xf32>
    %251 = vector.multi_reduction <add>, %250, %cst_87 [2] : vector<4x10x32xf32> to vector<4x10xf32>
    %252 = arith.addf %251, %4 : vector<4x10xf32>
    %cst_88 = arith.constant dense<0xFF800000> : vector<4xf32>
    %253 = vector.multi_reduction <maximumf>, %252, %cst_88 [1] : vector<4x10xf32> to vector<4xf32>
    %254 = vector.shape_cast %253 : vector<4xf32> to vector<4x1xf32>
    %255 = vector.broadcast %254 : vector<4x1xf32> to vector<4x10xf32>
    %256 = arith.subf %252, %255 : vector<4x10xf32>
    %257 = math.exp %256 : vector<4x10xf32>
    %cst_89 = arith.constant dense<0.000000e+00> : vector<4xf32>
    %258 = vector.multi_reduction <add>, %257, %cst_89 [1] : vector<4x10xf32> to vector<4xf32>
    %259 = vector.shape_cast %258 : vector<4xf32> to vector<4x1xf32>
    %260 = vector.broadcast %259 : vector<4x1xf32> to vector<4x10xf32>
    %261 = arith.divf %257, %260 : vector<4x10xf32>
    %262 = vector.shape_cast %261 : vector<4x10xf32> to vector<4x10x1xf32>
    %263 = vector.broadcast %262 : vector<4x10x1xf32> to vector<4x10x32xf32>
    %264 = arith.mulf %263, %3 : vector<4x10x32xf32>
    %cst_90 = arith.constant dense<0.000000e+00> : vector<4x32xf32>
    %265 = vector.multi_reduction <add>, %264, %cst_90 [1] : vector<4x10x32xf32> to vector<4x32xf32>
    %cst_91 = arith.constant dense<0.000000e+00> : vector<4x32xf32>
    %266 = tpu.matmul %265, %8, %cst_91 {dimension_numbers = #tpu.dot_dimension_numbers<[1], [0], [0], [1], [0, 0, 1, 1], [], []>} : vector<4x32xf32>, vector<32x32xf32>, vector<4x32xf32> -> vector<4x32xf32>
    %cst_92 = arith.constant dense<0.000000e+00> : vector<4x32xf32>
    %267 = tpu.matmul %245, %9, %cst_92 {dimension_numbers = #tpu.dot_dimension_numbers<[1], [0], [0], [1], [0, 0, 1, 1], [], []>} : vector<4x32xf32>, vector<32x32xf32>, vector<4x32xf32> -> vector<4x32xf32>
    %268 = arith.addf %266, %267 : vector<4x32xf32>
    %269 = arith.addf %268, %15 : vector<4x32xf32>
    %270 = math.tanh %269 : vector<4x32xf32>
    %271 = arith.index_cast %c3_i32 : i32 to index
    %c0_93 = arith.constant 0 : index
    %c0_94 = arith.constant 0 : index
    %272 = vector.load %arg13[%271, %c0_93, %c0_94] : memref<4x4x32xf32, #tpu.memory_space<vmem>>, vector<1x4x32xf32>
    %273 = vector.shape_cast %272 : vector<1x4x32xf32> to vector<4x32xf32>
    %274 = vector.shape_cast %270 : vector<4x32xf32> to vector<1x4x32xf32>
    tpu.vector_store %arg13[%271, %c0_93, %c0_94], %274 {strides = array<i32>} : memref<4x4x32xf32, #tpu.memory_space<vmem>>, vector<1x4x32xf32>,
    %275 = arith.index_cast %c3_i32 : i32 to index
    %c0_95 = arith.constant 0 : index
    %c0_96 = arith.constant 0 : index
    %276 = vector.load %arg14[%275, %c0_95, %c0_96] : memref<4x4x10xf32, #tpu.memory_space<vmem>>, vector<1x4x10xf32>
    %277 = vector.shape_cast %276 : vector<1x4x10xf32> to vector<4x10xf32>
    %278 = vector.shape_cast %261 : vector<4x10xf32> to vector<1x4x10xf32>
    tpu.vector_store %arg14[%275, %c0_95, %c0_96], %278 {strides = array<i32>} : memref<4x4x10xf32, #tpu.memory_space<vmem>>, vector<1x4x10xf32>,
    %c4_i32 = arith.constant 4 : i32
    %c0_97 = arith.constant 0 : index
    %c0_98 = arith.constant 0 : index
    %279 = vector.load %arg15[%c0_97, %c0_98] : memref<4x32xf32, #tpu.memory_space<vmem>>, vector<4x32xf32>
    tpu.vector_store %arg15[%c0_97, %c0_98], %245 {strides = array<i32>} : memref<4x32xf32, #tpu.memory_space<vmem>>, vector<4x32xf32>,
    %c0_99 = arith.constant 0 : index
    %c0_100 = arith.constant 0 : index
    %280 = vector.load %arg16[%c0_99, %c0_100] : memref<4x32xf32, #tpu.memory_space<vmem>>, vector<4x32xf32>
    tpu.vector_store %arg16[%c0_99, %c0_100], %243 {strides = array<i32>} : memref<4x32xf32, #tpu.memory_space<vmem>>, vector<4x32xf32>,
    %c0_101 = arith.constant 0 : index
    %c0_102 = arith.constant 0 : index
    %281 = vector.load %arg17[%c0_101, %c0_102] : memref<4x32xf32, #tpu.memory_space<vmem>>, vector<4x32xf32>
    tpu.vector_store %arg17[%c0_101, %c0_102], %270 {strides = array<i32>} : memref<4x32xf32, #tpu.memory_space<vmem>>, vector<4x32xf32>,
    return
  }
  func.func @transform_0(%arg0: i32) -> (i32, i32, i32) {
    %c0_i32 = arith.constant 0 : i32
    %c0_i32_0 = arith.constant 0 : i32
    %c0_i32_1 = arith.constant 0 : i32
    return %arg0, %c0_i32, %c0_i32_0 : i32, i32, i32
  }
  func.func @transform_1(%arg0: i32) -> (i32, i32, i32) {
    %c0_i32 = arith.constant 0 : i32
    %c0_i32_0 = arith.constant 0 : i32
    %c0_i32_1 = arith.constant 0 : i32
    %c0_i32_2 = arith.constant 0 : i32
    return %c0_i32, %c0_i32_0, %c0_i32_1 : i32, i32, i32
  }
  func.func @transform_2(%arg0: i32) -> (i32, i32) {
    %c0_i32 = arith.constant 0 : i32
    %c0_i32_0 = arith.constant 0 : i32
    %c0_i32_1 = arith.constant 0 : i32
    return %c0_i32, %c0_i32_0 : i32, i32
  }
  func.func @transform_3(%arg0: i32) -> (i32, i32) {
    %c0_i32 = arith.constant 0 : i32
    %c0_i32_0 = arith.constant 0 : i32
    %c0_i32_1 = arith.constant 0 : i32
    return %c0_i32, %c0_i32_0 : i32, i32
  }
  func.func @transform_4(%arg0: i32) -> (i32, i32) {
    %c0_i32 = arith.constant 0 : i32
    %c0_i32_0 = arith.constant 0 : i32
    %c0_i32_1 = arith.constant 0 : i32
    return %c0_i32, %c0_i32_0 : i32, i32
  }
  func.func @transform_5(%arg0: i32) -> (i32, i32) {
    %c0_i32 = arith.constant 0 : i32
    %c0_i32_0 = arith.constant 0 : i32
    %c0_i32_1 = arith.constant 0 : i32
    return %c0_i32, %c0_i32_0 : i32, i32
  }
  func.func @transform_6(%arg0: i32) -> (i32, i32) {
    %c0_i32 = arith.constant 0 : i32
    %c0_i32_0 = arith.constant 0 : i32
    %c0_i32_1 = arith.constant 0 : i32
    return %c0_i32, %c0_i32_0 : i32, i32
  }
  func.func @transform_7(%arg0: i32) -> (i32, i32) {
    %c0_i32 = arith.constant 0 : i32
    %c0_i32_0 = arith.constant 0 : i32
    %c0_i32_1 = arith.constant 0 : i32
    return %c0_i32, %c0_i32_0 : i32, i32
  }
  func.func @transform_8(%arg0: i32) -> (i32, i32) {
    %c0_i32 = arith.constant 0 : i32
    %c0_i32_0 = arith.constant 0 : i32
    %c0_i32_1 = arith.constant 0 : i32
    return %c0_i32, %c0_i32_0 : i32, i32
  }
  func.func @transform_9(%arg0: i32) -> (i32, i32) {
    %c0_i32 = arith.constant 0 : i32
    %c0_i32_0 = arith.constant 0 : i32
    %c0_i32_1 = arith.constant 0 : i32
    return %c0_i32, %c0_i32_0 : i32, i32
  }
  func.func @transform_10(%arg0: i32) -> (i32, i32) {
    %c0_i32 = arith.constant 0 : i32
    %c0_i32_0 = arith.constant 0 : i32
    %c0_i32_1 = arith.constant 0 : i32
    return %c0_i32, %c0_i32_0 : i32, i32
  }
  func.func @transform_11(%arg0: i32) -> (i32, i32) {
    %c0_i32 = arith.constant 0 : i32
    %c0_i32_0 = arith.constant 0 : i32
    %c0_i32_1 = arith.constant 0 : i32
    return %c0_i32, %c0_i32_0 : i32, i32
  }
  func.func @transform_12(%arg0: i32) -> (i32, i32, i32) {
    %c0_i32 = arith.constant 0 : i32
    %c0_i32_0 = arith.constant 0 : i32
    %c0_i32_1 = arith.constant 0 : i32
    return %arg0, %c0_i32, %c0_i32_0 : i32, i32, i32
  }
  func.func @transform_13(%arg0: i32) -> (i32, i32, i32) {
    %c0_i32 = arith.constant 0 : i32
    %c0_i32_0 = arith.constant 0 : i32
    %c0_i32_1 = arith.constant 0 : i32
    return %arg0, %c0_i32, %c0_i32_0 : i32, i32, i32
  }
}

</mosaic_0001>

<llo_original>
// kernel: tpu_custom_call.1
$region0: #{tpu_custom_call.1}
  #allocation0 [shape = 'u32[]', space=smem, size = 0x4, offset = 0x4, fixed_abs, tag = 'smem constant byte address 0x4 - core index']
  #allocation1 [shape = 'u32[144,128]{1,0:T(1,128)}', space=vmem, size = 0x12000, scoped, tag = 'internal scratch']
  #allocation2 [shape = 'f32[4,32]{1,0:T(4,128)}', space=vmem, size = 0x800, scoped, tag = 'scratch operand']
  #allocation3 [shape = 'f32[4,32]{1,0:T(4,128)}', space=vmem, size = 0x800, scoped, tag = 'scratch operand']
  #allocation4 [shape = 'f32[4,32]{1,0:T(4,128)}', space=vmem, size = 0x800, scoped, tag = 'scratch operand']
  %s0 = inlined_call_operand.vmem [shape: f32[8,4,128], index: 0, kind: input, shape index: {}]
  %s1 = inlined_call_operand.vmem [shape: f32[4,10,32], index: 1, kind: input, shape index: {}]
  %s2 = inlined_call_operand.vmem [shape: f32[4,10], index: 2, kind: input, shape index: {}]
  %s3 = inlined_call_operand.vmem [shape: f32[4,32], index: 3, kind: input, shape index: {}]
  %s4 = inlined_call_operand.vmem [shape: f32[4,32], index: 4, kind: input, shape index: {}]
  %s5 = inlined_call_operand.vmem [shape: f32[32,128], index: 5, kind: input, shape index: {}]
  %s6 = inlined_call_operand.vmem [shape: f32[32,128], index: 6, kind: input, shape index: {}]
  %s7 = inlined_call_operand.hbm [shape: f32[32,32], index: 7, kind: input, shape index: {}]
  %s8 = inlined_call_operand.vmem [shape: f32[1,32], index: 8, kind: input, shape index: {}]
  %s9 = inlined_call_operand.hbm [shape: f32[32,32], index: 9, kind: input, shape index: {}]
  %s10 = inlined_call_operand.hbm [shape: f32[32,32], index: 10, kind: input, shape index: {}]
  %s11 = inlined_call_operand.vmem [shape: f32[1,32], index: 11, kind: input, shape index: {}]
  %s12 = inlined_call_operand.hbm [shape: f32[8,4,32], index: 12, kind: output, shape index: {0}]
  %s13 = inlined_call_operand.hbm [shape: f32[8,4,10], index: 13, kind: output, shape index: {1}]
  %14 = xla_tuple %s12, %s13
  %s15 = sld [smem:[#allocation0]]
  $region105: #{tpu_custom_call.1} parent=0
    _
  %s17 = ssub.s32 1, %s15
  %s18 = scalar_select 0, %s17, %s15
  $region1: #{tpu_custom_call.1} parent=0
    #allocation5 [shape = 'u8[16384]{0}', space=vmem, size = 0x4000, scoped, tag = 'input window, operand 7, single buffered']
    #allocation6 [shape = 's32[2]{0}', space=sflag, size = 0x8, scoped, tag = 'scoped memory for tpu_custom_call.1']
    #allocation7 [shape = 's32[2]{0}', space=sflag, size = 0x8, scoped, tag = 'scoped memory for tpu_custom_call.1']
    #allocation8 [shape = 'u8[16384]{0}', space=vmem, size = 0x4000, scoped, tag = 'input window, operand 9, single buffered']
    #allocation9 [shape = 's32[1]{0}', space=sflag, size = 0x4, scoped, tag = 'scoped memory for tpu_custom_call.1']
    #allocation10 [shape = 'u8[16384]{0}', space=vmem, size = 0x4000, scoped, tag = 'input window, operand 10, single buffered']
    #allocation11 [shape = 'u8[16384]{0}', space=vmem, size = 0x4000, scoped, tag = 'output window, operand 0']
    #allocation12 [shape = 'u8[16384]{0}', space=vmem, size = 0x4000, scoped, tag = 'output window, operand 1']
    #allocation13 [shape = 's32[2]{0}', space=sflag, size = 0x8, scoped, tag = 'scoped memory for tpu_custom_call.1']
    %19 = vsyncpa [#allocation6], 0
    %20 = vsyncpa [#allocation9], 0
    %21 = vsyncpa [#allocation7], 0
    %s22 = scalar_lea.sflag [#allocation7], 1
    %23 = vsyncpa %s22, 0
    %24 = vsyncpa [#allocation13], 0
    %s25 = scalar_lea.sflag [#allocation13], 1
    %26 = vsyncpa %s25, 0
    loop: start=0, step=1, limit=4
    $region2: #{tpu_custom_call.1} parent=1 // loop_pre_header
      _
    $region3: #{tpu_custom_call.1} parent=1 // loop_header
      %s28 = sphi 0, %s32
      %p29 = scmp.ge.s32.totalorder %s28, 4
      %s38 = sphi 0, %s40
      %s41 = sphi 0, %s38
      %s42 = sphi 0, %s41
      %s58 = sphi 0, %s42
      %s62 = sphi 0, %s62
      %s64 = sphi 0, %s62
      %s65 = sphi 0, %s64
      %s79 = sphi 0, %s65
      %s83 = sphi 0, %s83
      %s85 = sphi 0, %s83
      %s86 = sphi 0, %s85
      %s100 = sphi 0, %s86
      %s104 = sphi 0, %s104
      %s106 = sphi 0, %s104
      %s107 = sphi 0, %s106
      %s121 = sphi 0, %s107
      %s125 = sphi 0, %s125
      %s127 = sphi 0, %s125
      %s128 = sphi 0, %s127
      %s142 = sphi 0, %s128
      %s146 = sphi 0, %s146
      %s148 = sphi 0, %s146
      %s149 = sphi 0, %s148
      %s163 = sphi 0, %s149
      %s167 = sphi 0, %s167
      %s169 = sphi 0, %s167
      %s170 = sphi 0, %s169
      %s184 = sphi 0, %s170
      %s188 = sphi 0, %s188
      %s190 = sphi 0, %s188
      %s191 = sphi 0, %s190
      %s205 = sphi 0, %s191
      %s209 = sphi 0, %s209
      %s211 = sphi 0, %s209
      %s212 = sphi 0, %s211
      %s226 = sphi 0, %s212
      %s230 = sphi 0, %s230
      %s232 = sphi 0, %s230
      %s233 = sphi 0, %s232
      %s247 = sphi 0, %s233
      %s251 = sphi 0, %s251
      %s253 = sphi 0, %s251
      %s254 = sphi 0, %s253
      %s268 = sphi 0, %s254
      %s272 = sphi 0, %s272
      %s274 = sphi 0, %s272
      %s275 = sphi 0, %s274
      %s289 = sphi 0, %s275
      %s295 = sphi 0, %s297
      %s298 = sphi 0, %s295
      %s299 = sphi 0, %s298
      %s315 = sphi 0, %s299
      %s321 = sphi 0, %s323
      %s324 = sphi 0, %s321
      %s325 = sphi 0, %s324
      %s341 = sphi 0, %s325
    $region4: #{tpu_custom_call.1} parent=1 // loop_header_branch
      %31 = sbr.rel (%p29) target = $region8
    $region5: #{tpu_custom_call.1} parent=1 // loop_body
      %s33 = ssub.s32 %s28, 1
      %s34 = ssub.s32 %s28, 2
      %s35 = sadd.s32 %s28, 1
      %s36 = ssub.s32 %s28, %s35
      %p37 = scmp.eq.s32.totalorder %s36, 0
      %s39 = sadd.s32 %s38, 1
      %s40 = scalar_select %p37, %s38, %s39
      %p43 = pneg %p37
      %p44 = scmp.eq.s32.totalorder %s28, 1
      %p45 = por %p43, %p44
      %p46 = scmp.ne.s32.totalorder %s38, %s41
      %p47 = scmp.eq.s32.totalorder %s28, 0
      %p48 = por %p46, %p47
      %p49 = scmp.ne.s32.totalorder %s38, %s41
      %p50 = scmp.eq.s32.totalorder %s33, 1
      %p51 = por %p49, %p50
      %p52 = scmp.ne.s32.totalorder %s41, %s42
      %p53 = scmp.eq.s32.totalorder %s33, 0
      %p54 = por %p52, %p53
      %p55 = scmp.ne.s32.totalorder %s41, %s42
      %p56 = scmp.eq.s32.totalorder %s34, 1
      %p57 = por %p55, %p56
      %p59 = scmp.ne.s32.totalorder %s42, %s58
      %p60 = scmp.eq.s32.totalorder %s34, 0
      %p61 = por %p59, %p60
      %s63 = sadd.s32 %s62, 1
      %p66 = scmp.eq.s32.totalorder %s28, 1
      %p67 = scmp.ne.s32.totalorder %s62, %s64
      %p68 = scmp.eq.s32.totalorder %s28, 0
      %p69 = por %p67, %p68
      %p70 = scmp.ne.s32.totalorder %s62, %s64
      %p71 = scmp.eq.s32.totalorder %s33, 1
      %p72 = por %p70, %p71
      %p73 = scmp.ne.s32.totalorder %s64, %s65
      %p74 = scmp.eq.s32.totalorder %s33, 0
      %p75 = por %p73, %p74
      %p76 = scmp.ne.s32.totalorder %s64, %s65
      %p77 = scmp.eq.s32.totalorder %s34, 1
      %p78 = por %p76, %p77
      %p80 = scmp.ne.s32.totalorder %s65, %s79
      %p81 = scmp.eq.s32.totalorder %s34, 0
      %p82 = por %p80, %p81
      %s84 = sadd.s32 %s83, 1
      %p87 = scmp.eq.s32.totalorder %s28, 1
      %p88 = scmp.ne.s32.totalorder %s83, %s85
      %p89 = scmp.eq.s32.totalorder %s28, 0
      %p90 = por %p88, %p89
      %p91 = scmp.ne.s32.totalorder %s83, %s85
      %p92 = scmp.eq.s32.totalorder %s33, 1
      %p93 = por %p91, %p92
      %p94 = scmp.ne.s32.totalorder %s85, %s86
      %p95 = scmp.eq.s32.totalorder %s33, 0
      %p96 = por %p94, %p95
      %p97 = scmp.ne.s32.totalorder %s85, %s86
      %p98 = scmp.eq.s32.totalorder %s34, 1
      %p99 = por %p97, %p98
      %p101 = scmp.ne.s32.totalorder %s86, %s100
      %p102 = scmp.eq.s32.totalorder %s34, 0
      %p103 = por %p101, %p102
      %s105 = sadd.s32 %s104, 1
      %p108 = scmp.eq.s32.totalorder %s28, 1
      %p109 = scmp.ne.s32.totalorder %s104, %s106
      %p110 = scmp.eq.s32.totalorder %s28, 0
      %p111 = por %p109, %p110
      %p112 = scmp.ne.s32.totalorder %s104, %s106
      %p113 = scmp.eq.s32.totalorder %s33, 1
      %p114 = por %p112, %p113
      %p115 = scmp.ne.s32.totalorder %s106, %s107
      %p116 = scmp.eq.s32.totalorder %s33, 0
      %p117 = por %p115, %p116
      %p118 = scmp.ne.s32.totalorder %s106, %s107
      %p119 = scmp.eq.s32.totalorder %s34, 1
      %p120 = por %p118, %p119
      %p122 = scmp.ne.s32.totalorder %s107, %s121
      %p123 = scmp.eq.s32.totalorder %s34, 0
      %p124 = por %p122, %p123
      %s126 = sadd.s32 %s125, 1
      %p129 = scmp.eq.s32.totalorder %s28, 1
      %p130 = scmp.ne.s32.totalorder %s125, %s127
      %p131 = scmp.eq.s32.totalorder %s28, 0
      %p132 = por %p130, %p131
      %p133 = scmp.ne.s32.totalorder %s125, %s127
      %p134 = scmp.eq.s32.totalorder %s33, 1
      %p135 = por %p133, %p134
      %p136 = scmp.ne.s32.totalorder %s127, %s128
      %p137 = scmp.eq.s32.totalorder %s33, 0
      %p138 = por %p136, %p137
      %p139 = scmp.ne.s32.totalorder %s127, %s128
      %p140 = scmp.eq.s32.totalorder %s34, 1
      %p141 = por %p139, %p140
      %p143 = scmp.ne.s32.totalorder %s128, %s142
      %p144 = scmp.eq.s32.totalorder %s34, 0
      %p145 = por %p143, %p144
      %s147 = sadd.s32 %s146, 1
      %p150 = scmp.eq.s32.totalorder %s28, 1
      %p151 = scmp.ne.s32.totalorder %s146, %s148
      %p152 = scmp.eq.s32.totalorder %s28, 0
      %p153 = por %p151, %p152
      %p154 = scmp.ne.s32.totalorder %s146, %s148
      %p155 = scmp.eq.s32.totalorder %s33, 1
      %p156 = por %p154, %p155
      %p157 = scmp.ne.s32.totalorder %s148, %s149
      %p158 = scmp.eq.s32.totalorder %s33, 0
      %p159 = por %p157, %p158
      %p160 = scmp.ne.s32.totalorder %s148, %s149
      %p161 = scmp.eq.s32.totalorder %s34, 1
      %p162 = por %p160, %p161
      %p164 = scmp.ne.s32.totalorder %s149, %s163
      %p165 = scmp.eq.s32.totalorder %s34, 0
      %p166 = por %p164, %p165
      %s168 = sadd.s32 %s167, 1
      %p171 = scmp.eq.s32.totalorder %s28, 1
      %p172 = scmp.ne.s32.totalorder %s167, %s169
      %p173 = scmp.eq.s32.totalorder %s28, 0
      %p174 = por %p172, %p173
      %p175 = scmp.ne.s32.totalorder %s167, %s169
      %p176 = scmp.eq.s32.totalorder %s33, 1
      %p177 = por %p175, %p176
      %p178 = scmp.ne.s32.totalorder %s169, %s170
      %p179 = scmp.eq.s32.totalorder %s33, 0
      %p180 = por %p178, %p179
      %p181 = scmp.ne.s32.totalorder %s169, %s170
      %p182 = scmp.eq.s32.totalorder %s34, 1
      %p183 = por %p181, %p182
      %p185 = scmp.ne.s32.totalorder %s170, %s184
      %p186 = scmp.eq.s32.totalorder %s34, 0
      %p187 = por %p185, %p186
      %s189 = sadd.s32 %s188, 1
      %p192 = scmp.eq.s32.totalorder %s28, 1
      %p193 = scmp.ne.s32.totalorder %s188, %s190
      %p194 = scmp.eq.s32.totalorder %s28, 0
      %p195 = por %p193, %p194
      %p196 = scmp.ne.s32.totalorder %s188, %s190
      %p197 = scmp.eq.s32.totalorder %s33, 1
      %p198 = por %p196, %p197
      %p199 = scmp.ne.s32.totalorder %s190, %s191
      %p200 = scmp.eq.s32.totalorder %s33, 0
      %p201 = por %p199, %p200
      %p202 = scmp.ne.s32.totalorder %s190, %s191
      %p203 = scmp.eq.s32.totalorder %s34, 1
      %p204 = por %p202, %p203
      %p206 = scmp.ne.s32.totalorder %s191, %s205
      %p207 = scmp.eq.s32.totalorder %s34, 0
      %p208 = por %p206, %p207
      %s210 = sadd.s32 %s209, 1
      %p213 = scmp.eq.s32.totalorder %s28, 1
      %p214 = scmp.ne.s32.totalorder %s209, %s211
      %p215 = scmp.eq.s32.totalorder %s28, 0
      %p216 = por %p214, %p215
      %p217 = scmp.ne.s32.totalorder %s209, %s211
      %p218 = scmp.eq.s32.totalorder %s33, 1
      %p219 = por %p217, %p218
      %p220 = scmp.ne.s32.totalorder %s211, %s212
      %p221 = scmp.eq.s32.totalorder %s33, 0
      %p222 = por %p220, %p221
      %p223 = scmp.ne.s32.totalorder %s211, %s212
      %p224 = scmp.eq.s32.totalorder %s34, 1
      %p225 = por %p223, %p224
      %p227 = scmp.ne.s32.totalorder %s212, %s226
      %p228 = scmp.eq.s32.totalorder %s34, 0
      %p229 = por %p227, %p228
      %s231 = sadd.s32 %s230, 1
      %p234 = scmp.eq.s32.totalorder %s28, 1
      %p235 = scmp.ne.s32.totalorder %s230, %s232
      %p236 = scmp.eq.s32.totalorder %s28, 0
      %p237 = por %p235, %p236
      %p238 = scmp.ne.s32.totalorder %s230, %s232
      %p239 = scmp.eq.s32.totalorder %s33, 1
      %p240 = por %p238, %p239
      %p241 = scmp.ne.s32.totalorder %s232, %s233
      %p242 = scmp.eq.s32.totalorder %s33, 0
      %p243 = por %p241, %p242
      %p244 = scmp.ne.s32.totalorder %s232, %s233
      %p245 = scmp.eq.s32.totalorder %s34, 1
      %p246 = por %p244, %p245
      %p248 = scmp.ne.s32.totalorder %s233, %s247
      %p249 = scmp.eq.s32.totalorder %s34, 0
      %p250 = por %p248, %p249
      %s252 = sadd.s32 %s251, 1
      %p255 = scmp.eq.s32.totalorder %s28, 1
      %p256 = scmp.ne.s32.totalorder %s251, %s253
      %p257 = scmp.eq.s32.totalorder %s28, 0
      %p258 = por %p256, %p257
      %p259 = scmp.ne.s32.totalorder %s251, %s253
      %p260 = scmp.eq.s32.totalorder %s33, 1
      %p261 = por %p259, %p260
      %p262 = scmp.ne.s32.totalorder %s253, %s254
      %p263 = scmp.eq.s32.totalorder %s33, 0
      %p264 = por %p262, %p263
      %p265 = scmp.ne.s32.totalorder %s253, %s254
      %p266 = scmp.eq.s32.totalorder %s34, 1
      %p267 = por %p265, %p266
      %p269 = scmp.ne.s32.totalorder %s254, %s268
      %p270 = scmp.eq.s32.totalorder %s34, 0
      %p271 = por %p269, %p270
      %s273 = sadd.s32 %s272, 1
      %p276 = scmp.eq.s32.totalorder %s28, 1
      %p277 = scmp.ne.s32.totalorder %s272, %s274
      %p278 = scmp.eq.s32.totalorder %s28, 0
      %p279 = por %p277, %p278
      %p280 = scmp.ne.s32.totalorder %s272, %s274
      %p281 = scmp.eq.s32.totalorder %s33, 1
      %p282 = por %p280, %p281
      %p283 = scmp.ne.s32.totalorder %s274, %s275
      %p284 = scmp.eq.s32.totalorder %s33, 0
      %p285 = por %p283, %p284
      %p286 = scmp.ne.s32.totalorder %s274, %s275
      %p287 = scmp.eq.s32.totalorder %s34, 1
      %p288 = por %p286, %p287
      %p290 = scmp.ne.s32.totalorder %s275, %s289
      %p291 = scmp.eq.s32.totalorder %s34, 0
      %p292 = por %p290, %p291
      %s293 = ssub.s32 %s28, %s35
      %p294 = scmp.eq.s32.totalorder %s293, 0
      %s296 = sadd.s32 %s295, 1
      %s297 = scalar_select %p294, %s295, %s296
      %p300 = pneg %p294
      %p301 = scmp.eq.s32.totalorder %s28, 1
      %p302 = por %p300, %p301
      %p303 = scmp.ne.s32.totalorder %s295, %s298
      %p304 = scmp.eq.s32.totalorder %s28, 0
      %p305 = por %p303, %p304
      %p306 = scmp.ne.s32.totalorder %s295, %s298
      %p307 = scmp.eq.s32.totalorder %s33, 1
      %p308 = por %p306, %p307
      %p309 = scmp.ne.s32.totalorder %s298, %s299
      %p310 = scmp.eq.s32.totalorder %s33, 0
      %p311 = por %p309, %p310
      %p312 = scmp.ne.s32.totalorder %s298, %s299
      %p313 = scmp.eq.s32.totalorder %s34, 1
      %p314 = por %p312, %p313
      %p316 = scmp.ne.s32.totalorder %s299, %s315
      %p317 = scmp.eq.s32.totalorder %s34, 0
      %p318 = por %p316, %p317
      %s319 = ssub.s32 %s28, %s35
      %p320 = scmp.eq.s32.totalorder %s319, 0
      %s322 = sadd.s32 %s321, 1
      %s323 = scalar_select %p320, %s321, %s322
      %p326 = pneg %p320
      %p327 = scmp.eq.s32.totalorder %s28, 1
      %p328 = por %p326, %p327
      %p329 = scmp.ne.s32.totalorder %s321, %s324
      %p330 = scmp.eq.s32.totalorder %s28, 0
      %p331 = por %p329, %p330
      %p332 = scmp.ne.s32.totalorder %s321, %s324
      %p333 = scmp.eq.s32.totalorder %s33, 1
      %p334 = por %p332, %p333
      %p335 = scmp.ne.s32.totalorder %s324, %s325
      %p336 = scmp.eq.s32.totalorder %s33, 0
      %p337 = por %p335, %p336
      %p338 = scmp.ne.s32.totalorder %s324, %s325
      %p339 = scmp.eq.s32.totalorder %s34, 1
      %p340 = por %p338, %p339
      %p342 = scmp.ne.s32.totalorder %s325, %s341
      %p343 = scmp.eq.s32.totalorder %s34, 0
      %p344 = por %p342, %p343
      %p345 = scmp.le.s32.totalorder 1, %s28
      %p346 = scmp.lt.s32.totalorder %s28, 3
      %p347 = pnand %p345, %p346
      %p348 = pneg %p347
      // Predicated region
      $region9: #{tpu_custom_call.1} parent=5 // pred_check
        _
      $region10: #{tpu_custom_call.1} parent=5 // pred_check_branch
        %350 = sbr.rel (%p347) target = $region12
      $region11: #{tpu_custom_call.1} parent=5 // pred_region
        %s351 = ssub.s32 %s28, 1
        // Predicated region
        $region13: #{tpu_custom_call.1} parent=11 // pred_check
          %p352 = pneg %p75
        $region14: #{tpu_custom_call.1} parent=11 // pred_check_branch
          %354 = sbr.rel (%p352) target = $region16
        $region15: #{tpu_custom_call.1} parent=11 // pred_region
          _
        $region16: #{tpu_custom_call.1} parent=11 // pred_fallthru
          _
        // Predicated region
        $region17: #{tpu_custom_call.1} parent=11 // pred_check
          %p355 = pneg %p96
        $region18: #{tpu_custom_call.1} parent=11 // pred_check_branch
          %357 = sbr.rel (%p355) target = $region20
        $region19: #{tpu_custom_call.1} parent=11 // pred_region
          _
        $region20: #{tpu_custom_call.1} parent=11 // pred_fallthru
          _
        // Predicated region
        $region21: #{tpu_custom_call.1} parent=11 // pred_check
          %p358 = pneg %p117
        $region22: #{tpu_custom_call.1} parent=11 // pred_check_branch
          %360 = sbr.rel (%p358) target = $region24
        $region23: #{tpu_custom_call.1} parent=11 // pred_region
          _
        $region24: #{tpu_custom_call.1} parent=11 // pred_fallthru
          _
        // Predicated region
        $region25: #{tpu_custom_call.1} parent=11 // pred_check
          %p361 = pneg %p138
        $region26: #{tpu_custom_call.1} parent=11 // pred_check_branch
          %363 = sbr.rel (%p361) target = $region28
        $region27: #{tpu_custom_call.1} parent=11 // pred_region
          _
        $region28: #{tpu_custom_call.1} parent=11 // pred_fallthru
          _
        // Predicated region
        $region29: #{tpu_custom_call.1} parent=11 // pred_check
          %p364 = pneg %p159
        $region30: #{tpu_custom_call.1} parent=11 // pred_check_branch
          %366 = sbr.rel (%p364) target = $region32
        $region31: #{tpu_custom_call.1} parent=11 // pred_region
          _
        $region32: #{tpu_custom_call.1} parent=11 // pred_fallthru
          _
        // Predicated region
        $region33: #{tpu_custom_call.1} parent=11 // pred_check
          %p367 = pneg %p180
        $region34: #{tpu_custom_call.1} parent=11 // pred_check_branch
          %369 = sbr.rel (%p367) target = $region36
        $region35: #{tpu_custom_call.1} parent=11 // pred_region
          _
        $region36: #{tpu_custom_call.1} parent=11 // pred_fallthru
          _
        // Predicated region
        $region37: #{tpu_custom_call.1} parent=11 // pred_check
          %p370 = pneg %p201
        $region38: #{tpu_custom_call.1} parent=11 // pred_check_branch
          %372 = sbr.rel (%p370) target = $region40
        $region39: #{tpu_custom_call.1} parent=11 // pred_region
          %s374 = ssub.s32 512, 512
          %375 = vsyncadd [#allocation6], %s374
          %s376 = sshll.u32 [#allocation5], 4
          %s377 = int_to_ptr.vmem [resolvable:$true] %s376
          %382 = dma.hbm_to_vmem [thread:$0]  %s7, 512, %s377, [#allocation6], 128, 128, 8
        $region40: #{tpu_custom_call.1} parent=11 // pred_fallthru
          _
        // Predicated region
        $region41: #{tpu_custom_call.1} parent=11 // pred_check
          %p383 = pneg %p222
        $region42: #{tpu_custom_call.1} parent=11 // pred_check_branch
          %385 = sbr.rel (%p383) target = $region44
        $region43: #{tpu_custom_call.1} parent=11 // pred_region
          _
        $region44: #{tpu_custom_call.1} parent=11 // pred_fallthru
          _
        // Predicated region
        $region45: #{tpu_custom_call.1} parent=11 // pred_check
          %p386 = pneg %p243
        $region46: #{tpu_custom_call.1} parent=11 // pred_check_branch
          %388 = sbr.rel (%p386) target = $region48
        $region47: #{tpu_custom_call.1} parent=11 // pred_region
          %s390 = ssub.s32 512, 512
          %391 = vsyncadd [#allocation9], %s390
          %s392 = sshll.u32 [#allocation8], 4
          %s393 = int_to_ptr.vmem [resolvable:$true] %s392
          %398 = dma.hbm_to_vmem [thread:$0]  %s9, 512, %s393, [#allocation9], 128, 128, 8
        $region48: #{tpu_custom_call.1} parent=11 // pred_fallthru
          _
        // Predicated region
        $region49: #{tpu_custom_call.1} parent=11 // pred_check
          %p399 = pneg %p264
        $region50: #{tpu_custom_call.1} parent=11 // pred_check_branch
          %401 = sbr.rel (%p399) target = $region52
        $region51: #{tpu_custom_call.1} parent=11 // pred_region
          %s403 = ssub.s32 512, 512
          %404 = vsyncadd [#allocation9], %s403
          %s405 = sshll.u32 [#allocation10], 4
          %s406 = int_to_ptr.vmem [resolvable:$true] %s405
          %411 = dma.hbm_to_vmem [thread:$0]  %s10, 512, %s406, [#allocation9], 128, 128, 8
        $region52: #{tpu_custom_call.1} parent=11 // pred_fallthru
          _
        // Predicated region
        $region53: #{tpu_custom_call.1} parent=11 // pred_check
          %p412 = pneg %p285
        $region54: #{tpu_custom_call.1} parent=11 // pred_check_branch
          %414 = sbr.rel (%p412) target = $region56
        $region55: #{tpu_custom_call.1} parent=11 // pred_region
          _
        $region56: #{tpu_custom_call.1} parent=11 // pred_fallthru
          _
      $region12: #{tpu_custom_call.1} parent=5 // pred_fallthru
        _
      %p415 = scmp.lt.s32.totalorder %s28, 2
      // Predicated region
      $region57: #{tpu_custom_call.1} parent=5 // pred_check
        %p416 = pneg %p415
      $region58: #{tpu_custom_call.1} parent=5 // pred_check_branch
        %418 = sbr.rel (%p416) target = $region60
      $region59: #{tpu_custom_call.1} parent=5 // pred_region
        // Predicated region
        $region61: #{tpu_custom_call.1} parent=59 // pred_check
          %p419 = pneg %p48
        $region62: #{tpu_custom_call.1} parent=59 // pred_check_branch
          %421 = sbr.rel (%p419) target = $region64
        $region63: #{tpu_custom_call.1} parent=59 // pred_region
          %s422 = smul.u32 4, %s28
          %p423 = scmp.lt.s32.totalorder %s422, 7
          %s424 = scalar_select %p423, %s422, 7
          %s425 = smul.addr %s424, 4
          %s426 = scalar_lea.vmem %s0, %s425
          %s427 = smul.u32 4, %s28
        $region64: #{tpu_custom_call.1} parent=59 // pred_fallthru
          _
      $region60: #{tpu_custom_call.1} parent=5 // pred_fallthru
        _
      %p428 = scmp.le.s32.totalorder 1, %s28
      %p429 = scmp.lt.s32.totalorder %s28, 3
      %p430 = pnand %p428, %p429
      %p431 = pneg %p430
      // Predicated region
      $region65: #{tpu_custom_call.1} parent=5 // pred_check
        _
      $region66: #{tpu_custom_call.1} parent=5 // pred_check_branch
        %433 = sbr.rel (%p430) target = $region68
      $region67: #{tpu_custom_call.1} parent=5 // pred_region
        %s434 = ssub.s32 %s28, 1
        // Predicated region
        $region69: #{tpu_custom_call.1} parent=67 // pred_check
          %p435 = pneg %p201
        $region70: #{tpu_custom_call.1} parent=67 // pred_check_branch
          %437 = sbr.rel (%p435) target = $region72
        $region71: #{tpu_custom_call.1} parent=67 // pred_region
          %438 = dma.done [#allocation6], 512
        $region72: #{tpu_custom_call.1} parent=67 // pred_fallthru
          _
        // Predicated region
        $region73: #{tpu_custom_call.1} parent=67 // pred_check
          %p439 = pneg %p243
        $region74: #{tpu_custom_call.1} parent=67 // pred_check_branch
          %441 = sbr.rel (%p439) target = $region76
        $region75: #{tpu_custom_call.1} parent=67 // pred_region
          %442 = dma.done [#allocation9], 512
        $region76: #{tpu_custom_call.1} parent=67 // pred_fallthru
          _
        // Predicated region
        $region77: #{tpu_custom_call.1} parent=67 // pred_check
          %p443 = pneg %p264
        $region78: #{tpu_custom_call.1} parent=67 // pred_check_branch
          %445 = sbr.rel (%p443) target = $region80
        $region79: #{tpu_custom_call.1} parent=67 // pred_region
          %446 = dma.done [#allocation9], 512
        $region80: #{tpu_custom_call.1} parent=67 // pred_fallthru
          _
        %s447 = smul.u32 4, %s33
        %p448 = scmp.lt.s32.totalorder %s447, 7
        %s449 = scalar_select %p448, %s447, 7
        %s450 = smul.addr %s449, 4
        %s451 = scalar_lea.vmem %s0, %s450
        %p452 = pneg %p54
        %p453 = pneg %p51
        %p454 = pneg %p75
        %p455 = pneg %p72
        %p456 = pneg %p96
        %p457 = pneg %p93
        %p458 = pneg %p117
        %p459 = pneg %p114
        %p460 = pneg %p138
        %p461 = pneg %p135
        %p462 = pneg %p159
        %p463 = pneg %p156
        %p464 = pneg %p180
        %p465 = pneg %p177
        %p466 = pneg %p201
        %p467 = pneg %p198
        %p468 = pneg %p222
        %p469 = pneg %p219
        %p470 = pneg %p243
        %p471 = pneg %p240
        %p472 = pneg %p264
        %p473 = pneg %p261
        %p474 = pneg %p285
        %p475 = pneg %p282
        %p476 = pneg %p311
        %p477 = pneg %p308
        %s478 = sand.u32 %s298, 1
        %s479 = scalar_lea.sflag [#allocation7], %s478
        %s480 = sand.u32 %s298, 1
        %s481 = smul.addr %s480, 16
        %s482 = scalar_lea.vmem [#allocation11], %s481
        %p483 = pneg %p337
        %p484 = pneg %p334
        %s485 = sand.u32 %s324, 1
        %s486 = scalar_lea.sflag [#allocation13], %s485
        %s487 = sand.u32 %s324, 1
        %s488 = smul.addr %s487, 16
        %s489 = scalar_lea.vmem [#allocation12], %s488
        %s490 = smul.u32 4, %s33
        %p491 = scmp.lt.s32.totalorder %s490, 7
        %s492 = scalar_select %p491, %s490, 7
        %s493 = smul.addr %s492, 4
        %s494 = scalar_lea.vmem %s0, %s493
        %s495 = smul.u32 4, %s33
        %s496 = smul.u32 4, %s33
        %s497 = smul.u32 4, %s33
        %p498 = scmp.eq.s32.totalorder %s33, 0
        // Predicated region
        $region81: #{tpu_custom_call.1} parent=67 // pred_check
          %p499 = pneg %p498
        $region82: #{tpu_custom_call.1} parent=67 // pred_check_branch
          %501 = sbr.rel (%p499) target = $region84
        $region83: #{tpu_custom_call.1} parent=67 // pred_region
          %v502 = vld [vmem:[%s3] sm:$0xf]
          %vm503 = vcmask 257024
          %504 = vst.msk [vmem:[#allocation2] sm:$0xf] %vm503, %v502
          %v505 = vld [vmem:[%s4] sm:$0xf]
          %506 = vst.msk [vmem:[#allocation3] sm:$0xf] %vm503, %v505
          %507 = vst.msk [vmem:[#allocation4] sm:$0xf] %vm503, 0.0
        $region84: #{tpu_custom_call.1} parent=67 // pred_fallthru
          _
        %v508 = vld [vmem:[%s1] sm:$0xff]
        %v509 = vld [vmem:[%s1 + $0x8] sm:$0x3]
        %v510 = vld [vmem:[%s1 + $0x10] sm:$0xff]
        %v511 = vld [vmem:[%s1 + $0x18] sm:$0x3]
        %v512 = vld [vmem:[%s1 + $0x20] sm:$0xff]
        %v513 = vld [vmem:[%s1 + $0x28] sm:$0x3]
        %v514 = vld [vmem:[%s1 + $0x30] sm:$0xff]
        %v515 = vld [vmem:[%s1 + $0x38] sm:$0x3]
        %v516 = vld [vmem:[%s2] sm:$0xf]
        %v517 = vld [vmem:[%s5] sm:$0xff]
        %v518 = vld [vmem:[%s5 + $0x8] sm:$0xff]
        %v519 = vld [vmem:[%s5 + $0x10] sm:$0xff]
        %v520 = vld [vmem:[%s5 + $0x18] sm:$0xff]
        %v521 = vld [vmem:[%s6] sm:$0xff]
        %v522 = vld [vmem:[%s6 + $0x8] sm:$0xff]
        %v523 = vld [vmem:[%s6 + $0x10] sm:$0xff]
        %v524 = vld [vmem:[%s6 + $0x18] sm:$0xff]
        %v525 = vld [vmem:[#allocation5] sm:$0xff]
        %v526 = vld [vmem:[#allocation5 + $0x8] sm:$0xff]
        %v527 = vld [vmem:[#allocation5 + $0x10] sm:$0xff]
        %v528 = vld [vmem:[#allocation5 + $0x18] sm:$0xff]
        %v529 = vld [vmem:[#allocation8] sm:$0xff]
        %v530 = vld [vmem:[#allocation8 + $0x8] sm:$0xff]
        %v531 = vld [vmem:[#allocation8 + $0x10] sm:$0xff]
        %v532 = vld [vmem:[#allocation8 + $0x18] sm:$0xff]
        %v533 = vld [vmem:[#allocation10] sm:$0xff]
        %v534 = vld [vmem:[#allocation10 + $0x8] sm:$0xff]
        %v535 = vld [vmem:[#allocation10 + $0x10] sm:$0xff]
        %v536 = vld [vmem:[#allocation10 + $0x18] sm:$0xff]
        %v537 = vld [vmem:[%s8] sm:$0x1]
        %v539 = vlaneseq
        %v540 = vshrl.u32 %v539, 7
        %v541 = vsub.s32 0, %v540
        %v542 = vrot.slane %v537, %v541
        %v544 = vld [vmem:[%s11] sm:$0x1]
        %v546 = vlaneseq
        %v547 = vshrl.u32 %v546, 7
        %v548 = vsub.s32 0, %v547
        %v549 = vrot.slane %v544, %v548
        %v551 = vld [vmem:[#allocation2] sm:$0xf]
        %v552 = vld [vmem:[#allocation3] sm:$0xf]
        %v553 = vld [vmem:[#allocation4] sm:$0xf]
        %v554 = vld [vmem:[%s494] sm:$0xf]
        %vm555 = vcmask 261120
        %v557 = vsel %vm555, %v553, 0
        %559 = vmatprep.subr.mxu0 0.0
        %560 = vmatpush1.msra.mxu0 0.0
        %561 = vmatprep.subr.mxu0 0.0
        %562 = vmatpush1.msra.mxu0 0.0
        %563 = vmatprep.subr.mxu0 0.0
        %564 = vmatpush1.msra.mxu0 0.0
        %565 = vmatprep.subr.mxu0 0.0
        %566 = vmatpush1.msra.mxu0 0.0
        %567 = vmatprep.subr.mxu0 0.0
        %568 = vmatpush1.msra.mxu0 0.0
        %569 = vmatprep.subr.mxu0 0.0
        %570 = vmatpush1.msra.mxu0 0.0
        %571 = vmatprep.subr.mxu0 0.0
        %572 = vmatpush1.msra.mxu0 0.0
        %573 = vmatprep.subr.mxu0 0.0
        %574 = vmatpush1.msra.mxu0 0.0
        %575 = vmatprep.subr.mxu0 0.0
        %576 = vmatpush1.msra.mxu0 0.0
        %577 = vmatprep.subr.mxu0 0.0
        %578 = vmatpush1.msra.mxu0 0.0
        %579 = vmatprep.subr.mxu0 0.0
        %580 = vmatpush1.msra.mxu0 0.0
        %581 = vmatprep.subr.mxu0 0.0
        %582 = vmatpush1.msra.mxu0 0.0
        %583 = vmatprep.subr.mxu0 0.0
        %584 = vmatpush1.msra.mxu0 %v520
        %585 = vmatprep.subr.mxu0 0.0
        %586 = vmatpush1.msra.mxu0 %v519
        %587 = vmatprep.subr.mxu0 0.0
        %588 = vmatpush1.msra.mxu0 %v518
        %589 = vmatprep.subr.mxu0 0.0
        %590 = vmatpush1.msra.mxu0 %v517
        %591 = vmatprep.subr.mxu0 0.0
        %592 = vmatpush2.msra.mxu0 0.0
        %593 = vmatprep.subr.mxu0 0.0
        %594 = vmatpush2.msra.mxu0 0.0
        %595 = vmatprep.subr.mxu0 0.0
        %596 = vmatpush2.msra.mxu0 0.0
        %597 = vmatprep.subr.mxu0 0.0
        %598 = vmatpush2.msra.mxu0 0.0
        %599 = vmatprep.subr.mxu0 0.0
        %600 = vmatpush2.msra.mxu0 0.0
        %601 = vmatprep.subr.mxu0 0.0
        %602 = vmatpush2.msra.mxu0 0.0
        %603 = vmatprep.subr.mxu0 0.0
        %604 = vmatpush2.msra.mxu0 0.0
        %605 = vmatprep.subr.mxu0 0.0
        %606 = vmatpush2.msra.mxu0 0.0
        %607 = vmatprep.subr.mxu0 0.0
        %608 = vmatpush2.msra.mxu0 0.0
        %609 = vmatprep.subr.mxu0 0.0
        %610 = vmatpush2.msra.mxu0 0.0
        %611 = vmatprep.subr.mxu0 0.0
        %612 = vmatpush2.msra.mxu0 0.0
        %613 = vmatprep.subr.mxu0 0.0
        %614 = vmatpush2.msra.mxu0 0.0
        %615 = vmatprep.subr.mxu0 0.0
        %616 = vmatpush2.msra.mxu0 0.0
        %617 = vmatprep.subr.mxu0 0.0
        %618 = vmatpush2.msra.mxu0 0.0
        %619 = vmatprep.subr.mxu0 0.0
        %620 = vmatpush2.msra.mxu0 0.0
        %621 = vmatprep.subr.mxu0 0.0
        %622 = vmatpush2.msra.mxu0 0.0
        %623 = vmatprep.mubr.f32.mxu0 0.0
        %624 = vmatmul.mubr.f32.gmra.mxu0 %v557
        %v625 = vpop.f32.mrf.mxu0
        %v626 = vadd.f32 0.0, %v625
        %v627 = vpop.f32.mrf.mxu0
        %628 = vdwg.mxu0
        %v629 = vadd.f32 %v554, %v626
        %v631 = vsel %vm555, %v551, 0
        %633 = vmatprep.subr.mxu0 0.0
        %634 = vmatpush1.msra.mxu0 0.0
        %635 = vmatprep.subr.mxu0 0.0
        %636 = vmatpush1.msra.mxu0 0.0
        %637 = vmatprep.subr.mxu0 0.0
        %638 = vmatpush1.msra.mxu0 0.0
        %639 = vmatprep.subr.mxu0 0.0
        %640 = vmatpush1.msra.mxu0 0.0
        %641 = vmatprep.subr.mxu0 0.0
        %642 = vmatpush1.msra.mxu0 0.0
        %643 = vmatprep.subr.mxu0 0.0
        %644 = vmatpush1.msra.mxu0 0.0
        %645 = vmatprep.subr.mxu0 0.0
        %646 = vmatpush1.msra.mxu0 0.0
        %647 = vmatprep.subr.mxu0 0.0
        %648 = vmatpush1.msra.mxu0 0.0
        %649 = vmatprep.subr.mxu0 0.0
        %650 = vmatpush1.msra.mxu0 0.0
        %651 = vmatprep.subr.mxu0 0.0
        %652 = vmatpush1.msra.mxu0 0.0
        %653 = vmatprep.subr.mxu0 0.0
        %654 = vmatpush1.msra.mxu0 0.0
        %655 = vmatprep.subr.mxu0 0.0
        %656 = vmatpush1.msra.mxu0 0.0
        %657 = vmatprep.subr.mxu0 0.0
        %658 = vmatpush1.msra.mxu0 %v524
        %659 = vmatprep.subr.mxu0 0.0
        %660 = vmatpush1.msra.mxu0 %v523
        %661 = vmatprep.subr.mxu0 0.0
        %662 = vmatpush1.msra.mxu0 %v522
        %663 = vmatprep.subr.mxu0 0.0
        %664 = vmatpush1.msra.mxu0 %v521
        %665 = vmatprep.subr.mxu0 0.0
        %666 = vmatpush2.msra.mxu0 0.0
        %667 = vmatprep.subr.mxu0 0.0
        %668 = vmatpush2.msra.mxu0 0.0
        %669 = vmatprep.subr.mxu0 0.0
        %670 = vmatpush2.msra.mxu0 0.0
        %671 = vmatprep.subr.mxu0 0.0
        %672 = vmatpush2.msra.mxu0 0.0
        %673 = vmatprep.subr.mxu0 0.0
        %674 = vmatpush2.msra.mxu0 0.0
        %675 = vmatprep.subr.mxu0 0.0
        %676 = vmatpush2.msra.mxu0 0.0
        %677 = vmatprep.subr.mxu0 0.0
        %678 = vmatpush2.msra.mxu0 0.0
        %679 = vmatprep.subr.mxu0 0.0
        %680 = vmatpush2.msra.mxu0 0.0
        %681 = vmatprep.subr.mxu0 0.0
        %682 = vmatpush2.msra.mxu0 0.0
        %683 = vmatprep.subr.mxu0 0.0
        %684 = vmatpush2.msra.mxu0 0.0
        %685 = vmatprep.subr.mxu0 0.0
        %686 = vmatpush2.msra.mxu0 0.0
        %687 = vmatprep.subr.mxu0 0.0
        %688 = vmatpush2.msra.mxu0 0.0
        %689 = vmatprep.subr.mxu0 0.0
        %690 = vmatpush2.msra.mxu0 0.0
        %691 = vmatprep.subr.mxu0 0.0
        %692 = vmatpush2.msra.mxu0 0.0
        %693 = vmatprep.subr.mxu0 0.0
        %694 = vmatpush2.msra.mxu0 0.0
        %695 = vmatprep.subr.mxu0 0.0
        %696 = vmatpush2.msra.mxu0 0.0
        %697 = vmatprep.mubr.f32.mxu0 0.0
        %698 = vmatmul.mubr.f32.gmra.mxu0 %v631
        %v699 = vpop.f32.mrf.mxu0
        %v700 = vadd.f32 0.0, %v699
        %v701 = vpop.f32.mrf.mxu0
        %702 = vdwg.mxu0
        %v703 = vadd.f32 %v629, %v700
        %v704 = vxor.u32 %v703, 2147483648
        %v705 = vmul.f32 %v704, 1.442695
        %v706 = vpow.pop %v705
        %v707 = vadd.f32 %v706, 1.0
        %v708 = vrcp.pop %v707
        %v709 = vmul.f32 1.0, %v708
        %v710 = vtanh.pop %v703
        %712 = vrot.lane.b32.xlu0 %v552, 32
        %v713 = vpop.permute.xlu0 %712
        %v715 = vmul.f32 %v709, %v713
        %717 = vrot.lane.b32.xlu0 %v710, 64
        %v718 = vpop.permute.xlu0 %717
        %v720 = vmul.f32 %v709, %v718
        %722 = vrot.lane.b32.xlu0 %v720, 32
        %v723 = vpop.permute.xlu0 %722
        %v725 = vadd.f32 %v715, %v723
        %v726 = vtanh.pop %v725
        %728 = vrot.lane.b32.xlu0 %v726, 64
        %v729 = vpop.permute.xlu0 %728
        %v731 = vmul.f32 %v709, %v729
        %733 = vrot.lane.b32.xlu0 %v731, 32
        %v734 = vpop.permute.xlu0 %733
        %v735 = vsel %vm555, %v734, 0
        %737 = vmatprep.subr.mxu0 0.0
        %738 = vmatpush1.msra.mxu0 0.0
        %739 = vmatprep.subr.mxu0 0.0
        %740 = vmatpush1.msra.mxu0 0.0
        %741 = vmatprep.subr.mxu0 0.0
        %742 = vmatpush1.msra.mxu0 0.0
        %743 = vmatprep.subr.mxu0 0.0
        %744 = vmatpush1.msra.mxu0 0.0
        %745 = vmatprep.subr.mxu0 0.0
        %746 = vmatpush1.msra.mxu0 0.0
        %747 = vmatprep.subr.mxu0 0.0
        %748 = vmatpush1.msra.mxu0 0.0
        %749 = vmatprep.subr.mxu0 0.0
        %750 = vmatpush1.msra.mxu0 0.0
        %751 = vmatprep.subr.mxu0 0.0
        %752 = vmatpush1.msra.mxu0 0.0
        %753 = vmatprep.subr.mxu0 0.0
        %754 = vmatpush1.msra.mxu0 0.0
        %755 = vmatprep.subr.mxu0 0.0
        %756 = vmatpush1.msra.mxu0 0.0
        %757 = vmatprep.subr.mxu0 0.0
        %758 = vmatpush1.msra.mxu0 0.0
        %759 = vmatprep.subr.mxu0 0.0
        %760 = vmatpush1.msra.mxu0 0.0
        %761 = vmatprep.subr.mxu0 0.0
        %762 = vmatpush1.msra.mxu0 %v528
        %763 = vmatprep.subr.mxu0 0.0
        %764 = vmatpush1.msra.mxu0 %v527
        %765 = vmatprep.subr.mxu0 0.0
        %766 = vmatpush1.msra.mxu0 %v526
        %767 = vmatprep.subr.mxu0 0.0
        %768 = vmatpush1.msra.mxu0 %v525
        %769 = vmatprep.subr.mxu0 0.0
        %770 = vmatpush2.msra.mxu0 0.0
        %771 = vmatprep.subr.mxu0 0.0
        %772 = vmatpush2.msra.mxu0 0.0
        %773 = vmatprep.subr.mxu0 0.0
        %774 = vmatpush2.msra.mxu0 0.0
        %775 = vmatprep.subr.mxu0 0.0
        %776 = vmatpush2.msra.mxu0 0.0
        %777 = vmatprep.subr.mxu0 0.0
        %778 = vmatpush2.msra.mxu0 0.0
        %779 = vmatprep.subr.mxu0 0.0
        %780 = vmatpush2.msra.mxu0 0.0
        %781 = vmatprep.subr.mxu0 0.0
        %782 = vmatpush2.msra.mxu0 0.0
        %783 = vmatprep.subr.mxu0 0.0
        %784 = vmatpush2.msra.mxu0 0.0
        %785 = vmatprep.subr.mxu0 0.0
        %786 = vmatpush2.msra.mxu0 0.0
        %787 = vmatprep.subr.mxu0 0.0
        %788 = vmatpush2.msra.mxu0 0.0
        %789 = vmatprep.subr.mxu0 0.0
        %790 = vmatpush2.msra.mxu0 0.0
        %791 = vmatprep.subr.mxu0 0.0
        %792 = vmatpush2.msra.mxu0 0.0
        %793 = vmatprep.subr.mxu0 0.0
        %794 = vmatpush2.msra.mxu0 0.0
        %795 = vmatprep.subr.mxu0 0.0
        %796 = vmatpush2.msra.mxu0 0.0
        %797 = vmatprep.subr.mxu0 0.0
        %798 = vmatpush2.msra.mxu0 0.0
        %799 = vmatprep.subr.mxu0 0.0
        %800 = vmatpush2.msra.mxu0 0.0
        %801 = vmatprep.mubr.f32.mxu0 0.0
        %802 = vmatmul.mubr.f32.gmra.mxu0 %v735
        %v803 = vpop.f32.mrf.mxu0
        %v804 = vadd.f32 %v542, %v803
        %v805 = vpop.f32.mrf.mxu0
        %806 = vdwg.mxu0
        %v809 = vunpack.c.l.s4 1966171168
        %v810 = vunpack.c.0.s8 %v809
        %v811 = vlaneseq
        %v812 = vshrl.u32 %v811, 7
        %v813 = vsub.s32 %v810, %v812
        %v814 = vrot.slane %v804, %v813
        %v815 = vcombine.high %v814, %v814
        %v817 = vunpack.c.l.s4 1966171168
        %v818 = vunpack.c.0.s8 %v817
        %v819 = vlaneseq
        %v820 = vshrl.u32 %v819, 7
        %v821 = vsub.s32 %v818, %v820
        %v822 = vrot.slane %v814, %v821
        %v824 = vunpack.c.l.s4 1966171168
        %v825 = vunpack.c.0.s8 %v824
        %v826 = vlaneseq
        %v827 = vshrl.u32 %v826, 7
        %v828 = vsub.s32 %v825, %v827
        %v829 = vrot.slane %v815, %v828
        %v830 = vcombine.high %v822, %v822
        %v831 = vcombine.high %v829, %v829
        %v832 = vlaneseq
        %v833 = vshrl.u32 %v832, 7
        %v834 = vsub.s32 0, %v833
        %v835 = vrot.slane %v822, %v834
        %v836 = vlaneseq
        %v837 = vshrl.u32 %v836, 7
        %v838 = vsub.s32 0, %v837
        %v839 = vrot.slane %v829, %v838
        %v840 = vlaneseq
        %v841 = vshrl.u32 %v840, 7
        %v842 = vsub.s32 0, %v841
        %v843 = vrot.slane %v830, %v842
        %v844 = vlaneseq
        %v845 = vshrl.u32 %v844, 7
        %v846 = vsub.s32 0, %v845
        %v847 = vrot.slane %v831, %v846
        %v852 = vmul.f32 %v508, %v835
        %v853 = vmul.f32 %v509, %v835
        %v854 = vmul.f32 %v510, %v839
        %v855 = vmul.f32 %v511, %v839
        %v856 = vmul.f32 %v512, %v843
        %v857 = vmul.f32 %v513, %v843
        %v858 = vmul.f32 %v514, %v847
        %v859 = vmul.f32 %v515, %v847
        %v860 = vsel %vm555, %v852, 0.0
        %861 = vadd.xlane.f32.xlu0 %v860
        %v862 = vpop.xlane.xlu0 %861
        %vm863 = vcmask 254976
        %v864 = vsel %vm863, %v853, 0.0
        %865 = vadd.xlane.f32.xlu0 %v864
        %v866 = vpop.xlane.xlu0 %865
        %v867 = vsel %vm555, %v854, 0.0
        %868 = vadd.xlane.f32.xlu0 %v867
        %v869 = vpop.xlane.xlu0 %868
        %v870 = vsel %vm863, %v855, 0.0
        %871 = vadd.xlane.f32.xlu0 %v870
        %v872 = vpop.xlane.xlu0 %871
        %v873 = vsel %vm555, %v856, 0.0
        %874 = vadd.xlane.f32.xlu0 %v873
        %v875 = vpop.xlane.xlu0 %874
        %v876 = vsel %vm863, %v857, 0.0
        %877 = vadd.xlane.f32.xlu0 %v876
        %v878 = vpop.xlane.xlu0 %877
        %v879 = vsel %vm555, %v858, 0.0
        %880 = vadd.xlane.f32.xlu0 %v879
        %v881 = vpop.xlane.xlu0 %880
        %v882 = vsel %vm863, %v859, 0.0
        %883 = vadd.xlane.f32.xlu0 %v882
        %v884 = vpop.xlane.xlu0 %883
        %v886 = vlaneseq
        %v887 = vshrl.u32 %v886, 7
        %v888 = vsub.s32 0, %v887
        %v889 = vrot.slane %v516, %v888
        %891 = vbcast.lane.b32.xlu0 %v889, 256
        %v892 = vpop.permute.xlu0 %891
        %s894 = sor.u32 256, 8
        %895 = vbcast.lane.b32.xlu0 %v889, %s894
        %v896 = vpop.permute.xlu0 %895
        %v897 = vlaneseq
        %v898 = vshrl.u32 %v897, 7
        %v899 = vsub.s32 1, %v898
        %v900 = vrot.slane %v516, %v899
        %902 = vbcast.lane.b32.xlu0 %v900, 256
        %v903 = vpop.permute.xlu0 %902
        %s905 = sor.u32 256, 8
        %906 = vbcast.lane.b32.xlu0 %v900, %s905
        %v907 = vpop.permute.xlu0 %906
        %v908 = vlaneseq
        %v909 = vshrl.u32 %v908, 7
        %v910 = vsub.s32 2, %v909
        %v911 = vrot.slane %v516, %v910
        %913 = vbcast.lane.b32.xlu0 %v911, 256
        %v914 = vpop.permute.xlu0 %913
        %s916 = sor.u32 256, 8
        %917 = vbcast.lane.b32.xlu0 %v911, %s916
        %v918 = vpop.permute.xlu0 %917
        %v919 = vlaneseq
        %v920 = vshrl.u32 %v919, 7
        %v921 = vsub.s32 3, %v920
        %v922 = vrot.slane %v516, %v921
        %924 = vbcast.lane.b32.xlu0 %v922, 256
        %v925 = vpop.permute.xlu0 %924
        %s927 = sor.u32 256, 8
        %928 = vbcast.lane.b32.xlu0 %v922, %s927
        %v929 = vpop.permute.xlu0 %928
        %v938 = vadd.f32 %v862, %v892
        %v939 = vadd.f32 %v866, %v896
        %v940 = vadd.f32 %v869, %v903
        %v941 = vadd.f32 %v872, %v907
        %v942 = vadd.f32 %v875, %v914
        %v943 = vadd.f32 %v878, %v918
        %v944 = vadd.f32 %v881, %v925
        %v945 = vadd.f32 %v884, %v929
        %954 = vset.pattern.permute.xlu0 0
        %955 = vperm.xlu0 %954, %v938
        %v956 = vpop.permute.xlu0 %955
        %957 = vset.pattern.permute.xlu0 0
        %958 = vperm.xlu0 %957, %v939
        %v959 = vpop.permute.xlu0 %958
        %960 = vset.pattern.permute.xlu0 0
        %961 = vperm.xlu0 %960, %v940
        %v962 = vpop.permute.xlu0 %961
        %963 = vset.pattern.permute.xlu0 0
        %964 = vperm.xlu0 %963, %v941
        %v965 = vpop.permute.xlu0 %964
        %966 = vset.pattern.permute.xlu0 0
        %967 = vperm.xlu0 %966, %v942
        %v968 = vpop.permute.xlu0 %967
        %969 = vset.pattern.permute.xlu0 0
        %970 = vperm.xlu0 %969, %v943
        %v971 = vpop.permute.xlu0 %970
        %972 = vset.pattern.permute.xlu0 0
        %973 = vperm.xlu0 %972, %v944
        %v974 = vpop.permute.xlu0 %973
        %975 = vset.pattern.permute.xlu0 0
        %976 = vperm.xlu0 %975, %v945
        %v977 = vpop.permute.xlu0 %976
        %v978 = vlaneseq
        %v979 = vand.u32 %v978, 127
        %v980 = vlaneseq
        %v981 = vshrl.u32 %v980, 7
        %v982 = vsub.s32 %v979, %v981
        %v983 = vrot.slane %v956, %v982
        %v984 = vadd.s32 %v979, 4294967288
        %v985 = vlaneseq
        %v986 = vshrl.u32 %v985, 7
        %v987 = vsub.s32 %v984, %v986
        %v988 = vrot.slane %v959, %v987
        %vm989 = vcmask 130112
        %v990 = vsel %vm989, %v988, %v983
        %v991 = vlaneseq
        %v992 = vshrl.u32 %v991, 7
        %v993 = vsub.s32 %v979, %v992
        %v994 = vrot.slane %v962, %v993
        %v995 = vlaneseq
        %v996 = vshrl.u32 %v995, 7
        %v997 = vsub.s32 %v984, %v996
        %v998 = vrot.slane %v965, %v997
        %v999 = vsel %vm989, %v998, %v994
        %v1000 = vlaneseq
        %v1001 = vshrl.u32 %v1000, 7
        %v1002 = vsub.s32 %v979, %v1001
        %v1003 = vrot.slane %v968, %v1002
        %v1004 = vlaneseq
        %v1005 = vshrl.u32 %v1004, 7
        %v1006 = vsub.s32 %v984, %v1005
        %v1007 = vrot.slane %v971, %v1006
        %v1008 = vsel %vm989, %v1007, %v1003
        %v1009 = vlaneseq
        %v1010 = vshrl.u32 %v1009, 7
        %v1011 = vsub.s32 %v979, %v1010
        %v1012 = vrot.slane %v974, %v1011
        %v1013 = vlaneseq
        %v1014 = vshrl.u32 %v1013, 7
        %v1015 = vsub.s32 %v984, %v1014
        %v1016 = vrot.slane %v977, %v1015
        %v1017 = vsel %vm989, %v1016, %v1012
        %vm1018 = vcmask 1041409
        %v1019 = vsel %vm1018, %v999, %v990
        %vm1020 = vcmask 1042434
        %v1021 = vsel %vm1020, %v1008, %v1019
        %vm1022 = vcmask 1043459
        %v1023 = vsel %vm1022, %v1017, %v1021
        %vm1025 = vcmask 76800
        %v1026 = vsel %vm1025, %v1023, -inf
        %1027 = vmax.xlane.f32.xlu0 %v1026
        %v1028 = vpop.xlane.xlu0 %1027
        %v1030 = vlaneseq
        %v1031 = vshrl.u32 %v1030, 7
        %v1032 = vsub.s32 0, %v1031
        %v1033 = vrot.slane %v1028, %v1032
        %v1034 = vlaneseq
        %v1035 = vshrl.u32 %v1034, 7
        %v1036 = vsub.s32 1, %v1035
        %v1037 = vrot.slane %v1028, %v1036
        %v1038 = vlaneseq
        %v1039 = vshrl.u32 %v1038, 7
        %v1040 = vsub.s32 2, %v1039
        %v1041 = vrot.slane %v1028, %v1040
        %v1042 = vlaneseq
        %v1043 = vshrl.u32 %v1042, 7
        %v1044 = vsub.s32 3, %v1043
        %v1045 = vrot.slane %v1028, %v1044
        %v1050 = vsub.f32 %v938, %v1033
        %v1051 = vsub.f32 %v939, %v1033
        %v1052 = vsub.f32 %v940, %v1037
        %v1053 = vsub.f32 %v941, %v1037
        %v1054 = vsub.f32 %v942, %v1041
        %v1055 = vsub.f32 %v943, %v1041
        %v1056 = vsub.f32 %v944, %v1045
        %v1057 = vsub.f32 %v945, %v1045
        %v1058 = vmul.f32 %v1050, 1.442695
        %v1059 = vpow.pop %v1058
        %v1060 = vmul.f32 %v1051, 1.442695
        %v1061 = vpow.pop %v1060
        %v1062 = vmul.f32 %v1052, 1.442695
        %v1063 = vpow.pop %v1062
        %v1064 = vmul.f32 %v1053, 1.442695
        %v1065 = vpow.pop %v1064
        %v1066 = vmul.f32 %v1054, 1.442695
        %v1067 = vpow.pop %v1066
        %v1068 = vmul.f32 %v1055, 1.442695
        %v1069 = vpow.pop %v1068
        %v1070 = vmul.f32 %v1056, 1.442695
        %v1071 = vpow.pop %v1070
        %v1072 = vmul.f32 %v1057, 1.442695
        %v1073 = vpow.pop %v1072
        %1082 = vset.pattern.permute.xlu0 0
        %1083 = vperm.xlu0 %1082, %v1059
        %v1084 = vpop.permute.xlu0 %1083
        %1085 = vset.pattern.permute.xlu0 0
        %1086 = vperm.xlu0 %1085, %v1061
        %v1087 = vpop.permute.xlu0 %1086
        %1088 = vset.pattern.permute.xlu0 0
        %1089 = vperm.xlu0 %1088, %v1063
        %v1090 = vpop.permute.xlu0 %1089
        %1091 = vset.pattern.permute.xlu0 0
        %1092 = vperm.xlu0 %1091, %v1065
        %v1093 = vpop.permute.xlu0 %1092
        %1094 = vset.pattern.permute.xlu0 0
        %1095 = vperm.xlu0 %1094, %v1067
        %v1096 = vpop.permute.xlu0 %1095
        %1097 = vset.pattern.permute.xlu0 0
        %1098 = vperm.xlu0 %1097, %v1069
        %v1099 = vpop.permute.xlu0 %1098
        %1100 = vset.pattern.permute.xlu0 0
        %1101 = vperm.xlu0 %1100, %v1071
        %v1102 = vpop.permute.xlu0 %1101
        %1103 = vset.pattern.permute.xlu0 0
        %1104 = vperm.xlu0 %1103, %v1073
        %v1105 = vpop.permute.xlu0 %1104
        %v1106 = vlaneseq
        %v1107 = vshrl.u32 %v1106, 7
        %v1108 = vsub.s32 %v979, %v1107
        %v1109 = vrot.slane %v1084, %v1108
        %v1110 = vlaneseq
        %v1111 = vshrl.u32 %v1110, 7
        %v1112 = vsub.s32 %v984, %v1111
        %v1113 = vrot.slane %v1087, %v1112
        %v1114 = vsel %vm989, %v1113, %v1109
        %v1115 = vlaneseq
        %v1116 = vshrl.u32 %v1115, 7
        %v1117 = vsub.s32 %v979, %v1116
        %v1118 = vrot.slane %v1090, %v1117
        %v1119 = vlaneseq
        %v1120 = vshrl.u32 %v1119, 7
        %v1121 = vsub.s32 %v984, %v1120
        %v1122 = vrot.slane %v1093, %v1121
        %v1123 = vsel %vm989, %v1122, %v1118
        %v1124 = vlaneseq
        %v1125 = vshrl.u32 %v1124, 7
        %v1126 = vsub.s32 %v979, %v1125
        %v1127 = vrot.slane %v1096, %v1126
        %v1128 = vlaneseq
        %v1129 = vshrl.u32 %v1128, 7
        %v1130 = vsub.s32 %v984, %v1129
        %v1131 = vrot.slane %v1099, %v1130
        %v1132 = vsel %vm989, %v1131, %v1127
        %v1133 = vlaneseq
        %v1134 = vshrl.u32 %v1133, 7
        %v1135 = vsub.s32 %v979, %v1134
        %v1136 = vrot.slane %v1102, %v1135
        %v1137 = vlaneseq
        %v1138 = vshrl.u32 %v1137, 7
        %v1139 = vsub.s32 %v984, %v1138
        %v1140 = vrot.slane %v1105, %v1139
        %v1141 = vsel %vm989, %v1140, %v1136
        %v1142 = vsel %vm1018, %v1123, %v1114
        %v1143 = vsel %vm1020, %v1132, %v1142
        %v1144 = vsel %vm1022, %v1141, %v1143
        %v1146 = vsel %vm1025, %v1144, 0.0
        %1147 = vadd.xlane.f32.xlu0 %v1146
        %v1148 = vpop.xlane.xlu0 %1147
        %v1150 = vlaneseq
        %v1151 = vshrl.u32 %v1150, 7
        %v1152 = vsub.s32 0, %v1151
        %v1153 = vrot.slane %v1148, %v1152
        %v1154 = vlaneseq
        %v1155 = vshrl.u32 %v1154, 7
        %v1156 = vsub.s32 1, %v1155
        %v1157 = vrot.slane %v1148, %v1156
        %v1158 = vlaneseq
        %v1159 = vshrl.u32 %v1158, 7
        %v1160 = vsub.s32 2, %v1159
        %v1161 = vrot.slane %v1148, %v1160
        %v1162 = vlaneseq
        %v1163 = vshrl.u32 %v1162, 7
        %v1164 = vsub.s32 3, %v1163
        %v1165 = vrot.slane %v1148, %v1164
        %v1170 = vrcp.pop %v1153
        %v1171 = vmul.f32 %v1059, %v1170
        %v1172 = vmul.f32 %v1061, %v1170
        %v1173 = vrcp.pop %v1157
        %v1174 = vmul.f32 %v1063, %v1173
        %v1175 = vmul.f32 %v1065, %v1173
        %v1176 = vrcp.pop %v1161
        %v1177 = vmul.f32 %v1067, %v1176
        %v1178 = vmul.f32 %v1069, %v1176
        %v1179 = vrcp.pop %v1165
        %v1180 = vmul.f32 %v1071, %v1179
        %v1181 = vmul.f32 %v1073, %v1179
        %1183 = vset.pattern.permute.xlu0 0
        %1184 = vperm.xlu0 %1183, %v1171
        %v1185 = vpop.permute.xlu0 %1184
        %1188 = vset.pattern.permute.xlu0 0
        %1189 = vperm.xlu0 %1188, %v1172
        %v1190 = vpop.permute.xlu0 %1189
        %1193 = vset.pattern.permute.xlu0 0
        %1194 = vperm.xlu0 %1193, %v1174
        %v1195 = vpop.permute.xlu0 %1194
        %1198 = vset.pattern.permute.xlu0 0
        %1199 = vperm.xlu0 %1198, %v1175
        %v1200 = vpop.permute.xlu0 %1199
        %1203 = vset.pattern.permute.xlu0 0
        %1204 = vperm.xlu0 %1203, %v1177
        %v1205 = vpop.permute.xlu0 %1204
        %1208 = vset.pattern.permute.xlu0 0
        %1209 = vperm.xlu0 %1208, %v1178
        %v1210 = vpop.permute.xlu0 %1209
        %1213 = vset.pattern.permute.xlu0 0
        %1214 = vperm.xlu0 %1213, %v1180
        %v1215 = vpop.permute.xlu0 %1214
        %1218 = vset.pattern.permute.xlu0 0
        %1219 = vperm.xlu0 %1218, %v1181
        %v1220 = vpop.permute.xlu0 %1219
        %v1222 = vmul.f32 %v1185, %v508
        %v1223 = vmul.f32 %v1190, %v509
        %v1224 = vmul.f32 %v1195, %v510
        %v1225 = vmul.f32 %v1200, %v511
        %v1226 = vmul.f32 %v1205, %v512
        %v1227 = vmul.f32 %v1210, %v513
        %v1228 = vmul.f32 %v1215, %v514
        %v1229 = vmul.f32 %v1220, %v515
        %v1230 = vsel %vm555, %v1222, 0.0
        %v1231 = vsel %vm863, %v1223, 0.0
        %v1232 = vadd.f32 %v1230, %v1231
        %v1233 = vrot.slane %v1232, 4
        %v1234 = vadd.f32 %v1232, %v1233
        %v1235 = vrot.slane %v1234, 2
        %v1236 = vadd.f32 %v1234, %v1235
        %v1237 = vrot.slane %v1236, 1
        %v1238 = vadd.f32 %v1236, %v1237
        %v1239 = vsel %vm555, %v1224, 0.0
        %v1240 = vsel %vm863, %v1225, 0.0
        %v1241 = vadd.f32 %v1239, %v1240
        %v1242 = vrot.slane %v1241, 4
        %v1243 = vadd.f32 %v1241, %v1242
        %v1244 = vrot.slane %v1243, 2
        %v1245 = vadd.f32 %v1243, %v1244
        %v1246 = vrot.slane %v1245, 1
        %v1247 = vadd.f32 %v1245, %v1246
        %v1248 = vsel %vm555, %v1226, 0.0
        %v1249 = vsel %vm863, %v1227, 0.0
        %v1250 = vadd.f32 %v1248, %v1249
        %v1251 = vrot.slane %v1250, 4
        %v1252 = vadd.f32 %v1250, %v1251
        %v1253 = vrot.slane %v1252, 2
        %v1254 = vadd.f32 %v1252, %v1253
        %v1255 = vrot.slane %v1254, 1
        %v1256 = vadd.f32 %v1254, %v1255
        %v1257 = vsel %vm555, %v1228, 0.0
        %v1258 = vsel %vm863, %v1229, 0.0
        %v1259 = vadd.f32 %v1257, %v1258
        %v1260 = vrot.slane %v1259, 4
        %v1261 = vadd.f32 %v1259, %v1260
        %v1262 = vrot.slane %v1261, 2
        %v1263 = vadd.f32 %v1261, %v1262
        %v1264 = vrot.slane %v1263, 1
        %v1265 = vadd.f32 %v1263, %v1264
        %1266 = vmatprep.subr.mxu0 0.0
        %1267 = vmatpush1.msra.mxu0 0.0
        %1268 = vmatprep.subr.mxu0 0.0
        %1269 = vmatpush1.msra.mxu0 0.0
        %1270 = vmatprep.subr.mxu0 0.0
        %1271 = vmatpush1.msra.mxu0 0.0
        %1272 = vmatprep.subr.mxu0 0.0
        %1273 = vmatpush1.msra.mxu0 0.0
        %1274 = vmatprep.subr.mxu0 0.0
        %1275 = vmatpush1.msra.mxu0 0.0
        %1276 = vmatprep.subr.mxu0 0.0
        %1277 = vmatpush1.msra.mxu0 0.0
        %1278 = vmatprep.subr.mxu0 0.0
        %1279 = vmatpush1.msra.mxu0 0.0
        %1280 = vmatprep.subr.mxu0 0.0
        %1281 = vmatpush1.msra.mxu0 0.0
        %1282 = vmatprep.subr.mxu0 0.0
        %1283 = vmatpush1.msra.mxu0 0.0
        %1284 = vmatprep.subr.mxu0 0.0
        %1285 = vmatpush1.msra.mxu0 0.0
        %1286 = vmatprep.subr.mxu0 0.0
        %1287 = vmatpush1.msra.mxu0 0.0
        %1288 = vmatprep.subr.mxu0 0.0
        %1289 = vmatpush1.msra.mxu0 0.0
        %1290 = vmatprep.subr.mxu0 0.0
        %1291 = vmatpush1.msra.mxu0 %v536
        %1292 = vmatprep.subr.mxu0 0.0
        %1293 = vmatpush1.msra.mxu0 %v535
        %1294 = vmatprep.subr.mxu0 0.0
        %1295 = vmatpush1.msra.mxu0 %v534
        %1296 = vmatprep.subr.mxu0 0.0
        %1297 = vmatpush1.msra.mxu0 %v533
        %1298 = vmatprep.subr.mxu0 0.0
        %1299 = vmatpush2.msra.mxu0 0.0
        %1300 = vmatprep.subr.mxu0 0.0
        %1301 = vmatpush2.msra.mxu0 0.0
        %1302 = vmatprep.subr.mxu0 0.0
        %1303 = vmatpush2.msra.mxu0 0.0
        %1304 = vmatprep.subr.mxu0 0.0
        %1305 = vmatpush2.msra.mxu0 0.0
        %1306 = vmatprep.subr.mxu0 0.0
        %1307 = vmatpush2.msra.mxu0 0.0
        %1308 = vmatprep.subr.mxu0 0.0
        %1309 = vmatpush2.msra.mxu0 0.0
        %1310 = vmatprep.subr.mxu0 0.0
        %1311 = vmatpush2.msra.mxu0 0.0
        %1312 = vmatprep.subr.mxu0 0.0
        %1313 = vmatpush2.msra.mxu0 0.0
        %1314 = vmatprep.subr.mxu0 0.0
        %1315 = vmatpush2.msra.mxu0 0.0
        %1316 = vmatprep.subr.mxu0 0.0
        %1317 = vmatpush2.msra.mxu0 0.0
        %1318 = vmatprep.subr.mxu0 0.0
        %1319 = vmatpush2.msra.mxu0 0.0
        %1320 = vmatprep.subr.mxu0 0.0
        %1321 = vmatpush2.msra.mxu0 0.0
        %1322 = vmatprep.subr.mxu0 0.0
        %1323 = vmatpush2.msra.mxu0 0.0
        %1324 = vmatprep.subr.mxu0 0.0
        %1325 = vmatpush2.msra.mxu0 0.0
        %1326 = vmatprep.subr.mxu0 0.0
        %1327 = vmatpush2.msra.mxu0 0.0
        %1328 = vmatprep.subr.mxu0 0.0
        %1329 = vmatpush2.msra.mxu0 0.0
        %1330 = vmatprep.mubr.f32.mxu0 0.0
        %1331 = vmatmul.mubr.f32.gmra.mxu0 %v735
        %v1332 = vpop.f32.mrf.mxu0
        %v1333 = vadd.f32 0.0, %v1332
        %v1334 = vpop.f32.mrf.mxu0
        %1335 = vdwg.mxu0
        %v1340 = vsel %vm1018, %v1247, %v1238
        %v1341 = vsel %vm1020, %v1256, %v1340
        %v1342 = vsel %vm1022, %v1265, %v1341
        %v1343 = vsel %vm555, %v1342, 0
        %1345 = vmatprep.subr.mxu0 0.0
        %1346 = vmatpush1.msra.mxu0 0.0
        %1347 = vmatprep.subr.mxu0 0.0
        %1348 = vmatpush1.msra.mxu0 0.0
        %1349 = vmatprep.subr.mxu0 0.0
        %1350 = vmatpush1.msra.mxu0 0.0
        %1351 = vmatprep.subr.mxu0 0.0
        %1352 = vmatpush1.msra.mxu0 0.0
        %1353 = vmatprep.subr.mxu0 0.0
        %1354 = vmatpush1.msra.mxu0 0.0
        %1355 = vmatprep.subr.mxu0 0.0
        %1356 = vmatpush1.msra.mxu0 0.0
        %1357 = vmatprep.subr.mxu0 0.0
        %1358 = vmatpush1.msra.mxu0 0.0
        %1359 = vmatprep.subr.mxu0 0.0
        %1360 = vmatpush1.msra.mxu0 0.0
        %1361 = vmatprep.subr.mxu0 0.0
        %1362 = vmatpush1.msra.mxu0 0.0
        %1363 = vmatprep.subr.mxu0 0.0
        %1364 = vmatpush1.msra.mxu0 0.0
        %1365 = vmatprep.subr.mxu0 0.0
        %1366 = vmatpush1.msra.mxu0 0.0
        %1367 = vmatprep.subr.mxu0 0.0
        %1368 = vmatpush1.msra.mxu0 0.0
        %1369 = vmatprep.subr.mxu0 0.0
        %1370 = vmatpush1.msra.mxu0 %v532
        %1371 = vmatprep.subr.mxu0 0.0
        %1372 = vmatpush1.msra.mxu0 %v531
        %1373 = vmatprep.subr.mxu0 0.0
        %1374 = vmatpush1.msra.mxu0 %v530
        %1375 = vmatprep.subr.mxu0 0.0
        %1376 = vmatpush1.msra.mxu0 %v529
        %1377 = vmatprep.subr.mxu0 0.0
        %1378 = vmatpush2.msra.mxu0 0.0
        %1379 = vmatprep.subr.mxu0 0.0
        %1380 = vmatpush2.msra.mxu0 0.0
        %1381 = vmatprep.subr.mxu0 0.0
        %1382 = vmatpush2.msra.mxu0 0.0
        %1383 = vmatprep.subr.mxu0 0.0
        %1384 = vmatpush2.msra.mxu0 0.0
        %1385 = vmatprep.subr.mxu0 0.0
        %1386 = vmatpush2.msra.mxu0 0.0
        %1387 = vmatprep.subr.mxu0 0.0
        %1388 = vmatpush2.msra.mxu0 0.0
        %1389 = vmatprep.subr.mxu0 0.0
        %1390 = vmatpush2.msra.mxu0 0.0
        %1391 = vmatprep.subr.mxu0 0.0
        %1392 = vmatpush2.msra.mxu0 0.0
        %1393 = vmatprep.subr.mxu0 0.0
        %1394 = vmatpush2.msra.mxu0 0.0
        %1395 = vmatprep.subr.mxu0 0.0
        %1396 = vmatpush2.msra.mxu0 0.0
        %1397 = vmatprep.subr.mxu0 0.0
        %1398 = vmatpush2.msra.mxu0 0.0
        %1399 = vmatprep.subr.mxu0 0.0
        %1400 = vmatpush2.msra.mxu0 0.0
        %1401 = vmatprep.subr.mxu0 0.0
        %1402 = vmatpush2.msra.mxu0 0.0
        %1403 = vmatprep.subr.mxu0 0.0
        %1404 = vmatpush2.msra.mxu0 0.0
        %1405 = vmatprep.subr.mxu0 0.0
        %1406 = vmatpush2.msra.mxu0 0.0
        %1407 = vmatprep.subr.mxu0 0.0
        %1408 = vmatpush2.msra.mxu0 0.0
        %1409 = vmatprep.mubr.f32.mxu0 0.0
        %1410 = vmatmul.mubr.f32.gmra.mxu0 %v1343
        %v1411 = vpop.f32.mrf.mxu0
        %v1412 = vadd.f32 %v1333, %v1411
        %v1413 = vpop.f32.mrf.mxu0
        %1414 = vdwg.mxu0
        %v1415 = vadd.f32 %v1412, %v549
        %v1416 = vtanh.pop %v1415
        %vm1417 = vcmask 257024
        %1418 = vst.msk [vmem:[%s482] sm:$0xf] %vm1417, %v1416
        %v1419 = vlaneseq
        %v1420 = vshrl.u32 %v1419, 7
        %v1421 = vsub.s32 %v979, %v1420
        %v1422 = vrot.slane %v1185, %v1421
        %v1423 = vlaneseq
        %v1424 = vshrl.u32 %v1423, 7
        %v1425 = vsub.s32 %v984, %v1424
        %v1426 = vrot.slane %v1190, %v1425
        %v1427 = vsel %vm989, %v1426, %v1422
        %v1428 = vlaneseq
        %v1429 = vshrl.u32 %v1428, 7
        %v1430 = vsub.s32 %v979, %v1429
        %v1431 = vrot.slane %v1195, %v1430
        %v1432 = vlaneseq
        %v1433 = vshrl.u32 %v1432, 7
        %v1434 = vsub.s32 %v984, %v1433
        %v1435 = vrot.slane %v1200, %v1434
        %v1436 = vsel %vm989, %v1435, %v1431
        %v1437 = vlaneseq
        %v1438 = vshrl.u32 %v1437, 7
        %v1439 = vsub.s32 %v979, %v1438
        %v1440 = vrot.slane %v1205, %v1439
        %v1441 = vlaneseq
        %v1442 = vshrl.u32 %v1441, 7
        %v1443 = vsub.s32 %v984, %v1442
        %v1444 = vrot.slane %v1210, %v1443
        %v1445 = vsel %vm989, %v1444, %v1440
        %v1446 = vlaneseq
        %v1447 = vshrl.u32 %v1446, 7
        %v1448 = vsub.s32 %v979, %v1447
        %v1449 = vrot.slane %v1215, %v1448
        %v1450 = vlaneseq
        %v1451 = vshrl.u32 %v1450, 7
        %v1452 = vsub.s32 %v984, %v1451
        %v1453 = vrot.slane %v1220, %v1452
        %v1454 = vsel %vm989, %v1453, %v1449
        %v1455 = vsel %vm1018, %v1436, %v1427
        %v1456 = vsel %vm1020, %v1445, %v1455
        %v1457 = vsel %vm1022, %v1454, %v1456
        %1459 = vst.msk [vmem:[%s489] sm:$0xf] %vm1025, %v1457
        %s1460 = scalar_lea.vmem %s494, 4
        %v1461 = vld [vmem:[%s1460] sm:$0xf]
        %v1463 = vsel %vm555, %v1416, 0
        %1465 = vmatprep.subr.mxu0 0.0
        %1466 = vmatpush1.msra.mxu0 0.0
        %1467 = vmatprep.subr.mxu0 0.0
        %1468 = vmatpush1.msra.mxu0 0.0
        %1469 = vmatprep.subr.mxu0 0.0
        %1470 = vmatpush1.msra.mxu0 0.0
        %1471 = vmatprep.subr.mxu0 0.0
        %1472 = vmatpush1.msra.mxu0 0.0
        %1473 = vmatprep.subr.mxu0 0.0
        %1474 = vmatpush1.msra.mxu0 0.0
        %1475 = vmatprep.subr.mxu0 0.0
        %1476 = vmatpush1.msra.mxu0 0.0
        %1477 = vmatprep.subr.mxu0 0.0
        %1478 = vmatpush1.msra.mxu0 0.0
        %1479 = vmatprep.subr.mxu0 0.0
        %1480 = vmatpush1.msra.mxu0 0.0
        %1481 = vmatprep.subr.mxu0 0.0
        %1482 = vmatpush1.msra.mxu0 0.0
        %1483 = vmatprep.subr.mxu0 0.0
        %1484 = vmatpush1.msra.mxu0 0.0
        %1485 = vmatprep.subr.mxu0 0.0
        %1486 = vmatpush1.msra.mxu0 0.0
        %1487 = vmatprep.subr.mxu0 0.0
        %1488 = vmatpush1.msra.mxu0 0.0
        %1489 = vmatprep.subr.mxu0 0.0
        %1490 = vmatpush1.msra.mxu0 %v520
        %1491 = vmatprep.subr.mxu0 0.0
        %1492 = vmatpush1.msra.mxu0 %v519
        %1493 = vmatprep.subr.mxu0 0.0
        %1494 = vmatpush1.msra.mxu0 %v518
        %1495 = vmatprep.subr.mxu0 0.0
        %1496 = vmatpush1.msra.mxu0 %v517
        %1497 = vmatprep.subr.mxu0 0.0
        %1498 = vmatpush2.msra.mxu0 0.0
        %1499 = vmatprep.subr.mxu0 0.0
        %1500 = vmatpush2.msra.mxu0 0.0
        %1501 = vmatprep.subr.mxu0 0.0
        %1502 = vmatpush2.msra.mxu0 0.0
        %1503 = vmatprep.subr.mxu0 0.0
        %1504 = vmatpush2.msra.mxu0 0.0
        %1505 = vmatprep.subr.mxu0 0.0
        %1506 = vmatpush2.msra.mxu0 0.0
        %1507 = vmatprep.subr.mxu0 0.0
        %1508 = vmatpush2.msra.mxu0 0.0
        %1509 = vmatprep.subr.mxu0 0.0
        %1510 = vmatpush2.msra.mxu0 0.0
        %1511 = vmatprep.subr.mxu0 0.0
        %1512 = vmatpush2.msra.mxu0 0.0
        %1513 = vmatprep.subr.mxu0 0.0
        %1514 = vmatpush2.msra.mxu0 0.0
        %1515 = vmatprep.subr.mxu0 0.0
        %1516 = vmatpush2.msra.mxu0 0.0
        %1517 = vmatprep.subr.mxu0 0.0
        %1518 = vmatpush2.msra.mxu0 0.0
        %1519 = vmatprep.subr.mxu0 0.0
        %1520 = vmatpush2.msra.mxu0 0.0
        %1521 = vmatprep.subr.mxu0 0.0
        %1522 = vmatpush2.msra.mxu0 0.0
        %1523 = vmatprep.subr.mxu0 0.0
        %1524 = vmatpush2.msra.mxu0 0.0
        %1525 = vmatprep.subr.mxu0 0.0
        %1526 = vmatpush2.msra.mxu0 0.0
        %1527 = vmatprep.subr.mxu0 0.0
        %1528 = vmatpush2.msra.mxu0 0.0
        %1529 = vmatprep.mubr.f32.mxu0 0.0
        %1530 = vmatmul.mubr.f32.gmra.mxu0 %v1463
        %v1531 = vpop.f32.mrf.mxu0
        %v1532 = vadd.f32 0.0, %v1531
        %v1533 = vpop.f32.mrf.mxu0
        %1534 = vdwg.mxu0
        %v1535 = vadd.f32 %v1461, %v1532
        %1536 = vmatprep.subr.mxu0 0.0
        %1537 = vmatpush1.msra.mxu0 0.0
        %1538 = vmatprep.subr.mxu0 0.0
        %1539 = vmatpush1.msra.mxu0 0.0
        %1540 = vmatprep.subr.mxu0 0.0
        %1541 = vmatpush1.msra.mxu0 0.0
        %1542 = vmatprep.subr.mxu0 0.0
        %1543 = vmatpush1.msra.mxu0 0.0
        %1544 = vmatprep.subr.mxu0 0.0
        %1545 = vmatpush1.msra.mxu0 0.0
        %1546 = vmatprep.subr.mxu0 0.0
        %1547 = vmatpush1.msra.mxu0 0.0
        %1548 = vmatprep.subr.mxu0 0.0
        %1549 = vmatpush1.msra.mxu0 0.0
        %1550 = vmatprep.subr.mxu0 0.0
        %1551 = vmatpush1.msra.mxu0 0.0
        %1552 = vmatprep.subr.mxu0 0.0
        %1553 = vmatpush1.msra.mxu0 0.0
        %1554 = vmatprep.subr.mxu0 0.0
        %1555 = vmatpush1.msra.mxu0 0.0
        %1556 = vmatprep.subr.mxu0 0.0
        %1557 = vmatpush1.msra.mxu0 0.0
        %1558 = vmatprep.subr.mxu0 0.0
        %1559 = vmatpush1.msra.mxu0 0.0
        %1560 = vmatprep.subr.mxu0 0.0
        %1561 = vmatpush1.msra.mxu0 %v524
        %1562 = vmatprep.subr.mxu0 0.0
        %1563 = vmatpush1.msra.mxu0 %v523
        %1564 = vmatprep.subr.mxu0 0.0
        %1565 = vmatpush1.msra.mxu0 %v522
        %1566 = vmatprep.subr.mxu0 0.0
        %1567 = vmatpush1.msra.mxu0 %v521
        %1568 = vmatprep.subr.mxu0 0.0
        %1569 = vmatpush2.msra.mxu0 0.0
        %1570 = vmatprep.subr.mxu0 0.0
        %1571 = vmatpush2.msra.mxu0 0.0
        %1572 = vmatprep.subr.mxu0 0.0
        %1573 = vmatpush2.msra.mxu0 0.0
        %1574 = vmatprep.subr.mxu0 0.0
        %1575 = vmatpush2.msra.mxu0 0.0
        %1576 = vmatprep.subr.mxu0 0.0
        %1577 = vmatpush2.msra.mxu0 0.0
        %1578 = vmatprep.subr.mxu0 0.0
        %1579 = vmatpush2.msra.mxu0 0.0
        %1580 = vmatprep.subr.mxu0 0.0
        %1581 = vmatpush2.msra.mxu0 0.0
        %1582 = vmatprep.subr.mxu0 0.0
        %1583 = vmatpush2.msra.mxu0 0.0
        %1584 = vmatprep.subr.mxu0 0.0
        %1585 = vmatpush2.msra.mxu0 0.0
        %1586 = vmatprep.subr.mxu0 0.0
        %1587 = vmatpush2.msra.mxu0 0.0
        %1588 = vmatprep.subr.mxu0 0.0
        %1589 = vmatpush2.msra.mxu0 0.0
        %1590 = vmatprep.subr.mxu0 0.0
        %1591 = vmatpush2.msra.mxu0 0.0
        %1592 = vmatprep.subr.mxu0 0.0
        %1593 = vmatpush2.msra.mxu0 0.0
        %1594 = vmatprep.subr.mxu0 0.0
        %1595 = vmatpush2.msra.mxu0 0.0
        %1596 = vmatprep.subr.mxu0 0.0
        %1597 = vmatpush2.msra.mxu0 0.0
        %1598 = vmatprep.subr.mxu0 0.0
        %1599 = vmatpush2.msra.mxu0 0.0
        %1600 = vmatprep.mubr.f32.mxu0 0.0
        %1601 = vmatmul.mubr.f32.gmra.mxu0 %v735
        %v1602 = vpop.f32.mrf.mxu0
        %v1603 = vadd.f32 0.0, %v1602
        %v1604 = vpop.f32.mrf.mxu0
        %1605 = vdwg.mxu0
        %v1606 = vadd.f32 %v1535, %v1603
        %v1607 = vxor.u32 %v1606, 2147483648
        %v1608 = vmul.f32 %v1607, 1.442695
        %v1609 = vpow.pop %v1608
        %v1610 = vadd.f32 %v1609, 1.0
        %v1611 = vrcp.pop %v1610
        %v1612 = vmul.f32 1.0, %v1611
        %v1613 = vtanh.pop %v1606
        %v1614 = vmul.f32 %v1612, %v725
        %1616 = vrot.lane.b32.xlu0 %v1613, 64
        %v1617 = vpop.permute.xlu0 %1616
        %v1619 = vmul.f32 %v1612, %v1617
        %1621 = vrot.lane.b32.xlu0 %v1619, 32
        %v1622 = vpop.permute.xlu0 %1621
        %v1624 = vadd.f32 %v1614, %v1622
        %v1625 = vtanh.pop %v1624
        %1627 = vrot.lane.b32.xlu0 %v1625, 64
        %v1628 = vpop.permute.xlu0 %1627
        %v1630 = vmul.f32 %v1612, %v1628
        %1632 = vrot.lane.b32.xlu0 %v1630, 32
        %v1633 = vpop.permute.xlu0 %1632
        %v1634 = vsel %vm555, %v1633, 0
        %1636 = vmatprep.subr.mxu0 0.0
        %1637 = vmatpush1.msra.mxu0 0.0
        %1638 = vmatprep.subr.mxu0 0.0
        %1639 = vmatpush1.msra.mxu0 0.0
        %1640 = vmatprep.subr.mxu0 0.0
        %1641 = vmatpush1.msra.mxu0 0.0
        %1642 = vmatprep.subr.mxu0 0.0
        %1643 = vmatpush1.msra.mxu0 0.0
        %1644 = vmatprep.subr.mxu0 0.0
        %1645 = vmatpush1.msra.mxu0 0.0
        %1646 = vmatprep.subr.mxu0 0.0
        %1647 = vmatpush1.msra.mxu0 0.0
        %1648 = vmatprep.subr.mxu0 0.0
        %1649 = vmatpush1.msra.mxu0 0.0
        %1650 = vmatprep.subr.mxu0 0.0
        %1651 = vmatpush1.msra.mxu0 0.0
        %1652 = vmatprep.subr.mxu0 0.0
        %1653 = vmatpush1.msra.mxu0 0.0
        %1654 = vmatprep.subr.mxu0 0.0
        %1655 = vmatpush1.msra.mxu0 0.0
        %1656 = vmatprep.subr.mxu0 0.0
        %1657 = vmatpush1.msra.mxu0 0.0
        %1658 = vmatprep.subr.mxu0 0.0
        %1659 = vmatpush1.msra.mxu0 0.0
        %1660 = vmatprep.subr.mxu0 0.0
        %1661 = vmatpush1.msra.mxu0 %v528
        %1662 = vmatprep.subr.mxu0 0.0
        %1663 = vmatpush1.msra.mxu0 %v527
        %1664 = vmatprep.subr.mxu0 0.0
        %1665 = vmatpush1.msra.mxu0 %v526
        %1666 = vmatprep.subr.mxu0 0.0
        %1667 = vmatpush1.msra.mxu0 %v525
        %1668 = vmatprep.subr.mxu0 0.0
        %1669 = vmatpush2.msra.mxu0 0.0
        %1670 = vmatprep.subr.mxu0 0.0
        %1671 = vmatpush2.msra.mxu0 0.0
        %1672 = vmatprep.subr.mxu0 0.0
        %1673 = vmatpush2.msra.mxu0 0.0
        %1674 = vmatprep.subr.mxu0 0.0
        %1675 = vmatpush2.msra.mxu0 0.0
        %1676 = vmatprep.subr.mxu0 0.0
        %1677 = vmatpush2.msra.mxu0 0.0
        %1678 = vmatprep.subr.mxu0 0.0
        %1679 = vmatpush2.msra.mxu0 0.0
        %1680 = vmatprep.subr.mxu0 0.0
        %1681 = vmatpush2.msra.mxu0 0.0
        %1682 = vmatprep.subr.mxu0 0.0
        %1683 = vmatpush2.msra.mxu0 0.0
        %1684 = vmatprep.subr.mxu0 0.0
        %1685 = vmatpush2.msra.mxu0 0.0
        %1686 = vmatprep.subr.mxu0 0.0
        %1687 = vmatpush2.msra.mxu0 0.0
        %1688 = vmatprep.subr.mxu0 0.0
        %1689 = vmatpush2.msra.mxu0 0.0
        %1690 = vmatprep.subr.mxu0 0.0
        %1691 = vmatpush2.msra.mxu0 0.0
        %1692 = vmatprep.subr.mxu0 0.0
        %1693 = vmatpush2.msra.mxu0 0.0
        %1694 = vmatprep.subr.mxu0 0.0
        %1695 = vmatpush2.msra.mxu0 0.0
        %1696 = vmatprep.subr.mxu0 0.0
        %1697 = vmatpush2.msra.mxu0 0.0
        %1698 = vmatprep.subr.mxu0 0.0
        %1699 = vmatpush2.msra.mxu0 0.0
        %1700 = vmatprep.mubr.f32.mxu0 0.0
        %1701 = vmatmul.mubr.f32.gmra.mxu0 %v1634
        %v1702 = vpop.f32.mrf.mxu0
        %v1703 = vadd.f32 %v542, %v1702
        %v1704 = vpop.f32.mrf.mxu0
        %1705 = vdwg.mxu0
        %v1708 = vunpack.c.l.s4 1966171168
        %v1709 = vunpack.c.0.s8 %v1708
        %v1710 = vlaneseq
        %v1711 = vshrl.u32 %v1710, 7
        %v1712 = vsub.s32 %v1709, %v1711
        %v1713 = vrot.slane %v1703, %v1712
        %v1714 = vcombine.high %v1713, %v1713
        %v1716 = vunpack.c.l.s4 1966171168
        %v1717 = vunpack.c.0.s8 %v1716
        %v1718 = vlaneseq
        %v1719 = vshrl.u32 %v1718, 7
        %v1720 = vsub.s32 %v1717, %v1719
        %v1721 = vrot.slane %v1713, %v1720
        %v1723 = vunpack.c.l.s4 1966171168
        %v1724 = vunpack.c.0.s8 %v1723
        %v1725 = vlaneseq
        %v1726 = vshrl.u32 %v1725, 7
        %v1727 = vsub.s32 %v1724, %v1726
        %v1728 = vrot.slane %v1714, %v1727
        %v1729 = vcombine.high %v1721, %v1721
        %v1730 = vcombine.high %v1728, %v1728
        %v1731 = vlaneseq
        %v1732 = vshrl.u32 %v1731, 7
        %v1733 = vsub.s32 0, %v1732
        %v1734 = vrot.slane %v1721, %v1733
        %v1735 = vlaneseq
        %v1736 = vshrl.u32 %v1735, 7
        %v1737 = vsub.s32 0, %v1736
        %v1738 = vrot.slane %v1728, %v1737
        %v1739 = vlaneseq
        %v1740 = vshrl.u32 %v1739, 7
        %v1741 = vsub.s32 0, %v1740
        %v1742 = vrot.slane %v1729, %v1741
        %v1743 = vlaneseq
        %v1744 = vshrl.u32 %v1743, 7
        %v1745 = vsub.s32 0, %v1744
        %v1746 = vrot.slane %v1730, %v1745
        %v1751 = vmul.f32 %v508, %v1734
        %v1752 = vmul.f32 %v509, %v1734
        %v1753 = vmul.f32 %v510, %v1738
        %v1754 = vmul.f32 %v511, %v1738
        %v1755 = vmul.f32 %v512, %v1742
        %v1756 = vmul.f32 %v513, %v1742
        %v1757 = vmul.f32 %v514, %v1746
        %v1758 = vmul.f32 %v515, %v1746
        %v1759 = vsel %vm555, %v1751, 0.0
        %1760 = vadd.xlane.f32.xlu0 %v1759
        %v1761 = vpop.xlane.xlu0 %1760
        %v1762 = vsel %vm863, %v1752, 0.0
        %1763 = vadd.xlane.f32.xlu0 %v1762
        %v1764 = vpop.xlane.xlu0 %1763
        %v1765 = vsel %vm555, %v1753, 0.0
        %1766 = vadd.xlane.f32.xlu0 %v1765
        %v1767 = vpop.xlane.xlu0 %1766
        %v1768 = vsel %vm863, %v1754, 0.0
        %1769 = vadd.xlane.f32.xlu0 %v1768
        %v1770 = vpop.xlane.xlu0 %1769
        %v1771 = vsel %vm555, %v1755, 0.0
        %1772 = vadd.xlane.f32.xlu0 %v1771
        %v1773 = vpop.xlane.xlu0 %1772
        %v1774 = vsel %vm863, %v1756, 0.0
        %1775 = vadd.xlane.f32.xlu0 %v1774
        %v1776 = vpop.xlane.xlu0 %1775
        %v1777 = vsel %vm555, %v1757, 0.0
        %1778 = vadd.xlane.f32.xlu0 %v1777
        %v1779 = vpop.xlane.xlu0 %1778
        %v1780 = vsel %vm863, %v1758, 0.0
        %1781 = vadd.xlane.f32.xlu0 %v1780
        %v1782 = vpop.xlane.xlu0 %1781
        %v1783 = vadd.f32 %v1761, %v892
        %v1784 = vadd.f32 %v1764, %v896
        %v1785 = vadd.f32 %v1767, %v903
        %v1786 = vadd.f32 %v1770, %v907
        %v1787 = vadd.f32 %v1773, %v914
        %v1788 = vadd.f32 %v1776, %v918
        %v1789 = vadd.f32 %v1779, %v925
        %v1790 = vadd.f32 %v1782, %v929
        %1799 = vset.pattern.permute.xlu0 0
        %1800 = vperm.xlu0 %1799, %v1783
        %v1801 = vpop.permute.xlu0 %1800
        %1802 = vset.pattern.permute.xlu0 0
        %1803 = vperm.xlu0 %1802, %v1784
        %v1804 = vpop.permute.xlu0 %1803
        %1805 = vset.pattern.permute.xlu0 0
        %1806 = vperm.xlu0 %1805, %v1785
        %v1807 = vpop.permute.xlu0 %1806
        %1808 = vset.pattern.permute.xlu0 0
        %1809 = vperm.xlu0 %1808, %v1786
        %v1810 = vpop.permute.xlu0 %1809
        %1811 = vset.pattern.permute.xlu0 0
        %1812 = vperm.xlu0 %1811, %v1787
        %v1813 = vpop.permute.xlu0 %1812
        %1814 = vset.pattern.permute.xlu0 0
        %1815 = vperm.xlu0 %1814, %v1788
        %v1816 = vpop.permute.xlu0 %1815
        %1817 = vset.pattern.permute.xlu0 0
        %1818 = vperm.xlu0 %1817, %v1789
        %v1819 = vpop.permute.xlu0 %1818
        %1820 = vset.pattern.permute.xlu0 0
        %1821 = vperm.xlu0 %1820, %v1790
        %v1822 = vpop.permute.xlu0 %1821
        %v1823 = vlaneseq
        %v1824 = vshrl.u32 %v1823, 7
        %v1825 = vsub.s32 %v979, %v1824
        %v1826 = vrot.slane %v1801, %v1825
        %v1827 = vlaneseq
        %v1828 = vshrl.u32 %v1827, 7
        %v1829 = vsub.s32 %v984, %v1828
        %v1830 = vrot.slane %v1804, %v1829
        %v1831 = vsel %vm989, %v1830, %v1826
        %v1832 = vlaneseq
        %v1833 = vshrl.u32 %v1832, 7
        %v1834 = vsub.s32 %v979, %v1833
        %v1835 = vrot.slane %v1807, %v1834
        %v1836 = vlaneseq
        %v1837 = vshrl.u32 %v1836, 7
        %v1838 = vsub.s32 %v984, %v1837
        %v1839 = vrot.slane %v1810, %v1838
        %v1840 = vsel %vm989, %v1839, %v1835
        %v1841 = vlaneseq
        %v1842 = vshrl.u32 %v1841, 7
        %v1843 = vsub.s32 %v979, %v1842
        %v1844 = vrot.slane %v1813, %v1843
        %v1845 = vlaneseq
        %v1846 = vshrl.u32 %v1845, 7
        %v1847 = vsub.s32 %v984, %v1846
        %v1848 = vrot.slane %v1816, %v1847
        %v1849 = vsel %vm989, %v1848, %v1844
        %v1850 = vlaneseq
        %v1851 = vshrl.u32 %v1850, 7
        %v1852 = vsub.s32 %v979, %v1851
        %v1853 = vrot.slane %v1819, %v1852
        %v1854 = vlaneseq
        %v1855 = vshrl.u32 %v1854, 7
        %v1856 = vsub.s32 %v984, %v1855
        %v1857 = vrot.slane %v1822, %v1856
        %v1858 = vsel %vm989, %v1857, %v1853
        %v1859 = vsel %vm1018, %v1840, %v1831
        %v1860 = vsel %vm1020, %v1849, %v1859
        %v1861 = vsel %vm1022, %v1858, %v1860
        %v1863 = vsel %vm1025, %v1861, -inf
        %1864 = vmax.xlane.f32.xlu0 %v1863
        %v1865 = vpop.xlane.xlu0 %1864
        %v1867 = vlaneseq
        %v1868 = vshrl.u32 %v1867, 7
        %v1869 = vsub.s32 0, %v1868
        %v1870 = vrot.slane %v1865, %v1869
        %v1871 = vlaneseq
        %v1872 = vshrl.u32 %v1871, 7
        %v1873 = vsub.s32 1, %v1872
        %v1874 = vrot.slane %v1865, %v1873
        %v1875 = vlaneseq
        %v1876 = vshrl.u32 %v1875, 7
        %v1877 = vsub.s32 2, %v1876
        %v1878 = vrot.slane %v1865, %v1877
        %v1879 = vlaneseq
        %v1880 = vshrl.u32 %v1879, 7
        %v1881 = vsub.s32 3, %v1880
        %v1882 = vrot.slane %v1865, %v1881
        %v1887 = vsub.f32 %v1783, %v1870
        %v1888 = vsub.f32 %v1784, %v1870
        %v1889 = vsub.f32 %v1785, %v1874
        %v1890 = vsub.f32 %v1786, %v1874
        %v1891 = vsub.f32 %v1787, %v1878
        %v1892 = vsub.f32 %v1788, %v1878
        %v1893 = vsub.f32 %v1789, %v1882
        %v1894 = vsub.f32 %v1790, %v1882
        %v1895 = vmul.f32 %v1887, 1.442695
        %v1896 = vpow.pop %v1895
        %v1897 = vmul.f32 %v1888, 1.442695
        %v1898 = vpow.pop %v1897
        %v1899 = vmul.f32 %v1889, 1.442695
        %v1900 = vpow.pop %v1899
        %v1901 = vmul.f32 %v1890, 1.442695
        %v1902 = vpow.pop %v1901
        %v1903 = vmul.f32 %v1891, 1.442695
        %v1904 = vpow.pop %v1903
        %v1905 = vmul.f32 %v1892, 1.442695
        %v1906 = vpow.pop %v1905
        %v1907 = vmul.f32 %v1893, 1.442695
        %v1908 = vpow.pop %v1907
        %v1909 = vmul.f32 %v1894, 1.442695
        %v1910 = vpow.pop %v1909
        %1919 = vset.pattern.permute.xlu0 0
        %1920 = vperm.xlu0 %1919, %v1896
        %v1921 = vpop.permute.xlu0 %1920
        %1922 = vset.pattern.permute.xlu0 0
        %1923 = vperm.xlu0 %1922, %v1898
        %v1924 = vpop.permute.xlu0 %1923
        %1925 = vset.pattern.permute.xlu0 0
        %1926 = vperm.xlu0 %1925, %v1900
        %v1927 = vpop.permute.xlu0 %1926
        %1928 = vset.pattern.permute.xlu0 0
        %1929 = vperm.xlu0 %1928, %v1902
        %v1930 = vpop.permute.xlu0 %1929
        %1931 = vset.pattern.permute.xlu0 0
        %1932 = vperm.xlu0 %1931, %v1904
        %v1933 = vpop.permute.xlu0 %1932
        %1934 = vset.pattern.permute.xlu0 0
        %1935 = vperm.xlu0 %1934, %v1906
        %v1936 = vpop.permute.xlu0 %1935
        %1937 = vset.pattern.permute.xlu0 0
        %1938 = vperm.xlu0 %1937, %v1908
        %v1939 = vpop.permute.xlu0 %1938
        %1940 = vset.pattern.permute.xlu0 0
        %1941 = vperm.xlu0 %1940, %v1910
        %v1942 = vpop.permute.xlu0 %1941
        %v1943 = vlaneseq
        %v1944 = vshrl.u32 %v1943, 7
        %v1945 = vsub.s32 %v979, %v1944
        %v1946 = vrot.slane %v1921, %v1945
        %v1947 = vlaneseq
        %v1948 = vshrl.u32 %v1947, 7
        %v1949 = vsub.s32 %v984, %v1948
        %v1950 = vrot.slane %v1924, %v1949
        %v1951 = vsel %vm989, %v1950, %v1946
        %v1952 = vlaneseq
        %v1953 = vshrl.u32 %v1952, 7
        %v1954 = vsub.s32 %v979, %v1953
        %v1955 = vrot.slane %v1927, %v1954
        %v1956 = vlaneseq
        %v1957 = vshrl.u32 %v1956, 7
        %v1958 = vsub.s32 %v984, %v1957
        %v1959 = vrot.slane %v1930, %v1958
        %v1960 = vsel %vm989, %v1959, %v1955
        %v1961 = vlaneseq
        %v1962 = vshrl.u32 %v1961, 7
        %v1963 = vsub.s32 %v979, %v1962
        %v1964 = vrot.slane %v1933, %v1963
        %v1965 = vlaneseq
        %v1966 = vshrl.u32 %v1965, 7
        %v1967 = vsub.s32 %v984, %v1966
        %v1968 = vrot.slane %v1936, %v1967
        %v1969 = vsel %vm989, %v1968, %v1964
        %v1970 = vlaneseq
        %v1971 = vshrl.u32 %v1970, 7
        %v1972 = vsub.s32 %v979, %v1971
        %v1973 = vrot.slane %v1939, %v1972
        %v1974 = vlaneseq
        %v1975 = vshrl.u32 %v1974, 7
        %v1976 = vsub.s32 %v984, %v1975
        %v1977 = vrot.slane %v1942, %v1976
        %v1978 = vsel %vm989, %v1977, %v1973
        %v1979 = vsel %vm1018, %v1960, %v1951
        %v1980 = vsel %vm1020, %v1969, %v1979
        %v1981 = vsel %vm1022, %v1978, %v1980
        %v1983 = vsel %vm1025, %v1981, 0.0
        %1984 = vadd.xlane.f32.xlu0 %v1983
        %v1985 = vpop.xlane.xlu0 %1984
        %v1987 = vlaneseq
        %v1988 = vshrl.u32 %v1987, 7
        %v1989 = vsub.s32 0, %v1988
        %v1990 = vrot.slane %v1985, %v1989
        %v1991 = vlaneseq
        %v1992 = vshrl.u32 %v1991, 7
        %v1993 = vsub.s32 1, %v1992
        %v1994 = vrot.slane %v1985, %v1993
        %v1995 = vlaneseq
        %v1996 = vshrl.u32 %v1995, 7
        %v1997 = vsub.s32 2, %v1996
        %v1998 = vrot.slane %v1985, %v1997
        %v1999 = vlaneseq
        %v2000 = vshrl.u32 %v1999, 7
        %v2001 = vsub.s32 3, %v2000
        %v2002 = vrot.slane %v1985, %v2001
        %v2007 = vrcp.pop %v1990
        %v2008 = vmul.f32 %v1896, %v2007
        %v2009 = vmul.f32 %v1898, %v2007
        %v2010 = vrcp.pop %v1994
        %v2011 = vmul.f32 %v1900, %v2010
        %v2012 = vmul.f32 %v1902, %v2010
        %v2013 = vrcp.pop %v1998
        %v2014 = vmul.f32 %v1904, %v2013
        %v2015 = vmul.f32 %v1906, %v2013
        %v2016 = vrcp.pop %v2002
        %v2017 = vmul.f32 %v1908, %v2016
        %v2018 = vmul.f32 %v1910, %v2016
        %2020 = vset.pattern.permute.xlu0 0
        %2021 = vperm.xlu0 %2020, %v2008
        %v2022 = vpop.permute.xlu0 %2021
        %2025 = vset.pattern.permute.xlu0 0
        %2026 = vperm.xlu0 %2025, %v2009
        %v2027 = vpop.permute.xlu0 %2026
        %2030 = vset.pattern.permute.xlu0 0
        %2031 = vperm.xlu0 %2030, %v2011
        %v2032 = vpop.permute.xlu0 %2031
        %2035 = vset.pattern.permute.xlu0 0
        %2036 = vperm.xlu0 %2035, %v2012
        %v2037 = vpop.permute.xlu0 %2036
        %2040 = vset.pattern.permute.xlu0 0
        %2041 = vperm.xlu0 %2040, %v2014
        %v2042 = vpop.permute.xlu0 %2041
        %2045 = vset.pattern.permute.xlu0 0
        %2046 = vperm.xlu0 %2045, %v2015
        %v2047 = vpop.permute.xlu0 %2046
        %2050 = vset.pattern.permute.xlu0 0
        %2051 = vperm.xlu0 %2050, %v2017
        %v2052 = vpop.permute.xlu0 %2051
        %2055 = vset.pattern.permute.xlu0 0
        %2056 = vperm.xlu0 %2055, %v2018
        %v2057 = vpop.permute.xlu0 %2056
        %v2059 = vmul.f32 %v2022, %v508
        %v2060 = vmul.f32 %v2027, %v509
        %v2061 = vmul.f32 %v2032, %v510
        %v2062 = vmul.f32 %v2037, %v511
        %v2063 = vmul.f32 %v2042, %v512
        %v2064 = vmul.f32 %v2047, %v513
        %v2065 = vmul.f32 %v2052, %v514
        %v2066 = vmul.f32 %v2057, %v515
        %v2067 = vsel %vm555, %v2059, 0.0
        %v2068 = vsel %vm863, %v2060, 0.0
        %v2069 = vadd.f32 %v2067, %v2068
        %v2070 = vrot.slane %v2069, 4
        %v2071 = vadd.f32 %v2069, %v2070
        %v2072 = vrot.slane %v2071, 2
        %v2073 = vadd.f32 %v2071, %v2072
        %v2074 = vrot.slane %v2073, 1
        %v2075 = vadd.f32 %v2073, %v2074
        %v2076 = vsel %vm555, %v2061, 0.0
        %v2077 = vsel %vm863, %v2062, 0.0
        %v2078 = vadd.f32 %v2076, %v2077
        %v2079 = vrot.slane %v2078, 4
        %v2080 = vadd.f32 %v2078, %v2079
        %v2081 = vrot.slane %v2080, 2
        %v2082 = vadd.f32 %v2080, %v2081
        %v2083 = vrot.slane %v2082, 1
        %v2084 = vadd.f32 %v2082, %v2083
        %v2085 = vsel %vm555, %v2063, 0.0
        %v2086 = vsel %vm863, %v2064, 0.0
        %v2087 = vadd.f32 %v2085, %v2086
        %v2088 = vrot.slane %v2087, 4
        %v2089 = vadd.f32 %v2087, %v2088
        %v2090 = vrot.slane %v2089, 2
        %v2091 = vadd.f32 %v2089, %v2090
        %v2092 = vrot.slane %v2091, 1
        %v2093 = vadd.f32 %v2091, %v2092
        %v2094 = vsel %vm555, %v2065, 0.0
        %v2095 = vsel %vm863, %v2066, 0.0
        %v2096 = vadd.f32 %v2094, %v2095
        %v2097 = vrot.slane %v2096, 4
        %v2098 = vadd.f32 %v2096, %v2097
        %v2099 = vrot.slane %v2098, 2
        %v2100 = vadd.f32 %v2098, %v2099
        %v2101 = vrot.slane %v2100, 1
        %v2102 = vadd.f32 %v2100, %v2101
        %2103 = vmatprep.subr.mxu0 0.0
        %2104 = vmatpush1.msra.mxu0 0.0
        %2105 = vmatprep.subr.mxu0 0.0
        %2106 = vmatpush1.msra.mxu0 0.0
        %2107 = vmatprep.subr.mxu0 0.0
        %2108 = vmatpush1.msra.mxu0 0.0
        %2109 = vmatprep.subr.mxu0 0.0
        %2110 = vmatpush1.msra.mxu0 0.0
        %2111 = vmatprep.subr.mxu0 0.0
        %2112 = vmatpush1.msra.mxu0 0.0
        %2113 = vmatprep.subr.mxu0 0.0
        %2114 = vmatpush1.msra.mxu0 0.0
        %2115 = vmatprep.subr.mxu0 0.0
        %2116 = vmatpush1.msra.mxu0 0.0
        %2117 = vmatprep.subr.mxu0 0.0
        %2118 = vmatpush1.msra.mxu0 0.0
        %2119 = vmatprep.subr.mxu0 0.0
        %2120 = vmatpush1.msra.mxu0 0.0
        %2121 = vmatprep.subr.mxu0 0.0
        %2122 = vmatpush1.msra.mxu0 0.0
        %2123 = vmatprep.subr.mxu0 0.0
        %2124 = vmatpush1.msra.mxu0 0.0
        %2125 = vmatprep.subr.mxu0 0.0
        %2126 = vmatpush1.msra.mxu0 0.0
        %2127 = vmatprep.subr.mxu0 0.0
        %2128 = vmatpush1.msra.mxu0 %v536
        %2129 = vmatprep.subr.mxu0 0.0
        %2130 = vmatpush1.msra.mxu0 %v535
        %2131 = vmatprep.subr.mxu0 0.0
        %2132 = vmatpush1.msra.mxu0 %v534
        %2133 = vmatprep.subr.mxu0 0.0
        %2134 = vmatpush1.msra.mxu0 %v533
        %2135 = vmatprep.subr.mxu0 0.0
        %2136 = vmatpush2.msra.mxu0 0.0
        %2137 = vmatprep.subr.mxu0 0.0
        %2138 = vmatpush2.msra.mxu0 0.0
        %2139 = vmatprep.subr.mxu0 0.0
        %2140 = vmatpush2.msra.mxu0 0.0
        %2141 = vmatprep.subr.mxu0 0.0
        %2142 = vmatpush2.msra.mxu0 0.0
        %2143 = vmatprep.subr.mxu0 0.0
        %2144 = vmatpush2.msra.mxu0 0.0
        %2145 = vmatprep.subr.mxu0 0.0
        %2146 = vmatpush2.msra.mxu0 0.0
        %2147 = vmatprep.subr.mxu0 0.0
        %2148 = vmatpush2.msra.mxu0 0.0
        %2149 = vmatprep.subr.mxu0 0.0
        %2150 = vmatpush2.msra.mxu0 0.0
        %2151 = vmatprep.subr.mxu0 0.0
        %2152 = vmatpush2.msra.mxu0 0.0
        %2153 = vmatprep.subr.mxu0 0.0
        %2154 = vmatpush2.msra.mxu0 0.0
        %2155 = vmatprep.subr.mxu0 0.0
        %2156 = vmatpush2.msra.mxu0 0.0
        %2157 = vmatprep.subr.mxu0 0.0
        %2158 = vmatpush2.msra.mxu0 0.0
        %2159 = vmatprep.subr.mxu0 0.0
        %2160 = vmatpush2.msra.mxu0 0.0
        %2161 = vmatprep.subr.mxu0 0.0
        %2162 = vmatpush2.msra.mxu0 0.0
        %2163 = vmatprep.subr.mxu0 0.0
        %2164 = vmatpush2.msra.mxu0 0.0
        %2165 = vmatprep.subr.mxu0 0.0
        %2166 = vmatpush2.msra.mxu0 0.0
        %2167 = vmatprep.mubr.f32.mxu0 0.0
        %2168 = vmatmul.mubr.f32.gmra.mxu0 %v1634
        %v2169 = vpop.f32.mrf.mxu0
        %v2170 = vadd.f32 0.0, %v2169
        %v2171 = vpop.f32.mrf.mxu0
        %2172 = vdwg.mxu0
        %v2177 = vsel %vm1018, %v2084, %v2075
        %v2178 = vsel %vm1020, %v2093, %v2177
        %v2179 = vsel %vm1022, %v2102, %v2178
        %v2180 = vsel %vm555, %v2179, 0
        %2182 = vmatprep.subr.mxu0 0.0
        %2183 = vmatpush1.msra.mxu0 0.0
        %2184 = vmatprep.subr.mxu0 0.0
        %2185 = vmatpush1.msra.mxu0 0.0
        %2186 = vmatprep.subr.mxu0 0.0
        %2187 = vmatpush1.msra.mxu0 0.0
        %2188 = vmatprep.subr.mxu0 0.0
        %2189 = vmatpush1.msra.mxu0 0.0
        %2190 = vmatprep.subr.mxu0 0.0
        %2191 = vmatpush1.msra.mxu0 0.0
        %2192 = vmatprep.subr.mxu0 0.0
        %2193 = vmatpush1.msra.mxu0 0.0
        %2194 = vmatprep.subr.mxu0 0.0
        %2195 = vmatpush1.msra.mxu0 0.0
        %2196 = vmatprep.subr.mxu0 0.0
        %2197 = vmatpush1.msra.mxu0 0.0
        %2198 = vmatprep.subr.mxu0 0.0
        %2199 = vmatpush1.msra.mxu0 0.0
        %2200 = vmatprep.subr.mxu0 0.0
        %2201 = vmatpush1.msra.mxu0 0.0
        %2202 = vmatprep.subr.mxu0 0.0
        %2203 = vmatpush1.msra.mxu0 0.0
        %2204 = vmatprep.subr.mxu0 0.0
        %2205 = vmatpush1.msra.mxu0 0.0
        %2206 = vmatprep.subr.mxu0 0.0
        %2207 = vmatpush1.msra.mxu0 %v532
        %2208 = vmatprep.subr.mxu0 0.0
        %2209 = vmatpush1.msra.mxu0 %v531
        %2210 = vmatprep.subr.mxu0 0.0
        %2211 = vmatpush1.msra.mxu0 %v530
        %2212 = vmatprep.subr.mxu0 0.0
        %2213 = vmatpush1.msra.mxu0 %v529
        %2214 = vmatprep.subr.mxu0 0.0
        %2215 = vmatpush2.msra.mxu0 0.0
        %2216 = vmatprep.subr.mxu0 0.0
        %2217 = vmatpush2.msra.mxu0 0.0
        %2218 = vmatprep.subr.mxu0 0.0
        %2219 = vmatpush2.msra.mxu0 0.0
        %2220 = vmatprep.subr.mxu0 0.0
        %2221 = vmatpush2.msra.mxu0 0.0
        %2222 = vmatprep.subr.mxu0 0.0
        %2223 = vmatpush2.msra.mxu0 0.0
        %2224 = vmatprep.subr.mxu0 0.0
        %2225 = vmatpush2.msra.mxu0 0.0
        %2226 = vmatprep.subr.mxu0 0.0
        %2227 = vmatpush2.msra.mxu0 0.0
        %2228 = vmatprep.subr.mxu0 0.0
        %2229 = vmatpush2.msra.mxu0 0.0
        %2230 = vmatprep.subr.mxu0 0.0
        %2231 = vmatpush2.msra.mxu0 0.0
        %2232 = vmatprep.subr.mxu0 0.0
        %2233 = vmatpush2.msra.mxu0 0.0
        %2234 = vmatprep.subr.mxu0 0.0
        %2235 = vmatpush2.msra.mxu0 0.0
        %2236 = vmatprep.subr.mxu0 0.0
        %2237 = vmatpush2.msra.mxu0 0.0
        %2238 = vmatprep.subr.mxu0 0.0
        %2239 = vmatpush2.msra.mxu0 0.0
        %2240 = vmatprep.subr.mxu0 0.0
        %2241 = vmatpush2.msra.mxu0 0.0
        %2242 = vmatprep.subr.mxu0 0.0
        %2243 = vmatpush2.msra.mxu0 0.0
        %2244 = vmatprep.subr.mxu0 0.0
        %2245 = vmatpush2.msra.mxu0 0.0
        %2246 = vmatprep.mubr.f32.mxu0 0.0
        %2247 = vmatmul.mubr.f32.gmra.mxu0 %v2180
        %v2248 = vpop.f32.mrf.mxu0
        %v2249 = vadd.f32 %v2170, %v2248
        %v2250 = vpop.f32.mrf.mxu0
        %2251 = vdwg.mxu0
        %v2252 = vadd.f32 %v2249, %v549
        %v2253 = vtanh.pop %v2252
        %s2254 = scalar_lea.vmem %s482, 4 [#allocation11]
        %2255 = vst.msk [vmem:[%s2254] sm:$0xf] %vm1417, %v2253
        %v2256 = vlaneseq
        %v2257 = vshrl.u32 %v2256, 7
        %v2258 = vsub.s32 %v979, %v2257
        %v2259 = vrot.slane %v2022, %v2258
        %v2260 = vlaneseq
        %v2261 = vshrl.u32 %v2260, 7
        %v2262 = vsub.s32 %v984, %v2261
        %v2263 = vrot.slane %v2027, %v2262
        %v2264 = vsel %vm989, %v2263, %v2259
        %v2265 = vlaneseq
        %v2266 = vshrl.u32 %v2265, 7
        %v2267 = vsub.s32 %v979, %v2266
        %v2268 = vrot.slane %v2032, %v2267
        %v2269 = vlaneseq
        %v2270 = vshrl.u32 %v2269, 7
        %v2271 = vsub.s32 %v984, %v2270
        %v2272 = vrot.slane %v2037, %v2271
        %v2273 = vsel %vm989, %v2272, %v2268
        %v2274 = vlaneseq
        %v2275 = vshrl.u32 %v2274, 7
        %v2276 = vsub.s32 %v979, %v2275
        %v2277 = vrot.slane %v2042, %v2276
        %v2278 = vlaneseq
        %v2279 = vshrl.u32 %v2278, 7
        %v2280 = vsub.s32 %v984, %v2279
        %v2281 = vrot.slane %v2047, %v2280
        %v2282 = vsel %vm989, %v2281, %v2277
        %v2283 = vlaneseq
        %v2284 = vshrl.u32 %v2283, 7
        %v2285 = vsub.s32 %v979, %v2284
        %v2286 = vrot.slane %v2052, %v2285
        %v2287 = vlaneseq
        %v2288 = vshrl.u32 %v2287, 7
        %v2289 = vsub.s32 %v984, %v2288
        %v2290 = vrot.slane %v2057, %v2289
        %v2291 = vsel %vm989, %v2290, %v2286
        %v2292 = vsel %vm1018, %v2273, %v2264
        %v2293 = vsel %vm1020, %v2282, %v2292
        %v2294 = vsel %vm1022, %v2291, %v2293
        %s2296 = scalar_lea.vmem %s489, 4 [#allocation12]
        %2297 = vst.msk [vmem:[%s2296] sm:$0xf] %vm1025, %v2294
        %s2298 = scalar_lea.vmem %s494, 8
        %v2299 = vld [vmem:[%s2298] sm:$0xf]
        %v2301 = vsel %vm555, %v2253, 0
        %2303 = vmatprep.subr.mxu0 0.0
        %2304 = vmatpush1.msra.mxu0 0.0
        %2305 = vmatprep.subr.mxu0 0.0
        %2306 = vmatpush1.msra.mxu0 0.0
        %2307 = vmatprep.subr.mxu0 0.0
        %2308 = vmatpush1.msra.mxu0 0.0
        %2309 = vmatprep.subr.mxu0 0.0
        %2310 = vmatpush1.msra.mxu0 0.0
        %2311 = vmatprep.subr.mxu0 0.0
        %2312 = vmatpush1.msra.mxu0 0.0
        %2313 = vmatprep.subr.mxu0 0.0
        %2314 = vmatpush1.msra.mxu0 0.0
        %2315 = vmatprep.subr.mxu0 0.0
        %2316 = vmatpush1.msra.mxu0 0.0
        %2317 = vmatprep.subr.mxu0 0.0
        %2318 = vmatpush1.msra.mxu0 0.0
        %2319 = vmatprep.subr.mxu0 0.0
        %2320 = vmatpush1.msra.mxu0 0.0
        %2321 = vmatprep.subr.mxu0 0.0
        %2322 = vmatpush1.msra.mxu0 0.0
        %2323 = vmatprep.subr.mxu0 0.0
        %2324 = vmatpush1.msra.mxu0 0.0
        %2325 = vmatprep.subr.mxu0 0.0
        %2326 = vmatpush1.msra.mxu0 0.0
        %2327 = vmatprep.subr.mxu0 0.0
        %2328 = vmatpush1.msra.mxu0 %v520
        %2329 = vmatprep.subr.mxu0 0.0
        %2330 = vmatpush1.msra.mxu0 %v519
        %2331 = vmatprep.subr.mxu0 0.0
        %2332 = vmatpush1.msra.mxu0 %v518
        %2333 = vmatprep.subr.mxu0 0.0
        %2334 = vmatpush1.msra.mxu0 %v517
        %2335 = vmatprep.subr.mxu0 0.0
        %2336 = vmatpush2.msra.mxu0 0.0
        %2337 = vmatprep.subr.mxu0 0.0
        %2338 = vmatpush2.msra.mxu0 0.0
        %2339 = vmatprep.subr.mxu0 0.0
        %2340 = vmatpush2.msra.mxu0 0.0
        %2341 = vmatprep.subr.mxu0 0.0
        %2342 = vmatpush2.msra.mxu0 0.0
        %2343 = vmatprep.subr.mxu0 0.0
        %2344 = vmatpush2.msra.mxu0 0.0
        %2345 = vmatprep.subr.mxu0 0.0
        %2346 = vmatpush2.msra.mxu0 0.0
        %2347 = vmatprep.subr.mxu0 0.0
        %2348 = vmatpush2.msra.mxu0 0.0
        %2349 = vmatprep.subr.mxu0 0.0
        %2350 = vmatpush2.msra.mxu0 0.0
        %2351 = vmatprep.subr.mxu0 0.0
        %2352 = vmatpush2.msra.mxu0 0.0
        %2353 = vmatprep.subr.mxu0 0.0
        %2354 = vmatpush2.msra.mxu0 0.0
        %2355 = vmatprep.subr.mxu0 0.0
        %2356 = vmatpush2.msra.mxu0 0.0
        %2357 = vmatprep.subr.mxu0 0.0
        %2358 = vmatpush2.msra.mxu0 0.0
        %2359 = vmatprep.subr.mxu0 0.0
        %2360 = vmatpush2.msra.mxu0 0.0
        %2361 = vmatprep.subr.mxu0 0.0
        %2362 = vmatpush2.msra.mxu0 0.0
        %2363 = vmatprep.subr.mxu0 0.0
        %2364 = vmatpush2.msra.mxu0 0.0
        %2365 = vmatprep.subr.mxu0 0.0
        %2366 = vmatpush2.msra.mxu0 0.0
        %2367 = vmatprep.mubr.f32.mxu0 0.0
        %2368 = vmatmul.mubr.f32.gmra.mxu0 %v2301
        %v2369 = vpop.f32.mrf.mxu0
        %v2370 = vadd.f32 0.0, %v2369
        %v2371 = vpop.f32.mrf.mxu0
        %2372 = vdwg.mxu0
        %v2373 = vadd.f32 %v2299, %v2370
        %2374 = vmatprep.subr.mxu0 0.0
        %2375 = vmatpush1.msra.mxu0 0.0
        %2376 = vmatprep.subr.mxu0 0.0
        %2377 = vmatpush1.msra.mxu0 0.0
        %2378 = vmatprep.subr.mxu0 0.0
        %2379 = vmatpush1.msra.mxu0 0.0
        %2380 = vmatprep.subr.mxu0 0.0
        %2381 = vmatpush1.msra.mxu0 0.0
        %2382 = vmatprep.subr.mxu0 0.0
        %2383 = vmatpush1.msra.mxu0 0.0
        %2384 = vmatprep.subr.mxu0 0.0
        %2385 = vmatpush1.msra.mxu0 0.0
        %2386 = vmatprep.subr.mxu0 0.0
        %2387 = vmatpush1.msra.mxu0 0.0
        %2388 = vmatprep.subr.mxu0 0.0
        %2389 = vmatpush1.msra.mxu0 0.0
        %2390 = vmatprep.subr.mxu0 0.0
        %2391 = vmatpush1.msra.mxu0 0.0
        %2392 = vmatprep.subr.mxu0 0.0
        %2393 = vmatpush1.msra.mxu0 0.0
        %2394 = vmatprep.subr.mxu0 0.0
        %2395 = vmatpush1.msra.mxu0 0.0
        %2396 = vmatprep.subr.mxu0 0.0
        %2397 = vmatpush1.msra.mxu0 0.0
        %2398 = vmatprep.subr.mxu0 0.0
        %2399 = vmatpush1.msra.mxu0 %v524
        %2400 = vmatprep.subr.mxu0 0.0
        %2401 = vmatpush1.msra.mxu0 %v523
        %2402 = vmatprep.subr.mxu0 0.0
        %2403 = vmatpush1.msra.mxu0 %v522
        %2404 = vmatprep.subr.mxu0 0.0
        %2405 = vmatpush1.msra.mxu0 %v521
        %2406 = vmatprep.subr.mxu0 0.0
        %2407 = vmatpush2.msra.mxu0 0.0
        %2408 = vmatprep.subr.mxu0 0.0
        %2409 = vmatpush2.msra.mxu0 0.0
        %2410 = vmatprep.subr.mxu0 0.0
        %2411 = vmatpush2.msra.mxu0 0.0
        %2412 = vmatprep.subr.mxu0 0.0
        %2413 = vmatpush2.msra.mxu0 0.0
        %2414 = vmatprep.subr.mxu0 0.0
        %2415 = vmatpush2.msra.mxu0 0.0
        %2416 = vmatprep.subr.mxu0 0.0
        %2417 = vmatpush2.msra.mxu0 0.0
        %2418 = vmatprep.subr.mxu0 0.0
        %2419 = vmatpush2.msra.mxu0 0.0
        %2420 = vmatprep.subr.mxu0 0.0
        %2421 = vmatpush2.msra.mxu0 0.0
        %2422 = vmatprep.subr.mxu0 0.0
        %2423 = vmatpush2.msra.mxu0 0.0
        %2424 = vmatprep.subr.mxu0 0.0
        %2425 = vmatpush2.msra.mxu0 0.0
        %2426 = vmatprep.subr.mxu0 0.0
        %2427 = vmatpush2.msra.mxu0 0.0
        %2428 = vmatprep.subr.mxu0 0.0
        %2429 = vmatpush2.msra.mxu0 0.0
        %2430 = vmatprep.subr.mxu0 0.0
        %2431 = vmatpush2.msra.mxu0 0.0
        %2432 = vmatprep.subr.mxu0 0.0
        %2433 = vmatpush2.msra.mxu0 0.0
        %2434 = vmatprep.subr.mxu0 0.0
        %2435 = vmatpush2.msra.mxu0 0.0
        %2436 = vmatprep.subr.mxu0 0.0
        %2437 = vmatpush2.msra.mxu0 0.0
        %2438 = vmatprep.mubr.f32.mxu0 0.0
        %2439 = vmatmul.mubr.f32.gmra.mxu0 %v1634
        %v2440 = vpop.f32.mrf.mxu0
        %v2441 = vadd.f32 0.0, %v2440
        %v2442 = vpop.f32.mrf.mxu0
        %2443 = vdwg.mxu0
        %v2444 = vadd.f32 %v2373, %v2441
        %v2445 = vxor.u32 %v2444, 2147483648
        %v2446 = vmul.f32 %v2445, 1.442695
        %v2447 = vpow.pop %v2446
        %v2448 = vadd.f32 %v2447, 1.0
        %v2449 = vrcp.pop %v2448
        %v2450 = vmul.f32 1.0, %v2449
        %v2451 = vtanh.pop %v2444
        %v2452 = vmul.f32 %v2450, %v1624
        %2454 = vrot.lane.b32.xlu0 %v2451, 64
        %v2455 = vpop.permute.xlu0 %2454
        %v2457 = vmul.f32 %v2450, %v2455
        %2459 = vrot.lane.b32.xlu0 %v2457, 32
        %v2460 = vpop.permute.xlu0 %2459
        %v2462 = vadd.f32 %v2452, %v2460
        %v2463 = vtanh.pop %v2462
        %2465 = vrot.lane.b32.xlu0 %v2463, 64
        %v2466 = vpop.permute.xlu0 %2465
        %v2468 = vmul.f32 %v2450, %v2466
        %2470 = vrot.lane.b32.xlu0 %v2468, 32
        %v2471 = vpop.permute.xlu0 %2470
        %v2472 = vsel %vm555, %v2471, 0
        %2474 = vmatprep.subr.mxu0 0.0
        %2475 = vmatpush1.msra.mxu0 0.0
        %2476 = vmatprep.subr.mxu0 0.0
        %2477 = vmatpush1.msra.mxu0 0.0
        %2478 = vmatprep.subr.mxu0 0.0
        %2479 = vmatpush1.msra.mxu0 0.0
        %2480 = vmatprep.subr.mxu0 0.0
        %2481 = vmatpush1.msra.mxu0 0.0
        %2482 = vmatprep.subr.mxu0 0.0
        %2483 = vmatpush1.msra.mxu0 0.0
        %2484 = vmatprep.subr.mxu0 0.0
        %2485 = vmatpush1.msra.mxu0 0.0
        %2486 = vmatprep.subr.mxu0 0.0
        %2487 = vmatpush1.msra.mxu0 0.0
        %2488 = vmatprep.subr.mxu0 0.0
        %2489 = vmatpush1.msra.mxu0 0.0
        %2490 = vmatprep.subr.mxu0 0.0
        %2491 = vmatpush1.msra.mxu0 0.0
        %2492 = vmatprep.subr.mxu0 0.0
        %2493 = vmatpush1.msra.mxu0 0.0
        %2494 = vmatprep.subr.mxu0 0.0
        %2495 = vmatpush1.msra.mxu0 0.0
        %2496 = vmatprep.subr.mxu0 0.0
        %2497 = vmatpush1.msra.mxu0 0.0
        %2498 = vmatprep.subr.mxu0 0.0
        %2499 = vmatpush1.msra.mxu0 %v528
        %2500 = vmatprep.subr.mxu0 0.0
        %2501 = vmatpush1.msra.mxu0 %v527
        %2502 = vmatprep.subr.mxu0 0.0
        %2503 = vmatpush1.msra.mxu0 %v526
        %2504 = vmatprep.subr.mxu0 0.0
        %2505 = vmatpush1.msra.mxu0 %v525
        %2506 = vmatprep.subr.mxu0 0.0
        %2507 = vmatpush2.msra.mxu0 0.0
        %2508 = vmatprep.subr.mxu0 0.0
        %2509 = vmatpush2.msra.mxu0 0.0
        %2510 = vmatprep.subr.mxu0 0.0
        %2511 = vmatpush2.msra.mxu0 0.0
        %2512 = vmatprep.subr.mxu0 0.0
        %2513 = vmatpush2.msra.mxu0 0.0
        %2514 = vmatprep.subr.mxu0 0.0
        %2515 = vmatpush2.msra.mxu0 0.0
        %2516 = vmatprep.subr.mxu0 0.0
        %2517 = vmatpush2.msra.mxu0 0.0
        %2518 = vmatprep.subr.mxu0 0.0
        %2519 = vmatpush2.msra.mxu0 0.0
        %2520 = vmatprep.subr.mxu0 0.0
        %2521 = vmatpush2.msra.mxu0 0.0
        %2522 = vmatprep.subr.mxu0 0.0
        %2523 = vmatpush2.msra.mxu0 0.0
        %2524 = vmatprep.subr.mxu0 0.0
        %2525 = vmatpush2.msra.mxu0 0.0
        %2526 = vmatprep.subr.mxu0 0.0
        %2527 = vmatpush2.msra.mxu0 0.0
        %2528 = vmatprep.subr.mxu0 0.0
        %2529 = vmatpush2.msra.mxu0 0.0
        %2530 = vmatprep.subr.mxu0 0.0
        %2531 = vmatpush2.msra.mxu0 0.0
        %2532 = vmatprep.subr.mxu0 0.0
        %2533 = vmatpush2.msra.mxu0 0.0
        %2534 = vmatprep.subr.mxu0 0.0
        %2535 = vmatpush2.msra.mxu0 0.0
        %2536 = vmatprep.subr.mxu0 0.0
        %2537 = vmatpush2.msra.mxu0 0.0
        %2538 = vmatprep.mubr.f32.mxu0 0.0
        %2539 = vmatmul.mubr.f32.gmra.mxu0 %v2472
        %v2540 = vpop.f32.mrf.mxu0
        %v2541 = vadd.f32 %v542, %v2540
        %v2542 = vpop.f32.mrf.mxu0
        %2543 = vdwg.mxu0
        %v2546 = vunpack.c.l.s4 1966171168
        %v2547 = vunpack.c.0.s8 %v2546
        %v2548 = vlaneseq
        %v2549 = vshrl.u32 %v2548, 7
        %v2550 = vsub.s32 %v2547, %v2549
        %v2551 = vrot.slane %v2541, %v2550
        %v2552 = vcombine.high %v2551, %v2551
        %v2554 = vunpack.c.l.s4 1966171168
        %v2555 = vunpack.c.0.s8 %v2554
        %v2556 = vlaneseq
        %v2557 = vshrl.u32 %v2556, 7
        %v2558 = vsub.s32 %v2555, %v2557
        %v2559 = vrot.slane %v2551, %v2558
        %v2561 = vunpack.c.l.s4 1966171168
        %v2562 = vunpack.c.0.s8 %v2561
        %v2563 = vlaneseq
        %v2564 = vshrl.u32 %v2563, 7
        %v2565 = vsub.s32 %v2562, %v2564
        %v2566 = vrot.slane %v2552, %v2565
        %v2567 = vcombine.high %v2559, %v2559
        %v2568 = vcombine.high %v2566, %v2566
        %v2569 = vlaneseq
        %v2570 = vshrl.u32 %v2569, 7
        %v2571 = vsub.s32 0, %v2570
        %v2572 = vrot.slane %v2559, %v2571
        %v2573 = vlaneseq
        %v2574 = vshrl.u32 %v2573, 7
        %v2575 = vsub.s32 0, %v2574
        %v2576 = vrot.slane %v2566, %v2575
        %v2577 = vlaneseq
        %v2578 = vshrl.u32 %v2577, 7
        %v2579 = vsub.s32 0, %v2578
        %v2580 = vrot.slane %v2567, %v2579
        %v2581 = vlaneseq
        %v2582 = vshrl.u32 %v2581, 7
        %v2583 = vsub.s32 0, %v2582
        %v2584 = vrot.slane %v2568, %v2583
        %v2589 = vmul.f32 %v508, %v2572
        %v2590 = vmul.f32 %v509, %v2572
        %v2591 = vmul.f32 %v510, %v2576
        %v2592 = vmul.f32 %v511, %v2576
        %v2593 = vmul.f32 %v512, %v2580
        %v2594 = vmul.f32 %v513, %v2580
        %v2595 = vmul.f32 %v514, %v2584
        %v2596 = vmul.f32 %v515, %v2584
        %v2597 = vsel %vm555, %v2589, 0.0
        %2598 = vadd.xlane.f32.xlu0 %v2597
        %v2599 = vpop.xlane.xlu0 %2598
        %v2600 = vsel %vm863, %v2590, 0.0
        %2601 = vadd.xlane.f32.xlu0 %v2600
        %v2602 = vpop.xlane.xlu0 %2601
        %v2603 = vsel %vm555, %v2591, 0.0
        %2604 = vadd.xlane.f32.xlu0 %v2603
        %v2605 = vpop.xlane.xlu0 %2604
        %v2606 = vsel %vm863, %v2592, 0.0
        %2607 = vadd.xlane.f32.xlu0 %v2606
        %v2608 = vpop.xlane.xlu0 %2607
        %v2609 = vsel %vm555, %v2593, 0.0
        %2610 = vadd.xlane.f32.xlu0 %v2609
        %v2611 = vpop.xlane.xlu0 %2610
        %v2612 = vsel %vm863, %v2594, 0.0
        %2613 = vadd.xlane.f32.xlu0 %v2612
        %v2614 = vpop.xlane.xlu0 %2613
        %v2615 = vsel %vm555, %v2595, 0.0
        %2616 = vadd.xlane.f32.xlu0 %v2615
        %v2617 = vpop.xlane.xlu0 %2616
        %v2618 = vsel %vm863, %v2596, 0.0
        %2619 = vadd.xlane.f32.xlu0 %v2618
        %v2620 = vpop.xlane.xlu0 %2619
        %v2621 = vadd.f32 %v2599, %v892
        %v2622 = vadd.f32 %v2602, %v896
        %v2623 = vadd.f32 %v2605, %v903
        %v2624 = vadd.f32 %v2608, %v907
        %v2625 = vadd.f32 %v2611, %v914
        %v2626 = vadd.f32 %v2614, %v918
        %v2627 = vadd.f32 %v2617, %v925
        %v2628 = vadd.f32 %v2620, %v929
        %2637 = vset.pattern.permute.xlu0 0
        %2638 = vperm.xlu0 %2637, %v2621
        %v2639 = vpop.permute.xlu0 %2638
        %2640 = vset.pattern.permute.xlu0 0
        %2641 = vperm.xlu0 %2640, %v2622
        %v2642 = vpop.permute.xlu0 %2641
        %2643 = vset.pattern.permute.xlu0 0
        %2644 = vperm.xlu0 %2643, %v2623
        %v2645 = vpop.permute.xlu0 %2644
        %2646 = vset.pattern.permute.xlu0 0
        %2647 = vperm.xlu0 %2646, %v2624
        %v2648 = vpop.permute.xlu0 %2647
        %2649 = vset.pattern.permute.xlu0 0
        %2650 = vperm.xlu0 %2649, %v2625
        %v2651 = vpop.permute.xlu0 %2650
        %2652 = vset.pattern.permute.xlu0 0
        %2653 = vperm.xlu0 %2652, %v2626
        %v2654 = vpop.permute.xlu0 %2653
        %2655 = vset.pattern.permute.xlu0 0
        %2656 = vperm.xlu0 %2655, %v2627
        %v2657 = vpop.permute.xlu0 %2656
        %2658 = vset.pattern.permute.xlu0 0
        %2659 = vperm.xlu0 %2658, %v2628
        %v2660 = vpop.permute.xlu0 %2659
        %v2661 = vlaneseq
        %v2662 = vshrl.u32 %v2661, 7
        %v2663 = vsub.s32 %v979, %v2662
        %v2664 = vrot.slane %v2639, %v2663
        %v2665 = vlaneseq
        %v2666 = vshrl.u32 %v2665, 7
        %v2667 = vsub.s32 %v984, %v2666
        %v2668 = vrot.slane %v2642, %v2667
        %v2669 = vsel %vm989, %v2668, %v2664
        %v2670 = vlaneseq
        %v2671 = vshrl.u32 %v2670, 7
        %v2672 = vsub.s32 %v979, %v2671
        %v2673 = vrot.slane %v2645, %v2672
        %v2674 = vlaneseq
        %v2675 = vshrl.u32 %v2674, 7
        %v2676 = vsub.s32 %v984, %v2675
        %v2677 = vrot.slane %v2648, %v2676
        %v2678 = vsel %vm989, %v2677, %v2673
        %v2679 = vlaneseq
        %v2680 = vshrl.u32 %v2679, 7
        %v2681 = vsub.s32 %v979, %v2680
        %v2682 = vrot.slane %v2651, %v2681
        %v2683 = vlaneseq
        %v2684 = vshrl.u32 %v2683, 7
        %v2685 = vsub.s32 %v984, %v2684
        %v2686 = vrot.slane %v2654, %v2685
        %v2687 = vsel %vm989, %v2686, %v2682
        %v2688 = vlaneseq
        %v2689 = vshrl.u32 %v2688, 7
        %v2690 = vsub.s32 %v979, %v2689
        %v2691 = vrot.slane %v2657, %v2690
        %v2692 = vlaneseq
        %v2693 = vshrl.u32 %v2692, 7
        %v2694 = vsub.s32 %v984, %v2693
        %v2695 = vrot.slane %v2660, %v2694
        %v2696 = vsel %vm989, %v2695, %v2691
        %v2697 = vsel %vm1018, %v2678, %v2669
        %v2698 = vsel %vm1020, %v2687, %v2697
        %v2699 = vsel %vm1022, %v2696, %v2698
        %v2701 = vsel %vm1025, %v2699, -inf
        %2702 = vmax.xlane.f32.xlu0 %v2701
        %v2703 = vpop.xlane.xlu0 %2702
        %v2705 = vlaneseq
        %v2706 = vshrl.u32 %v2705, 7
        %v2707 = vsub.s32 0, %v2706
        %v2708 = vrot.slane %v2703, %v2707
        %v2709 = vlaneseq
        %v2710 = vshrl.u32 %v2709, 7
        %v2711 = vsub.s32 1, %v2710
        %v2712 = vrot.slane %v2703, %v2711
        %v2713 = vlaneseq
        %v2714 = vshrl.u32 %v2713, 7
        %v2715 = vsub.s32 2, %v2714
        %v2716 = vrot.slane %v2703, %v2715
        %v2717 = vlaneseq
        %v2718 = vshrl.u32 %v2717, 7
        %v2719 = vsub.s32 3, %v2718
        %v2720 = vrot.slane %v2703, %v2719
        %v2725 = vsub.f32 %v2621, %v2708
        %v2726 = vsub.f32 %v2622, %v2708
        %v2727 = vsub.f32 %v2623, %v2712
        %v2728 = vsub.f32 %v2624, %v2712
        %v2729 = vsub.f32 %v2625, %v2716
        %v2730 = vsub.f32 %v2626, %v2716
        %v2731 = vsub.f32 %v2627, %v2720
        %v2732 = vsub.f32 %v2628, %v2720
        %v2733 = vmul.f32 %v2725, 1.442695
        %v2734 = vpow.pop %v2733
        %v2735 = vmul.f32 %v2726, 1.442695
        %v2736 = vpow.pop %v2735
        %v2737 = vmul.f32 %v2727, 1.442695
        %v2738 = vpow.pop %v2737
        %v2739 = vmul.f32 %v2728, 1.442695
        %v2740 = vpow.pop %v2739
        %v2741 = vmul.f32 %v2729, 1.442695
        %v2742 = vpow.pop %v2741
        %v2743 = vmul.f32 %v2730, 1.442695
        %v2744 = vpow.pop %v2743
        %v2745 = vmul.f32 %v2731, 1.442695
        %v2746 = vpow.pop %v2745
        %v2747 = vmul.f32 %v2732, 1.442695
        %v2748 = vpow.pop %v2747
        %2757 = vset.pattern.permute.xlu0 0
        %2758 = vperm.xlu0 %2757, %v2734
        %v2759 = vpop.permute.xlu0 %2758
        %2760 = vset.pattern.permute.xlu0 0
        %2761 = vperm.xlu0 %2760, %v2736
        %v2762 = vpop.permute.xlu0 %2761
        %2763 = vset.pattern.permute.xlu0 0
        %2764 = vperm.xlu0 %2763, %v2738
        %v2765 = vpop.permute.xlu0 %2764
        %2766 = vset.pattern.permute.xlu0 0
        %2767 = vperm.xlu0 %2766, %v2740
        %v2768 = vpop.permute.xlu0 %2767
        %2769 = vset.pattern.permute.xlu0 0
        %2770 = vperm.xlu0 %2769, %v2742
        %v2771 = vpop.permute.xlu0 %2770
        %2772 = vset.pattern.permute.xlu0 0
        %2773 = vperm.xlu0 %2772, %v2744
        %v2774 = vpop.permute.xlu0 %2773
        %2775 = vset.pattern.permute.xlu0 0
        %2776 = vperm.xlu0 %2775, %v2746
        %v2777 = vpop.permute.xlu0 %2776
        %2778 = vset.pattern.permute.xlu0 0
        %2779 = vperm.xlu0 %2778, %v2748
        %v2780 = vpop.permute.xlu0 %2779
        %v2781 = vlaneseq
        %v2782 = vshrl.u32 %v2781, 7
        %v2783 = vsub.s32 %v979, %v2782
        %v2784 = vrot.slane %v2759, %v2783
        %v2785 = vlaneseq
        %v2786 = vshrl.u32 %v2785, 7
        %v2787 = vsub.s32 %v984, %v2786
        %v2788 = vrot.slane %v2762, %v2787
        %v2789 = vsel %vm989, %v2788, %v2784
        %v2790 = vlaneseq
        %v2791 = vshrl.u32 %v2790, 7
        %v2792 = vsub.s32 %v979, %v2791
        %v2793 = vrot.slane %v2765, %v2792
        %v2794 = vlaneseq
        %v2795 = vshrl.u32 %v2794, 7
        %v2796 = vsub.s32 %v984, %v2795
        %v2797 = vrot.slane %v2768, %v2796
        %v2798 = vsel %vm989, %v2797, %v2793
        %v2799 = vlaneseq
        %v2800 = vshrl.u32 %v2799, 7
        %v2801 = vsub.s32 %v979, %v2800
        %v2802 = vrot.slane %v2771, %v2801
        %v2803 = vlaneseq
        %v2804 = vshrl.u32 %v2803, 7
        %v2805 = vsub.s32 %v984, %v2804
        %v2806 = vrot.slane %v2774, %v2805
        %v2807 = vsel %vm989, %v2806, %v2802
        %v2808 = vlaneseq
        %v2809 = vshrl.u32 %v2808, 7
        %v2810 = vsub.s32 %v979, %v2809
        %v2811 = vrot.slane %v2777, %v2810
        %v2812 = vlaneseq
        %v2813 = vshrl.u32 %v2812, 7
        %v2814 = vsub.s32 %v984, %v2813
        %v2815 = vrot.slane %v2780, %v2814
        %v2816 = vsel %vm989, %v2815, %v2811
        %v2817 = vsel %vm1018, %v2798, %v2789
        %v2818 = vsel %vm1020, %v2807, %v2817
        %v2819 = vsel %vm1022, %v2816, %v2818
        %v2821 = vsel %vm1025, %v2819, 0.0
        %2822 = vadd.xlane.f32.xlu0 %v2821
        %v2823 = vpop.xlane.xlu0 %2822
        %v2825 = vlaneseq
        %v2826 = vshrl.u32 %v2825, 7
        %v2827 = vsub.s32 0, %v2826
        %v2828 = vrot.slane %v2823, %v2827
        %v2829 = vlaneseq
        %v2830 = vshrl.u32 %v2829, 7
        %v2831 = vsub.s32 1, %v2830
        %v2832 = vrot.slane %v2823, %v2831
        %v2833 = vlaneseq
        %v2834 = vshrl.u32 %v2833, 7
        %v2835 = vsub.s32 2, %v2834
        %v2836 = vrot.slane %v2823, %v2835
        %v2837 = vlaneseq
        %v2838 = vshrl.u32 %v2837, 7
        %v2839 = vsub.s32 3, %v2838
        %v2840 = vrot.slane %v2823, %v2839
        %v2845 = vrcp.pop %v2828
        %v2846 = vmul.f32 %v2734, %v2845
        %v2847 = vmul.f32 %v2736, %v2845
        %v2848 = vrcp.pop %v2832
        %v2849 = vmul.f32 %v2738, %v2848
        %v2850 = vmul.f32 %v2740, %v2848
        %v2851 = vrcp.pop %v2836
        %v2852 = vmul.f32 %v2742, %v2851
        %v2853 = vmul.f32 %v2744, %v2851
        %v2854 = vrcp.pop %v2840
        %v2855 = vmul.f32 %v2746, %v2854
        %v2856 = vmul.f32 %v2748, %v2854
        %2858 = vset.pattern.permute.xlu0 0
        %2859 = vperm.xlu0 %2858, %v2846
        %v2860 = vpop.permute.xlu0 %2859
        %2863 = vset.pattern.permute.xlu0 0
        %2864 = vperm.xlu0 %2863, %v2847
        %v2865 = vpop.permute.xlu0 %2864
        %2868 = vset.pattern.permute.xlu0 0
        %2869 = vperm.xlu0 %2868, %v2849
        %v2870 = vpop.permute.xlu0 %2869
        %2873 = vset.pattern.permute.xlu0 0
        %2874 = vperm.xlu0 %2873, %v2850
        %v2875 = vpop.permute.xlu0 %2874
        %2878 = vset.pattern.permute.xlu0 0
        %2879 = vperm.xlu0 %2878, %v2852
        %v2880 = vpop.permute.xlu0 %2879
        %2883 = vset.pattern.permute.xlu0 0
        %2884 = vperm.xlu0 %2883, %v2853
        %v2885 = vpop.permute.xlu0 %2884
        %2888 = vset.pattern.permute.xlu0 0
        %2889 = vperm.xlu0 %2888, %v2855
        %v2890 = vpop.permute.xlu0 %2889
        %2893 = vset.pattern.permute.xlu0 0
        %2894 = vperm.xlu0 %2893, %v2856
        %v2895 = vpop.permute.xlu0 %2894
        %v2897 = vmul.f32 %v2860, %v508
        %v2898 = vmul.f32 %v2865, %v509
        %v2899 = vmul.f32 %v2870, %v510
        %v2900 = vmul.f32 %v2875, %v511
        %v2901 = vmul.f32 %v2880, %v512
        %v2902 = vmul.f32 %v2885, %v513
        %v2903 = vmul.f32 %v2890, %v514
        %v2904 = vmul.f32 %v2895, %v515
        %v2905 = vsel %vm555, %v2897, 0.0
        %v2906 = vsel %vm863, %v2898, 0.0
        %v2907 = vadd.f32 %v2905, %v2906
        %v2908 = vrot.slane %v2907, 4
        %v2909 = vadd.f32 %v2907, %v2908
        %v2910 = vrot.slane %v2909, 2
        %v2911 = vadd.f32 %v2909, %v2910
        %v2912 = vrot.slane %v2911, 1
        %v2913 = vadd.f32 %v2911, %v2912
        %v2914 = vsel %vm555, %v2899, 0.0
        %v2915 = vsel %vm863, %v2900, 0.0
        %v2916 = vadd.f32 %v2914, %v2915
        %v2917 = vrot.slane %v2916, 4
        %v2918 = vadd.f32 %v2916, %v2917
        %v2919 = vrot.slane %v2918, 2
        %v2920 = vadd.f32 %v2918, %v2919
        %v2921 = vrot.slane %v2920, 1
        %v2922 = vadd.f32 %v2920, %v2921
        %v2923 = vsel %vm555, %v2901, 0.0
        %v2924 = vsel %vm863, %v2902, 0.0
        %v2925 = vadd.f32 %v2923, %v2924
        %v2926 = vrot.slane %v2925, 4
        %v2927 = vadd.f32 %v2925, %v2926
        %v2928 = vrot.slane %v2927, 2
        %v2929 = vadd.f32 %v2927, %v2928
        %v2930 = vrot.slane %v2929, 1
        %v2931 = vadd.f32 %v2929, %v2930
        %v2932 = vsel %vm555, %v2903, 0.0
        %v2933 = vsel %vm863, %v2904, 0.0
        %v2934 = vadd.f32 %v2932, %v2933
        %v2935 = vrot.slane %v2934, 4
        %v2936 = vadd.f32 %v2934, %v2935
        %v2937 = vrot.slane %v2936, 2
        %v2938 = vadd.f32 %v2936, %v2937
        %v2939 = vrot.slane %v2938, 1
        %v2940 = vadd.f32 %v2938, %v2939
        %2941 = vmatprep.subr.mxu0 0.0
        %2942 = vmatpush1.msra.mxu0 0.0
        %2943 = vmatprep.subr.mxu0 0.0
        %2944 = vmatpush1.msra.mxu0 0.0
        %2945 = vmatprep.subr.mxu0 0.0
        %2946 = vmatpush1.msra.mxu0 0.0
        %2947 = vmatprep.subr.mxu0 0.0
        %2948 = vmatpush1.msra.mxu0 0.0
        %2949 = vmatprep.subr.mxu0 0.0
        %2950 = vmatpush1.msra.mxu0 0.0
        %2951 = vmatprep.subr.mxu0 0.0
        %2952 = vmatpush1.msra.mxu0 0.0
        %2953 = vmatprep.subr.mxu0 0.0
        %2954 = vmatpush1.msra.mxu0 0.0
        %2955 = vmatprep.subr.mxu0 0.0
        %2956 = vmatpush1.msra.mxu0 0.0
        %2957 = vmatprep.subr.mxu0 0.0
        %2958 = vmatpush1.msra.mxu0 0.0
        %2959 = vmatprep.subr.mxu0 0.0
        %2960 = vmatpush1.msra.mxu0 0.0
        %2961 = vmatprep.subr.mxu0 0.0
        %2962 = vmatpush1.msra.mxu0 0.0
        %2963 = vmatprep.subr.mxu0 0.0
        %2964 = vmatpush1.msra.mxu0 0.0
        %2965 = vmatprep.subr.mxu0 0.0
        %2966 = vmatpush1.msra.mxu0 %v536
        %2967 = vmatprep.subr.mxu0 0.0
        %2968 = vmatpush1.msra.mxu0 %v535
        %2969 = vmatprep.subr.mxu0 0.0
        %2970 = vmatpush1.msra.mxu0 %v534
        %2971 = vmatprep.subr.mxu0 0.0
        %2972 = vmatpush1.msra.mxu0 %v533
        %2973 = vmatprep.subr.mxu0 0.0
        %2974 = vmatpush2.msra.mxu0 0.0
        %2975 = vmatprep.subr.mxu0 0.0
        %2976 = vmatpush2.msra.mxu0 0.0
        %2977 = vmatprep.subr.mxu0 0.0
        %2978 = vmatpush2.msra.mxu0 0.0
        %2979 = vmatprep.subr.mxu0 0.0
        %2980 = vmatpush2.msra.mxu0 0.0
        %2981 = vmatprep.subr.mxu0 0.0
        %2982 = vmatpush2.msra.mxu0 0.0
        %2983 = vmatprep.subr.mxu0 0.0
        %2984 = vmatpush2.msra.mxu0 0.0
        %2985 = vmatprep.subr.mxu0 0.0
        %2986 = vmatpush2.msra.mxu0 0.0
        %2987 = vmatprep.subr.mxu0 0.0
        %2988 = vmatpush2.msra.mxu0 0.0
        %2989 = vmatprep.subr.mxu0 0.0
        %2990 = vmatpush2.msra.mxu0 0.0
        %2991 = vmatprep.subr.mxu0 0.0
        %2992 = vmatpush2.msra.mxu0 0.0
        %2993 = vmatprep.subr.mxu0 0.0
        %2994 = vmatpush2.msra.mxu0 0.0
        %2995 = vmatprep.subr.mxu0 0.0
        %2996 = vmatpush2.msra.mxu0 0.0
        %2997 = vmatprep.subr.mxu0 0.0
        %2998 = vmatpush2.msra.mxu0 0.0
        %2999 = vmatprep.subr.mxu0 0.0
        %3000 = vmatpush2.msra.mxu0 0.0
        %3001 = vmatprep.subr.mxu0 0.0
        %3002 = vmatpush2.msra.mxu0 0.0
        %3003 = vmatprep.subr.mxu0 0.0
        %3004 = vmatpush2.msra.mxu0 0.0
        %3005 = vmatprep.mubr.f32.mxu0 0.0
        %3006 = vmatmul.mubr.f32.gmra.mxu0 %v2472
        %v3007 = vpop.f32.mrf.mxu0
        %v3008 = vadd.f32 0.0, %v3007
        %v3009 = vpop.f32.mrf.mxu0
        %3010 = vdwg.mxu0
        %v3015 = vsel %vm1018, %v2922, %v2913
        %v3016 = vsel %vm1020, %v2931, %v3015
        %v3017 = vsel %vm1022, %v2940, %v3016
        %v3018 = vsel %vm555, %v3017, 0
        %3020 = vmatprep.subr.mxu0 0.0
        %3021 = vmatpush1.msra.mxu0 0.0
        %3022 = vmatprep.subr.mxu0 0.0
        %3023 = vmatpush1.msra.mxu0 0.0
        %3024 = vmatprep.subr.mxu0 0.0
        %3025 = vmatpush1.msra.mxu0 0.0
        %3026 = vmatprep.subr.mxu0 0.0
        %3027 = vmatpush1.msra.mxu0 0.0
        %3028 = vmatprep.subr.mxu0 0.0
        %3029 = vmatpush1.msra.mxu0 0.0
        %3030 = vmatprep.subr.mxu0 0.0
        %3031 = vmatpush1.msra.mxu0 0.0
        %3032 = vmatprep.subr.mxu0 0.0
        %3033 = vmatpush1.msra.mxu0 0.0
        %3034 = vmatprep.subr.mxu0 0.0
        %3035 = vmatpush1.msra.mxu0 0.0
        %3036 = vmatprep.subr.mxu0 0.0
        %3037 = vmatpush1.msra.mxu0 0.0
        %3038 = vmatprep.subr.mxu0 0.0
        %3039 = vmatpush1.msra.mxu0 0.0
        %3040 = vmatprep.subr.mxu0 0.0
        %3041 = vmatpush1.msra.mxu0 0.0
        %3042 = vmatprep.subr.mxu0 0.0
        %3043 = vmatpush1.msra.mxu0 0.0
        %3044 = vmatprep.subr.mxu0 0.0
        %3045 = vmatpush1.msra.mxu0 %v532
        %3046 = vmatprep.subr.mxu0 0.0
        %3047 = vmatpush1.msra.mxu0 %v531
        %3048 = vmatprep.subr.mxu0 0.0
        %3049 = vmatpush1.msra.mxu0 %v530
        %3050 = vmatprep.subr.mxu0 0.0
        %3051 = vmatpush1.msra.mxu0 %v529
        %3052 = vmatprep.subr.mxu0 0.0
        %3053 = vmatpush2.msra.mxu0 0.0
        %3054 = vmatprep.subr.mxu0 0.0
        %3055 = vmatpush2.msra.mxu0 0.0
        %3056 = vmatprep.subr.mxu0 0.0
        %3057 = vmatpush2.msra.mxu0 0.0
        %3058 = vmatprep.subr.mxu0 0.0
        %3059 = vmatpush2.msra.mxu0 0.0
        %3060 = vmatprep.subr.mxu0 0.0
        %3061 = vmatpush2.msra.mxu0 0.0
        %3062 = vmatprep.subr.mxu0 0.0
        %3063 = vmatpush2.msra.mxu0 0.0
        %3064 = vmatprep.subr.mxu0 0.0
        %3065 = vmatpush2.msra.mxu0 0.0
        %3066 = vmatprep.subr.mxu0 0.0
        %3067 = vmatpush2.msra.mxu0 0.0
        %3068 = vmatprep.subr.mxu0 0.0
        %3069 = vmatpush2.msra.mxu0 0.0
        %3070 = vmatprep.subr.mxu0 0.0
        %3071 = vmatpush2.msra.mxu0 0.0
        %3072 = vmatprep.subr.mxu0 0.0
        %3073 = vmatpush2.msra.mxu0 0.0
        %3074 = vmatprep.subr.mxu0 0.0
        %3075 = vmatpush2.msra.mxu0 0.0
        %3076 = vmatprep.subr.mxu0 0.0
        %3077 = vmatpush2.msra.mxu0 0.0
        %3078 = vmatprep.subr.mxu0 0.0
        %3079 = vmatpush2.msra.mxu0 0.0
        %3080 = vmatprep.subr.mxu0 0.0
        %3081 = vmatpush2.msra.mxu0 0.0
        %3082 = vmatprep.subr.mxu0 0.0
        %3083 = vmatpush2.msra.mxu0 0.0
        %3084 = vmatprep.mubr.f32.mxu0 0.0
        %3085 = vmatmul.mubr.f32.gmra.mxu0 %v3018
        %v3086 = vpop.f32.mrf.mxu0
        %v3087 = vadd.f32 %v3008, %v3086
        %v3088 = vpop.f32.mrf.mxu0
        %3089 = vdwg.mxu0
        %v3090 = vadd.f32 %v3087, %v549
        %v3091 = vtanh.pop %v3090
        %s3092 = scalar_lea.vmem %s482, 8 [#allocation11]
        %3093 = vst.msk [vmem:[%s3092] sm:$0xf] %vm1417, %v3091
        %v3094 = vlaneseq
        %v3095 = vshrl.u32 %v3094, 7
        %v3096 = vsub.s32 %v979, %v3095
        %v3097 = vrot.slane %v2860, %v3096
        %v3098 = vlaneseq
        %v3099 = vshrl.u32 %v3098, 7
        %v3100 = vsub.s32 %v984, %v3099
        %v3101 = vrot.slane %v2865, %v3100
        %v3102 = vsel %vm989, %v3101, %v3097
        %v3103 = vlaneseq
        %v3104 = vshrl.u32 %v3103, 7
        %v3105 = vsub.s32 %v979, %v3104
        %v3106 = vrot.slane %v2870, %v3105
        %v3107 = vlaneseq
        %v3108 = vshrl.u32 %v3107, 7
        %v3109 = vsub.s32 %v984, %v3108
        %v3110 = vrot.slane %v2875, %v3109
        %v3111 = vsel %vm989, %v3110, %v3106
        %v3112 = vlaneseq
        %v3113 = vshrl.u32 %v3112, 7
        %v3114 = vsub.s32 %v979, %v3113
        %v3115 = vrot.slane %v2880, %v3114
        %v3116 = vlaneseq
        %v3117 = vshrl.u32 %v3116, 7
        %v3118 = vsub.s32 %v984, %v3117
        %v3119 = vrot.slane %v2885, %v3118
        %v3120 = vsel %vm989, %v3119, %v3115
        %v3121 = vlaneseq
        %v3122 = vshrl.u32 %v3121, 7
        %v3123 = vsub.s32 %v979, %v3122
        %v3124 = vrot.slane %v2890, %v3123
        %v3125 = vlaneseq
        %v3126 = vshrl.u32 %v3125, 7
        %v3127 = vsub.s32 %v984, %v3126
        %v3128 = vrot.slane %v2895, %v3127
        %v3129 = vsel %vm989, %v3128, %v3124
        %v3130 = vsel %vm1018, %v3111, %v3102
        %v3131 = vsel %vm1020, %v3120, %v3130
        %v3132 = vsel %vm1022, %v3129, %v3131
        %s3134 = scalar_lea.vmem %s489, 8 [#allocation12]
        %3135 = vst.msk [vmem:[%s3134] sm:$0xf] %vm1025, %v3132
        %s3136 = scalar_lea.vmem %s494, 12
        %v3137 = vld [vmem:[%s3136] sm:$0xf]
        %v3139 = vsel %vm555, %v3091, 0
        %3141 = vmatprep.subr.mxu0 0.0
        %3142 = vmatpush1.msra.mxu0 0.0
        %3143 = vmatprep.subr.mxu0 0.0
        %3144 = vmatpush1.msra.mxu0 0.0
        %3145 = vmatprep.subr.mxu0 0.0
        %3146 = vmatpush1.msra.mxu0 0.0
        %3147 = vmatprep.subr.mxu0 0.0
        %3148 = vmatpush1.msra.mxu0 0.0
        %3149 = vmatprep.subr.mxu0 0.0
        %3150 = vmatpush1.msra.mxu0 0.0
        %3151 = vmatprep.subr.mxu0 0.0
        %3152 = vmatpush1.msra.mxu0 0.0
        %3153 = vmatprep.subr.mxu0 0.0
        %3154 = vmatpush1.msra.mxu0 0.0
        %3155 = vmatprep.subr.mxu0 0.0
        %3156 = vmatpush1.msra.mxu0 0.0
        %3157 = vmatprep.subr.mxu0 0.0
        %3158 = vmatpush1.msra.mxu0 0.0
        %3159 = vmatprep.subr.mxu0 0.0
        %3160 = vmatpush1.msra.mxu0 0.0
        %3161 = vmatprep.subr.mxu0 0.0
        %3162 = vmatpush1.msra.mxu0 0.0
        %3163 = vmatprep.subr.mxu0 0.0
        %3164 = vmatpush1.msra.mxu0 0.0
        %3165 = vmatprep.subr.mxu0 0.0
        %3166 = vmatpush1.msra.mxu0 %v520
        %3167 = vmatprep.subr.mxu0 0.0
        %3168 = vmatpush1.msra.mxu0 %v519
        %3169 = vmatprep.subr.mxu0 0.0
        %3170 = vmatpush1.msra.mxu0 %v518
        %3171 = vmatprep.subr.mxu0 0.0
        %3172 = vmatpush1.msra.mxu0 %v517
        %3173 = vmatprep.subr.mxu0 0.0
        %3174 = vmatpush2.msra.mxu0 0.0
        %3175 = vmatprep.subr.mxu0 0.0
        %3176 = vmatpush2.msra.mxu0 0.0
        %3177 = vmatprep.subr.mxu0 0.0
        %3178 = vmatpush2.msra.mxu0 0.0
        %3179 = vmatprep.subr.mxu0 0.0
        %3180 = vmatpush2.msra.mxu0 0.0
        %3181 = vmatprep.subr.mxu0 0.0
        %3182 = vmatpush2.msra.mxu0 0.0
        %3183 = vmatprep.subr.mxu0 0.0
        %3184 = vmatpush2.msra.mxu0 0.0
        %3185 = vmatprep.subr.mxu0 0.0
        %3186 = vmatpush2.msra.mxu0 0.0
        %3187 = vmatprep.subr.mxu0 0.0
        %3188 = vmatpush2.msra.mxu0 0.0
        %3189 = vmatprep.subr.mxu0 0.0
        %3190 = vmatpush2.msra.mxu0 0.0
        %3191 = vmatprep.subr.mxu0 0.0
        %3192 = vmatpush2.msra.mxu0 0.0
        %3193 = vmatprep.subr.mxu0 0.0
        %3194 = vmatpush2.msra.mxu0 0.0
        %3195 = vmatprep.subr.mxu0 0.0
        %3196 = vmatpush2.msra.mxu0 0.0
        %3197 = vmatprep.subr.mxu0 0.0
        %3198 = vmatpush2.msra.mxu0 0.0
        %3199 = vmatprep.subr.mxu0 0.0
        %3200 = vmatpush2.msra.mxu0 0.0
        %3201 = vmatprep.subr.mxu0 0.0
        %3202 = vmatpush2.msra.mxu0 0.0
        %3203 = vmatprep.subr.mxu0 0.0
        %3204 = vmatpush2.msra.mxu0 0.0
        %3205 = vmatprep.mubr.f32.mxu0 0.0
        %3206 = vmatmul.mubr.f32.gmra.mxu0 %v3139
        %v3207 = vpop.f32.mrf.mxu0
        %v3208 = vadd.f32 0.0, %v3207
        %v3209 = vpop.f32.mrf.mxu0
        %3210 = vdwg.mxu0
        %v3211 = vadd.f32 %v3137, %v3208
        %3212 = vmatprep.subr.mxu0 0.0
        %3213 = vmatpush1.msra.mxu0 0.0
        %3214 = vmatprep.subr.mxu0 0.0
        %3215 = vmatpush1.msra.mxu0 0.0
        %3216 = vmatprep.subr.mxu0 0.0
        %3217 = vmatpush1.msra.mxu0 0.0
        %3218 = vmatprep.subr.mxu0 0.0
        %3219 = vmatpush1.msra.mxu0 0.0
        %3220 = vmatprep.subr.mxu0 0.0
        %3221 = vmatpush1.msra.mxu0 0.0
        %3222 = vmatprep.subr.mxu0 0.0
        %3223 = vmatpush1.msra.mxu0 0.0
        %3224 = vmatprep.subr.mxu0 0.0
        %3225 = vmatpush1.msra.mxu0 0.0
        %3226 = vmatprep.subr.mxu0 0.0
        %3227 = vmatpush1.msra.mxu0 0.0
        %3228 = vmatprep.subr.mxu0 0.0
        %3229 = vmatpush1.msra.mxu0 0.0
        %3230 = vmatprep.subr.mxu0 0.0
        %3231 = vmatpush1.msra.mxu0 0.0
        %3232 = vmatprep.subr.mxu0 0.0
        %3233 = vmatpush1.msra.mxu0 0.0
        %3234 = vmatprep.subr.mxu0 0.0
        %3235 = vmatpush1.msra.mxu0 0.0
        %3236 = vmatprep.subr.mxu0 0.0
        %3237 = vmatpush1.msra.mxu0 %v524
        %3238 = vmatprep.subr.mxu0 0.0
        %3239 = vmatpush1.msra.mxu0 %v523
        %3240 = vmatprep.subr.mxu0 0.0
        %3241 = vmatpush1.msra.mxu0 %v522
        %3242 = vmatprep.subr.mxu0 0.0
        %3243 = vmatpush1.msra.mxu0 %v521
        %3244 = vmatprep.subr.mxu0 0.0
        %3245 = vmatpush2.msra.mxu0 0.0
        %3246 = vmatprep.subr.mxu0 0.0
        %3247 = vmatpush2.msra.mxu0 0.0
        %3248 = vmatprep.subr.mxu0 0.0
        %3249 = vmatpush2.msra.mxu0 0.0
        %3250 = vmatprep.subr.mxu0 0.0
        %3251 = vmatpush2.msra.mxu0 0.0
        %3252 = vmatprep.subr.mxu0 0.0
        %3253 = vmatpush2.msra.mxu0 0.0
        %3254 = vmatprep.subr.mxu0 0.0
        %3255 = vmatpush2.msra.mxu0 0.0
        %3256 = vmatprep.subr.mxu0 0.0
        %3257 = vmatpush2.msra.mxu0 0.0
        %3258 = vmatprep.subr.mxu0 0.0
        %3259 = vmatpush2.msra.mxu0 0.0
        %3260 = vmatprep.subr.mxu0 0.0
        %3261 = vmatpush2.msra.mxu0 0.0
        %3262 = vmatprep.subr.mxu0 0.0
        %3263 = vmatpush2.msra.mxu0 0.0
        %3264 = vmatprep.subr.mxu0 0.0
        %3265 = vmatpush2.msra.mxu0 0.0
        %3266 = vmatprep.subr.mxu0 0.0
        %3267 = vmatpush2.msra.mxu0 0.0
        %3268 = vmatprep.subr.mxu0 0.0
        %3269 = vmatpush2.msra.mxu0 0.0
        %3270 = vmatprep.subr.mxu0 0.0
        %3271 = vmatpush2.msra.mxu0 0.0
        %3272 = vmatprep.subr.mxu0 0.0
        %3273 = vmatpush2.msra.mxu0 0.0
        %3274 = vmatprep.subr.mxu0 0.0
        %3275 = vmatpush2.msra.mxu0 0.0
        %3276 = vmatprep.mubr.f32.mxu0 0.0
        %3277 = vmatmul.mubr.f32.gmra.mxu0 %v2472
        %v3278 = vpop.f32.mrf.mxu0
        %v3279 = vadd.f32 0.0, %v3278
        %v3280 = vpop.f32.mrf.mxu0
        %3281 = vdwg.mxu0
        %v3282 = vadd.f32 %v3211, %v3279
        %v3283 = vxor.u32 %v3282, 2147483648
        %v3284 = vmul.f32 %v3283, 1.442695
        %v3285 = vpow.pop %v3284
        %v3286 = vadd.f32 %v3285, 1.0
        %v3287 = vrcp.pop %v3286
        %v3288 = vmul.f32 1.0, %v3287
        %v3289 = vtanh.pop %v3282
        %v3290 = vmul.f32 %v3288, %v2462
        %3292 = vrot.lane.b32.xlu0 %v3289, 64
        %v3293 = vpop.permute.xlu0 %3292
        %v3295 = vmul.f32 %v3288, %v3293
        %3297 = vrot.lane.b32.xlu0 %v3295, 32
        %v3298 = vpop.permute.xlu0 %3297
        %v3300 = vadd.f32 %v3290, %v3298
        %v3301 = vtanh.pop %v3300
        %3303 = vrot.lane.b32.xlu0 %v3301, 64
        %v3304 = vpop.permute.xlu0 %3303
        %v3306 = vmul.f32 %v3288, %v3304
        %3308 = vrot.lane.b32.xlu0 %v3306, 32
        %v3309 = vpop.permute.xlu0 %3308
        %v3310 = vsel %vm555, %v3309, 0
        %3312 = vmatprep.subr.mxu0 0.0
        %3313 = vmatpush1.msra.mxu0 0.0
        %3314 = vmatprep.subr.mxu0 0.0
        %3315 = vmatpush1.msra.mxu0 0.0
        %3316 = vmatprep.subr.mxu0 0.0
        %3317 = vmatpush1.msra.mxu0 0.0
        %3318 = vmatprep.subr.mxu0 0.0
        %3319 = vmatpush1.msra.mxu0 0.0
        %3320 = vmatprep.subr.mxu0 0.0
        %3321 = vmatpush1.msra.mxu0 0.0
        %3322 = vmatprep.subr.mxu0 0.0
        %3323 = vmatpush1.msra.mxu0 0.0
        %3324 = vmatprep.subr.mxu0 0.0
        %3325 = vmatpush1.msra.mxu0 0.0
        %3326 = vmatprep.subr.mxu0 0.0
        %3327 = vmatpush1.msra.mxu0 0.0
        %3328 = vmatprep.subr.mxu0 0.0
        %3329 = vmatpush1.msra.mxu0 0.0
        %3330 = vmatprep.subr.mxu0 0.0
        %3331 = vmatpush1.msra.mxu0 0.0
        %3332 = vmatprep.subr.mxu0 0.0
        %3333 = vmatpush1.msra.mxu0 0.0
        %3334 = vmatprep.subr.mxu0 0.0
        %3335 = vmatpush1.msra.mxu0 0.0
        %3336 = vmatprep.subr.mxu0 0.0
        %3337 = vmatpush1.msra.mxu0 %v528
        %3338 = vmatprep.subr.mxu0 0.0
        %3339 = vmatpush1.msra.mxu0 %v527
        %3340 = vmatprep.subr.mxu0 0.0
        %3341 = vmatpush1.msra.mxu0 %v526
        %3342 = vmatprep.subr.mxu0 0.0
        %3343 = vmatpush1.msra.mxu0 %v525
        %3344 = vmatprep.subr.mxu0 0.0
        %3345 = vmatpush2.msra.mxu0 0.0
        %3346 = vmatprep.subr.mxu0 0.0
        %3347 = vmatpush2.msra.mxu0 0.0
        %3348 = vmatprep.subr.mxu0 0.0
        %3349 = vmatpush2.msra.mxu0 0.0
        %3350 = vmatprep.subr.mxu0 0.0
        %3351 = vmatpush2.msra.mxu0 0.0
        %3352 = vmatprep.subr.mxu0 0.0
        %3353 = vmatpush2.msra.mxu0 0.0
        %3354 = vmatprep.subr.mxu0 0.0
        %3355 = vmatpush2.msra.mxu0 0.0
        %3356 = vmatprep.subr.mxu0 0.0
        %3357 = vmatpush2.msra.mxu0 0.0
        %3358 = vmatprep.subr.mxu0 0.0
        %3359 = vmatpush2.msra.mxu0 0.0
        %3360 = vmatprep.subr.mxu0 0.0
        %3361 = vmatpush2.msra.mxu0 0.0
        %3362 = vmatprep.subr.mxu0 0.0
        %3363 = vmatpush2.msra.mxu0 0.0
        %3364 = vmatprep.subr.mxu0 0.0
        %3365 = vmatpush2.msra.mxu0 0.0
        %3366 = vmatprep.subr.mxu0 0.0
        %3367 = vmatpush2.msra.mxu0 0.0
        %3368 = vmatprep.subr.mxu0 0.0
        %3369 = vmatpush2.msra.mxu0 0.0
        %3370 = vmatprep.subr.mxu0 0.0
        %3371 = vmatpush2.msra.mxu0 0.0
        %3372 = vmatprep.subr.mxu0 0.0
        %3373 = vmatpush2.msra.mxu0 0.0
        %3374 = vmatprep.subr.mxu0 0.0
        %3375 = vmatpush2.msra.mxu0 0.0
        %3376 = vmatprep.mubr.f32.mxu0 0.0
        %3377 = vmatmul.mubr.f32.gmra.mxu0 %v3310
        %v3378 = vpop.f32.mrf.mxu0
        %v3379 = vadd.f32 %v542, %v3378
        %v3380 = vpop.f32.mrf.mxu0
        %3381 = vdwg.mxu0
        %v3384 = vunpack.c.l.s4 1966171168
        %v3385 = vunpack.c.0.s8 %v3384
        %v3386 = vlaneseq
        %v3387 = vshrl.u32 %v3386, 7
        %v3388 = vsub.s32 %v3385, %v3387
        %v3389 = vrot.slane %v3379, %v3388
        %v3390 = vcombine.high %v3389, %v3389
        %v3392 = vunpack.c.l.s4 1966171168
        %v3393 = vunpack.c.0.s8 %v3392
        %v3394 = vlaneseq
        %v3395 = vshrl.u32 %v3394, 7
        %v3396 = vsub.s32 %v3393, %v3395
        %v3397 = vrot.slane %v3389, %v3396
        %v3399 = vunpack.c.l.s4 1966171168
        %v3400 = vunpack.c.0.s8 %v3399
        %v3401 = vlaneseq
        %v3402 = vshrl.u32 %v3401, 7
        %v3403 = vsub.s32 %v3400, %v3402
        %v3404 = vrot.slane %v3390, %v3403
        %v3405 = vcombine.high %v3397, %v3397
        %v3406 = vcombine.high %v3404, %v3404
        %v3407 = vlaneseq
        %v3408 = vshrl.u32 %v3407, 7
        %v3409 = vsub.s32 0, %v3408
        %v3410 = vrot.slane %v3397, %v3409
        %v3411 = vlaneseq
        %v3412 = vshrl.u32 %v3411, 7
        %v3413 = vsub.s32 0, %v3412
        %v3414 = vrot.slane %v3404, %v3413
        %v3415 = vlaneseq
        %v3416 = vshrl.u32 %v3415, 7
        %v3417 = vsub.s32 0, %v3416
        %v3418 = vrot.slane %v3405, %v3417
        %v3419 = vlaneseq
        %v3420 = vshrl.u32 %v3419, 7
        %v3421 = vsub.s32 0, %v3420
        %v3422 = vrot.slane %v3406, %v3421
        %v3427 = vmul.f32 %v508, %v3410
        %v3428 = vmul.f32 %v509, %v3410
        %v3429 = vmul.f32 %v510, %v3414
        %v3430 = vmul.f32 %v511, %v3414
        %v3431 = vmul.f32 %v512, %v3418
        %v3432 = vmul.f32 %v513, %v3418
        %v3433 = vmul.f32 %v514, %v3422
        %v3434 = vmul.f32 %v515, %v3422
        %v3435 = vsel %vm555, %v3427, 0.0
        %3436 = vadd.xlane.f32.xlu0 %v3435
        %v3437 = vpop.xlane.xlu0 %3436
        %v3438 = vsel %vm863, %v3428, 0.0
        %3439 = vadd.xlane.f32.xlu0 %v3438
        %v3440 = vpop.xlane.xlu0 %3439
        %v3441 = vsel %vm555, %v3429, 0.0
        %3442 = vadd.xlane.f32.xlu0 %v3441
        %v3443 = vpop.xlane.xlu0 %3442
        %v3444 = vsel %vm863, %v3430, 0.0
        %3445 = vadd.xlane.f32.xlu0 %v3444
        %v3446 = vpop.xlane.xlu0 %3445
        %v3447 = vsel %vm555, %v3431, 0.0
        %3448 = vadd.xlane.f32.xlu0 %v3447
        %v3449 = vpop.xlane.xlu0 %3448
        %v3450 = vsel %vm863, %v3432, 0.0
        %3451 = vadd.xlane.f32.xlu0 %v3450
        %v3452 = vpop.xlane.xlu0 %3451
        %v3453 = vsel %vm555, %v3433, 0.0
        %3454 = vadd.xlane.f32.xlu0 %v3453
        %v3455 = vpop.xlane.xlu0 %3454
        %v3456 = vsel %vm863, %v3434, 0.0
        %3457 = vadd.xlane.f32.xlu0 %v3456
        %v3458 = vpop.xlane.xlu0 %3457
        %v3459 = vadd.f32 %v3437, %v892
        %v3460 = vadd.f32 %v3440, %v896
        %v3461 = vadd.f32 %v3443, %v903
        %v3462 = vadd.f32 %v3446, %v907
        %v3463 = vadd.f32 %v3449, %v914
        %v3464 = vadd.f32 %v3452, %v918
        %v3465 = vadd.f32 %v3455, %v925
        %v3466 = vadd.f32 %v3458, %v929
        %3475 = vset.pattern.permute.xlu0 0
        %3476 = vperm.xlu0 %3475, %v3459
        %v3477 = vpop.permute.xlu0 %3476
        %3478 = vset.pattern.permute.xlu0 0
        %3479 = vperm.xlu0 %3478, %v3460
        %v3480 = vpop.permute.xlu0 %3479
        %3481 = vset.pattern.permute.xlu0 0
        %3482 = vperm.xlu0 %3481, %v3461
        %v3483 = vpop.permute.xlu0 %3482
        %3484 = vset.pattern.permute.xlu0 0
        %3485 = vperm.xlu0 %3484, %v3462
        %v3486 = vpop.permute.xlu0 %3485
        %3487 = vset.pattern.permute.xlu0 0
        %3488 = vperm.xlu0 %3487, %v3463
        %v3489 = vpop.permute.xlu0 %3488
        %3490 = vset.pattern.permute.xlu0 0
        %3491 = vperm.xlu0 %3490, %v3464
        %v3492 = vpop.permute.xlu0 %3491
        %3493 = vset.pattern.permute.xlu0 0
        %3494 = vperm.xlu0 %3493, %v3465
        %v3495 = vpop.permute.xlu0 %3494
        %3496 = vset.pattern.permute.xlu0 0
        %3497 = vperm.xlu0 %3496, %v3466
        %v3498 = vpop.permute.xlu0 %3497
        %v3499 = vlaneseq
        %v3500 = vshrl.u32 %v3499, 7
        %v3501 = vsub.s32 %v979, %v3500
        %v3502 = vrot.slane %v3477, %v3501
        %v3503 = vlaneseq
        %v3504 = vshrl.u32 %v3503, 7
        %v3505 = vsub.s32 %v984, %v3504
        %v3506 = vrot.slane %v3480, %v3505
        %v3507 = vsel %vm989, %v3506, %v3502
        %v3508 = vlaneseq
        %v3509 = vshrl.u32 %v3508, 7
        %v3510 = vsub.s32 %v979, %v3509
        %v3511 = vrot.slane %v3483, %v3510
        %v3512 = vlaneseq
        %v3513 = vshrl.u32 %v3512, 7
        %v3514 = vsub.s32 %v984, %v3513
        %v3515 = vrot.slane %v3486, %v3514
        %v3516 = vsel %vm989, %v3515, %v3511
        %v3517 = vlaneseq
        %v3518 = vshrl.u32 %v3517, 7
        %v3519 = vsub.s32 %v979, %v3518
        %v3520 = vrot.slane %v3489, %v3519
        %v3521 = vlaneseq
        %v3522 = vshrl.u32 %v3521, 7
        %v3523 = vsub.s32 %v984, %v3522
        %v3524 = vrot.slane %v3492, %v3523
        %v3525 = vsel %vm989, %v3524, %v3520
        %v3526 = vlaneseq
        %v3527 = vshrl.u32 %v3526, 7
        %v3528 = vsub.s32 %v979, %v3527
        %v3529 = vrot.slane %v3495, %v3528
        %v3530 = vlaneseq
        %v3531 = vshrl.u32 %v3530, 7
        %v3532 = vsub.s32 %v984, %v3531
        %v3533 = vrot.slane %v3498, %v3532
        %v3534 = vsel %vm989, %v3533, %v3529
        %v3535 = vsel %vm1018, %v3516, %v3507
        %v3536 = vsel %vm1020, %v3525, %v3535
        %v3537 = vsel %vm1022, %v3534, %v3536
        %v3539 = vsel %vm1025, %v3537, -inf
        %3540 = vmax.xlane.f32.xlu0 %v3539
        %v3541 = vpop.xlane.xlu0 %3540
        %v3543 = vlaneseq
        %v3544 = vshrl.u32 %v3543, 7
        %v3545 = vsub.s32 0, %v3544
        %v3546 = vrot.slane %v3541, %v3545
        %v3547 = vlaneseq
        %v3548 = vshrl.u32 %v3547, 7
        %v3549 = vsub.s32 1, %v3548
        %v3550 = vrot.slane %v3541, %v3549
        %v3551 = vlaneseq
        %v3552 = vshrl.u32 %v3551, 7
        %v3553 = vsub.s32 2, %v3552
        %v3554 = vrot.slane %v3541, %v3553
        %v3555 = vlaneseq
        %v3556 = vshrl.u32 %v3555, 7
        %v3557 = vsub.s32 3, %v3556
        %v3558 = vrot.slane %v3541, %v3557
        %v3563 = vsub.f32 %v3459, %v3546
        %v3564 = vsub.f32 %v3460, %v3546
        %v3565 = vsub.f32 %v3461, %v3550
        %v3566 = vsub.f32 %v3462, %v3550
        %v3567 = vsub.f32 %v3463, %v3554
        %v3568 = vsub.f32 %v3464, %v3554
        %v3569 = vsub.f32 %v3465, %v3558
        %v3570 = vsub.f32 %v3466, %v3558
        %v3571 = vmul.f32 %v3563, 1.442695
        %v3572 = vpow.pop %v3571
        %v3573 = vmul.f32 %v3564, 1.442695
        %v3574 = vpow.pop %v3573
        %v3575 = vmul.f32 %v3565, 1.442695
        %v3576 = vpow.pop %v3575
        %v3577 = vmul.f32 %v3566, 1.442695
        %v3578 = vpow.pop %v3577
        %v3579 = vmul.f32 %v3567, 1.442695
        %v3580 = vpow.pop %v3579
        %v3581 = vmul.f32 %v3568, 1.442695
        %v3582 = vpow.pop %v3581
        %v3583 = vmul.f32 %v3569, 1.442695
        %v3584 = vpow.pop %v3583
        %v3585 = vmul.f32 %v3570, 1.442695
        %v3586 = vpow.pop %v3585
        %3595 = vset.pattern.permute.xlu0 0
        %3596 = vperm.xlu0 %3595, %v3572
        %v3597 = vpop.permute.xlu0 %3596
        %3598 = vset.pattern.permute.xlu0 0
        %3599 = vperm.xlu0 %3598, %v3574
        %v3600 = vpop.permute.xlu0 %3599
        %3601 = vset.pattern.permute.xlu0 0
        %3602 = vperm.xlu0 %3601, %v3576
        %v3603 = vpop.permute.xlu0 %3602
        %3604 = vset.pattern.permute.xlu0 0
        %3605 = vperm.xlu0 %3604, %v3578
        %v3606 = vpop.permute.xlu0 %3605
        %3607 = vset.pattern.permute.xlu0 0
        %3608 = vperm.xlu0 %3607, %v3580
        %v3609 = vpop.permute.xlu0 %3608
        %3610 = vset.pattern.permute.xlu0 0
        %3611 = vperm.xlu0 %3610, %v3582
        %v3612 = vpop.permute.xlu0 %3611
        %3613 = vset.pattern.permute.xlu0 0
        %3614 = vperm.xlu0 %3613, %v3584
        %v3615 = vpop.permute.xlu0 %3614
        %3616 = vset.pattern.permute.xlu0 0
        %3617 = vperm.xlu0 %3616, %v3586
        %v3618 = vpop.permute.xlu0 %3617
        %v3619 = vlaneseq
        %v3620 = vshrl.u32 %v3619, 7
        %v3621 = vsub.s32 %v979, %v3620
        %v3622 = vrot.slane %v3597, %v3621
        %v3623 = vlaneseq
        %v3624 = vshrl.u32 %v3623, 7
        %v3625 = vsub.s32 %v984, %v3624
        %v3626 = vrot.slane %v3600, %v3625
        %v3627 = vsel %vm989, %v3626, %v3622
        %v3628 = vlaneseq
        %v3629 = vshrl.u32 %v3628, 7
        %v3630 = vsub.s32 %v979, %v3629
        %v3631 = vrot.slane %v3603, %v3630
        %v3632 = vlaneseq
        %v3633 = vshrl.u32 %v3632, 7
        %v3634 = vsub.s32 %v984, %v3633
        %v3635 = vrot.slane %v3606, %v3634
        %v3636 = vsel %vm989, %v3635, %v3631
        %v3637 = vlaneseq
        %v3638 = vshrl.u32 %v3637, 7
        %v3639 = vsub.s32 %v979, %v3638
        %v3640 = vrot.slane %v3609, %v3639
        %v3641 = vlaneseq
        %v3642 = vshrl.u32 %v3641, 7
        %v3643 = vsub.s32 %v984, %v3642
        %v3644 = vrot.slane %v3612, %v3643
        %v3645 = vsel %vm989, %v3644, %v3640
        %v3646 = vlaneseq
        %v3647 = vshrl.u32 %v3646, 7
        %v3648 = vsub.s32 %v979, %v3647
        %v3649 = vrot.slane %v3615, %v3648
        %v3650 = vlaneseq
        %v3651 = vshrl.u32 %v3650, 7
        %v3652 = vsub.s32 %v984, %v3651
        %v3653 = vrot.slane %v3618, %v3652
        %v3654 = vsel %vm989, %v3653, %v3649
        %v3655 = vsel %vm1018, %v3636, %v3627
        %v3656 = vsel %vm1020, %v3645, %v3655
        %v3657 = vsel %vm1022, %v3654, %v3656
        %v3659 = vsel %vm1025, %v3657, 0.0
        %3660 = vadd.xlane.f32.xlu0 %v3659
        %v3661 = vpop.xlane.xlu0 %3660
        %v3663 = vlaneseq
        %v3664 = vshrl.u32 %v3663, 7
        %v3665 = vsub.s32 0, %v3664
        %v3666 = vrot.slane %v3661, %v3665
        %v3667 = vlaneseq
        %v3668 = vshrl.u32 %v3667, 7
        %v3669 = vsub.s32 1, %v3668
        %v3670 = vrot.slane %v3661, %v3669
        %v3671 = vlaneseq
        %v3672 = vshrl.u32 %v3671, 7
        %v3673 = vsub.s32 2, %v3672
        %v3674 = vrot.slane %v3661, %v3673
        %v3675 = vlaneseq
        %v3676 = vshrl.u32 %v3675, 7
        %v3677 = vsub.s32 3, %v3676
        %v3678 = vrot.slane %v3661, %v3677
        %v3683 = vrcp.pop %v3666
        %v3684 = vmul.f32 %v3572, %v3683
        %v3685 = vmul.f32 %v3574, %v3683
        %v3686 = vrcp.pop %v3670
        %v3687 = vmul.f32 %v3576, %v3686
        %v3688 = vmul.f32 %v3578, %v3686
        %v3689 = vrcp.pop %v3674
        %v3690 = vmul.f32 %v3580, %v3689
        %v3691 = vmul.f32 %v3582, %v3689
        %v3692 = vrcp.pop %v3678
        %v3693 = vmul.f32 %v3584, %v3692
        %v3694 = vmul.f32 %v3586, %v3692
        %3696 = vset.pattern.permute.xlu0 0
        %3697 = vperm.xlu0 %3696, %v3684
        %v3698 = vpop.permute.xlu0 %3697
        %3701 = vset.pattern.permute.xlu0 0
        %3702 = vperm.xlu0 %3701, %v3685
        %v3703 = vpop.permute.xlu0 %3702
        %3706 = vset.pattern.permute.xlu0 0
        %3707 = vperm.xlu0 %3706, %v3687
        %v3708 = vpop.permute.xlu0 %3707
        %3711 = vset.pattern.permute.xlu0 0
        %3712 = vperm.xlu0 %3711, %v3688
        %v3713 = vpop.permute.xlu0 %3712
        %3716 = vset.pattern.permute.xlu0 0
        %3717 = vperm.xlu0 %3716, %v3690
        %v3718 = vpop.permute.xlu0 %3717
        %3721 = vset.pattern.permute.xlu0 0
        %3722 = vperm.xlu0 %3721, %v3691
        %v3723 = vpop.permute.xlu0 %3722
        %3726 = vset.pattern.permute.xlu0 0
        %3727 = vperm.xlu0 %3726, %v3693
        %v3728 = vpop.permute.xlu0 %3727
        %3731 = vset.pattern.permute.xlu0 0
        %3732 = vperm.xlu0 %3731, %v3694
        %v3733 = vpop.permute.xlu0 %3732
        %v3735 = vmul.f32 %v3698, %v508
        %v3736 = vmul.f32 %v3703, %v509
        %v3737 = vmul.f32 %v3708, %v510
        %v3738 = vmul.f32 %v3713, %v511
        %v3739 = vmul.f32 %v3718, %v512
        %v3740 = vmul.f32 %v3723, %v513
        %v3741 = vmul.f32 %v3728, %v514
        %v3742 = vmul.f32 %v3733, %v515
        %v3743 = vsel %vm555, %v3735, 0.0
        %v3744 = vsel %vm863, %v3736, 0.0
        %v3745 = vadd.f32 %v3743, %v3744
        %v3746 = vrot.slane %v3745, 4
        %v3747 = vadd.f32 %v3745, %v3746
        %v3748 = vrot.slane %v3747, 2
        %v3749 = vadd.f32 %v3747, %v3748
        %v3750 = vrot.slane %v3749, 1
        %v3751 = vadd.f32 %v3749, %v3750
        %v3752 = vsel %vm555, %v3737, 0.0
        %v3753 = vsel %vm863, %v3738, 0.0
        %v3754 = vadd.f32 %v3752, %v3753
        %v3755 = vrot.slane %v3754, 4
        %v3756 = vadd.f32 %v3754, %v3755
        %v3757 = vrot.slane %v3756, 2
        %v3758 = vadd.f32 %v3756, %v3757
        %v3759 = vrot.slane %v3758, 1
        %v3760 = vadd.f32 %v3758, %v3759
        %v3761 = vsel %vm555, %v3739, 0.0
        %v3762 = vsel %vm863, %v3740, 0.0
        %v3763 = vadd.f32 %v3761, %v3762
        %v3764 = vrot.slane %v3763, 4
        %v3765 = vadd.f32 %v3763, %v3764
        %v3766 = vrot.slane %v3765, 2
        %v3767 = vadd.f32 %v3765, %v3766
        %v3768 = vrot.slane %v3767, 1
        %v3769 = vadd.f32 %v3767, %v3768
        %v3770 = vsel %vm555, %v3741, 0.0
        %v3771 = vsel %vm863, %v3742, 0.0
        %v3772 = vadd.f32 %v3770, %v3771
        %v3773 = vrot.slane %v3772, 4
        %v3774 = vadd.f32 %v3772, %v3773
        %v3775 = vrot.slane %v3774, 2
        %v3776 = vadd.f32 %v3774, %v3775
        %v3777 = vrot.slane %v3776, 1
        %v3778 = vadd.f32 %v3776, %v3777
        %3779 = vmatprep.subr.mxu0 0.0
        %3780 = vmatpush1.msra.mxu0 0.0
        %3781 = vmatprep.subr.mxu0 0.0
        %3782 = vmatpush1.msra.mxu0 0.0
        %3783 = vmatprep.subr.mxu0 0.0
        %3784 = vmatpush1.msra.mxu0 0.0
        %3785 = vmatprep.subr.mxu0 0.0
        %3786 = vmatpush1.msra.mxu0 0.0
        %3787 = vmatprep.subr.mxu0 0.0
        %3788 = vmatpush1.msra.mxu0 0.0
        %3789 = vmatprep.subr.mxu0 0.0
        %3790 = vmatpush1.msra.mxu0 0.0
        %3791 = vmatprep.subr.mxu0 0.0
        %3792 = vmatpush1.msra.mxu0 0.0
        %3793 = vmatprep.subr.mxu0 0.0
        %3794 = vmatpush1.msra.mxu0 0.0
        %3795 = vmatprep.subr.mxu0 0.0
        %3796 = vmatpush1.msra.mxu0 0.0
        %3797 = vmatprep.subr.mxu0 0.0
        %3798 = vmatpush1.msra.mxu0 0.0
        %3799 = vmatprep.subr.mxu0 0.0
        %3800 = vmatpush1.msra.mxu0 0.0
        %3801 = vmatprep.subr.mxu0 0.0
        %3802 = vmatpush1.msra.mxu0 0.0
        %3803 = vmatprep.subr.mxu0 0.0
        %3804 = vmatpush1.msra.mxu0 %v536
        %3805 = vmatprep.subr.mxu0 0.0
        %3806 = vmatpush1.msra.mxu0 %v535
        %3807 = vmatprep.subr.mxu0 0.0
        %3808 = vmatpush1.msra.mxu0 %v534
        %3809 = vmatprep.subr.mxu0 0.0
        %3810 = vmatpush1.msra.mxu0 %v533
        %3811 = vmatprep.subr.mxu0 0.0
        %3812 = vmatpush2.msra.mxu0 0.0
        %3813 = vmatprep.subr.mxu0 0.0
        %3814 = vmatpush2.msra.mxu0 0.0
        %3815 = vmatprep.subr.mxu0 0.0
        %3816 = vmatpush2.msra.mxu0 0.0
        %3817 = vmatprep.subr.mxu0 0.0
        %3818 = vmatpush2.msra.mxu0 0.0
        %3819 = vmatprep.subr.mxu0 0.0
        %3820 = vmatpush2.msra.mxu0 0.0
        %3821 = vmatprep.subr.mxu0 0.0
        %3822 = vmatpush2.msra.mxu0 0.0
        %3823 = vmatprep.subr.mxu0 0.0
        %3824 = vmatpush2.msra.mxu0 0.0
        %3825 = vmatprep.subr.mxu0 0.0
        %3826 = vmatpush2.msra.mxu0 0.0
        %3827 = vmatprep.subr.mxu0 0.0
        %3828 = vmatpush2.msra.mxu0 0.0
        %3829 = vmatprep.subr.mxu0 0.0
        %3830 = vmatpush2.msra.mxu0 0.0
        %3831 = vmatprep.subr.mxu0 0.0
        %3832 = vmatpush2.msra.mxu0 0.0
        %3833 = vmatprep.subr.mxu0 0.0
        %3834 = vmatpush2.msra.mxu0 0.0
        %3835 = vmatprep.subr.mxu0 0.0
        %3836 = vmatpush2.msra.mxu0 0.0
        %3837 = vmatprep.subr.mxu0 0.0
        %3838 = vmatpush2.msra.mxu0 0.0
        %3839 = vmatprep.subr.mxu0 0.0
        %3840 = vmatpush2.msra.mxu0 0.0
        %3841 = vmatprep.subr.mxu0 0.0
        %3842 = vmatpush2.msra.mxu0 0.0
        %3843 = vmatprep.mubr.f32.mxu0 0.0
        %3844 = vmatmul.mubr.f32.gmra.mxu0 %v3310
        %v3845 = vpop.f32.mrf.mxu0
        %v3846 = vadd.f32 0.0, %v3845
        %v3847 = vpop.f32.mrf.mxu0
        %3848 = vdwg.mxu0
        %v3853 = vsel %vm1018, %v3760, %v3751
        %v3854 = vsel %vm1020, %v3769, %v3853
        %v3855 = vsel %vm1022, %v3778, %v3854
        %v3856 = vsel %vm555, %v3855, 0
        %3858 = vmatprep.subr.mxu0 0.0
        %3859 = vmatpush1.msra.mxu0 0.0
        %3860 = vmatprep.subr.mxu0 0.0
        %3861 = vmatpush1.msra.mxu0 0.0
        %3862 = vmatprep.subr.mxu0 0.0
        %3863 = vmatpush1.msra.mxu0 0.0
        %3864 = vmatprep.subr.mxu0 0.0
        %3865 = vmatpush1.msra.mxu0 0.0
        %3866 = vmatprep.subr.mxu0 0.0
        %3867 = vmatpush1.msra.mxu0 0.0
        %3868 = vmatprep.subr.mxu0 0.0
        %3869 = vmatpush1.msra.mxu0 0.0
        %3870 = vmatprep.subr.mxu0 0.0
        %3871 = vmatpush1.msra.mxu0 0.0
        %3872 = vmatprep.subr.mxu0 0.0
        %3873 = vmatpush1.msra.mxu0 0.0
        %3874 = vmatprep.subr.mxu0 0.0
        %3875 = vmatpush1.msra.mxu0 0.0
        %3876 = vmatprep.subr.mxu0 0.0
        %3877 = vmatpush1.msra.mxu0 0.0
        %3878 = vmatprep.subr.mxu0 0.0
        %3879 = vmatpush1.msra.mxu0 0.0
        %3880 = vmatprep.subr.mxu0 0.0
        %3881 = vmatpush1.msra.mxu0 0.0
        %3882 = vmatprep.subr.mxu0 0.0
        %3883 = vmatpush1.msra.mxu0 %v532
        %3884 = vmatprep.subr.mxu0 0.0
        %3885 = vmatpush1.msra.mxu0 %v531
        %3886 = vmatprep.subr.mxu0 0.0
        %3887 = vmatpush1.msra.mxu0 %v530
        %3888 = vmatprep.subr.mxu0 0.0
        %3889 = vmatpush1.msra.mxu0 %v529
        %3890 = vmatprep.subr.mxu0 0.0
        %3891 = vmatpush2.msra.mxu0 0.0
        %3892 = vmatprep.subr.mxu0 0.0
        %3893 = vmatpush2.msra.mxu0 0.0
        %3894 = vmatprep.subr.mxu0 0.0
        %3895 = vmatpush2.msra.mxu0 0.0
        %3896 = vmatprep.subr.mxu0 0.0
        %3897 = vmatpush2.msra.mxu0 0.0
        %3898 = vmatprep.subr.mxu0 0.0
        %3899 = vmatpush2.msra.mxu0 0.0
        %3900 = vmatprep.subr.mxu0 0.0
        %3901 = vmatpush2.msra.mxu0 0.0
        %3902 = vmatprep.subr.mxu0 0.0
        %3903 = vmatpush2.msra.mxu0 0.0
        %3904 = vmatprep.subr.mxu0 0.0
        %3905 = vmatpush2.msra.mxu0 0.0
        %3906 = vmatprep.subr.mxu0 0.0
        %3907 = vmatpush2.msra.mxu0 0.0
        %3908 = vmatprep.subr.mxu0 0.0
        %3909 = vmatpush2.msra.mxu0 0.0
        %3910 = vmatprep.subr.mxu0 0.0
        %3911 = vmatpush2.msra.mxu0 0.0
        %3912 = vmatprep.subr.mxu0 0.0
        %3913 = vmatpush2.msra.mxu0 0.0
        %3914 = vmatprep.subr.mxu0 0.0
        %3915 = vmatpush2.msra.mxu0 0.0
        %3916 = vmatprep.subr.mxu0 0.0
        %3917 = vmatpush2.msra.mxu0 0.0
        %3918 = vmatprep.subr.mxu0 0.0
        %3919 = vmatpush2.msra.mxu0 0.0
        %3920 = vmatprep.subr.mxu0 0.0
        %3921 = vmatpush2.msra.mxu0 0.0
        %3922 = vmatprep.mubr.f32.mxu0 0.0
        %3923 = vmatmul.mubr.f32.gmra.mxu0 %v3856
        %v3924 = vpop.f32.mrf.mxu0
        %v3925 = vadd.f32 %v3846, %v3924
        %v3926 = vpop.f32.mrf.mxu0
        %3927 = vdwg.mxu0
        %v3928 = vadd.f32 %v3925, %v549
        %v3929 = vtanh.pop %v3928
        %s3930 = scalar_lea.vmem %s482, 12 [#allocation11]
        %3931 = vst.msk [vmem:[%s3930] sm:$0xf] %vm1417, %v3929
        %v3932 = vlaneseq
        %v3933 = vshrl.u32 %v3932, 7
        %v3934 = vsub.s32 %v979, %v3933
        %v3935 = vrot.slane %v3698, %v3934
        %v3936 = vlaneseq
        %v3937 = vshrl.u32 %v3936, 7
        %v3938 = vsub.s32 %v984, %v3937
        %v3939 = vrot.slane %v3703, %v3938
        %v3940 = vsel %vm989, %v3939, %v3935
        %v3941 = vlaneseq
        %v3942 = vshrl.u32 %v3941, 7
        %v3943 = vsub.s32 %v979, %v3942
        %v3944 = vrot.slane %v3708, %v3943
        %v3945 = vlaneseq
        %v3946 = vshrl.u32 %v3945, 7
        %v3947 = vsub.s32 %v984, %v3946
        %v3948 = vrot.slane %v3713, %v3947
        %v3949 = vsel %vm989, %v3948, %v3944
        %v3950 = vlaneseq
        %v3951 = vshrl.u32 %v3950, 7
        %v3952 = vsub.s32 %v979, %v3951
        %v3953 = vrot.slane %v3718, %v3952
        %v3954 = vlaneseq
        %v3955 = vshrl.u32 %v3954, 7
        %v3956 = vsub.s32 %v984, %v3955
        %v3957 = vrot.slane %v3723, %v3956
        %v3958 = vsel %vm989, %v3957, %v3953
        %v3959 = vlaneseq
        %v3960 = vshrl.u32 %v3959, 7
        %v3961 = vsub.s32 %v979, %v3960
        %v3962 = vrot.slane %v3728, %v3961
        %v3963 = vlaneseq
        %v3964 = vshrl.u32 %v3963, 7
        %v3965 = vsub.s32 %v984, %v3964
        %v3966 = vrot.slane %v3733, %v3965
        %v3967 = vsel %vm989, %v3966, %v3962
        %v3968 = vsel %vm1018, %v3949, %v3940
        %v3969 = vsel %vm1020, %v3958, %v3968
        %v3970 = vsel %vm1022, %v3967, %v3969
        %s3972 = scalar_lea.vmem %s489, 12 [#allocation12]
        %3973 = vst.msk [vmem:[%s3972] sm:$0xf] %vm1025, %v3970
        %3975 = vst.msk [vmem:[#allocation2] sm:$0xf] %vm1417, %v3309
        %3977 = vrot.lane.b32.xlu0 %v3300, 96
        %v3978 = vpop.permute.xlu0 %3977
        %3980 = vst.msk [vmem:[#allocation3] sm:$0xf] %vm1417, %v3978
        %3981 = vst.msk [vmem:[#allocation4] sm:$0xf] %vm1417, %v3929
        %s3982 = sand.u32 %s298, 1
        %s3983 = scalar_lea.sflag [#allocation7], %s3982
        %s3984 = sand.u32 %s298, 1
        %s3985 = smul.addr %s3984, 16
        %s3986 = scalar_lea.vmem [#allocation11], %s3985
        %s3987 = sand.u32 %s324, 1
        %s3988 = scalar_lea.sflag [#allocation13], %s3987
        %s3989 = sand.u32 %s324, 1
        %s3990 = smul.addr %s3989, 16
        %s3991 = scalar_lea.vmem [#allocation12], %s3990
        // Predicated region
        $region85: #{tpu_custom_call.1} parent=67 // pred_check
          %p3992 = pneg %p308
        $region86: #{tpu_custom_call.1} parent=67 // pred_check_branch
          %3994 = sbr.rel (%p3992) target = $region88
        $region87: #{tpu_custom_call.1} parent=67 // pred_region
          %s3995 = smul.u32 4, %s33
          %s3997 = ssub.s32 256, 256
          %3998 = vsyncadd %s3983, %s3997
          %s3999 = smul.addr %s3995, 64
          %s4000 = scalar_lea.hbm %s12, %s3999
          %s4001 = sshll.u32 %s3986, 4
          %s4002 = int_to_ptr.vmem [resolvable:$true] %s4001
          %4007 = dma.vmem_to_hbm [thread:$0]  %s4002, 256, %s4000, %s3983, 64, 64, 4
        $region88: #{tpu_custom_call.1} parent=67 // pred_fallthru
          _
        // Predicated region
        $region89: #{tpu_custom_call.1} parent=67 // pred_check
          %p4008 = pneg %p334
        $region90: #{tpu_custom_call.1} parent=67 // pred_check_branch
          %4010 = sbr.rel (%p4008) target = $region92
        $region91: #{tpu_custom_call.1} parent=67 // pred_region
          %s4011 = smul.u32 4, %s33
          %s4013 = ssub.s32 256, 256
          %4014 = vsyncadd %s3988, %s4013
          %s4015 = smul.addr %s4011, 64
          %s4016 = scalar_lea.hbm %s13, %s4015
          %s4017 = sshll.u32 %s3991, 4
          %s4018 = int_to_ptr.vmem [resolvable:$true] %s4017
          %4023 = dma.vmem_to_hbm [thread:$0]  %s4018, 256, %s4016, %s3988, 64, 64, 4
        $region92: #{tpu_custom_call.1} parent=67 // pred_fallthru
          _
      $region68: #{tpu_custom_call.1} parent=5 // pred_fallthru
        _
      %p4024 = scmp.le.s32.totalorder 2, %s28
      // Predicated region
      $region93: #{tpu_custom_call.1} parent=5 // pred_check
        %p4025 = pneg %p4024
      $region94: #{tpu_custom_call.1} parent=5 // pred_check_branch
        %4027 = sbr.rel (%p4025) target = $region96
      $region95: #{tpu_custom_call.1} parent=5 // pred_region
        %s4028 = ssub.s32 %s28, 2
        // Predicated region
        $region97: #{tpu_custom_call.1} parent=95 // pred_check
          %p4029 = pneg %p314
        $region98: #{tpu_custom_call.1} parent=95 // pred_check_branch
          %4031 = sbr.rel (%p4029) target = $region100
        $region99: #{tpu_custom_call.1} parent=95 // pred_region
          %s4032 = sand.u32 %s299, 1
          %s4033 = scalar_lea.sflag [#allocation7], %s4032
          %s4034 = sand.u32 %s299, 1
          %s4035 = smul.addr %s4034, 16
          %s4036 = scalar_lea.vmem [#allocation11], %s4035
          %4037 = dma.done %s4033, 256
        $region100: #{tpu_custom_call.1} parent=95 // pred_fallthru
          _
        // Predicated region
        $region101: #{tpu_custom_call.1} parent=95 // pred_check
          %p4038 = pneg %p340
        $region102: #{tpu_custom_call.1} parent=95 // pred_check_branch
          %4040 = sbr.rel (%p4038) target = $region104
        $region103: #{tpu_custom_call.1} parent=95 // pred_region
          %s4041 = sand.u32 %s325, 1
          %s4042 = scalar_lea.sflag [#allocation13], %s4041
          %s4043 = sand.u32 %s325, 1
          %s4044 = smul.addr %s4043, 16
          %s4045 = scalar_lea.vmem [#allocation12], %s4044
          %4046 = dma.done %s4042, 256
        $region104: #{tpu_custom_call.1} parent=95 // pred_fallthru
          _
      $region96: #{tpu_custom_call.1} parent=5 // pred_fallthru
        _
    $region6: #{tpu_custom_call.1} parent=1 // loop_footer
      %s32 = sadd.s32 1, %s28
    $region7: #{tpu_custom_call.1} parent=1 // loop_footer_branch
      %27 = sbr.rel target = $region3
    $region8: #{tpu_custom_call.1} parent=1 // loop_exit
      _
    %4047 = vsyncpa [#allocation6], 1
    %s4048 = scalar_lea.sflag [#allocation6], 1
    %4049 = vsyncpa %s4048, 1
    %4050 = vsyncpa [#allocation9], 1
    %4051 = vsyncpa [#allocation7], 1
    %s4052 = scalar_lea.sflag [#allocation7], 1
    %4053 = vsyncpa %s4052, 1
    %4054 = vsyncpa [#allocation13], 1
    %s4055 = scalar_lea.sflag [#allocation13], 1
    %4056 = vsyncpa %s4055, 1

</llo_original>
